<compile_context>
chip_gen: v7x
topology: tpu7x:2x2x1
jax: 0.10.0
libtpu: 0.0.40
codegen_flags: <defaults>
</compile_context>

<pallas_src>
import math
from functools import partial

import jax
import jax.numpy as jnp
from jax import lax
from jax.experimental import pallas as pl
from jax.experimental.pallas import tpu as pltpu


def _flash_kernel(*refs, scale, causal, has_bias, num_heads, block_q, block_k,
                  approx_recip):
    if has_bias:
        bias_ref, q_ref, k_ref, v_ref, o_ref, acc_ref, m_ref, l_ref, qs_ref = refs
    else:
        bias_ref = None
        q_ref, k_ref, v_ref, o_ref, acc_ref, m_ref, l_ref, qs_ref = refs

    qi = pl.program_id(1)
    ki = pl.program_id(2)
    nk = pl.num_programs(2)
    head_dim = acc_ref.shape[-1]

    @pl.when(ki == 0)
    def _init():
        m_ref[...] = jnp.full_like(m_ref, -jnp.inf)
        l_ref[...] = jnp.zeros_like(l_ref)
        acc_ref[...] = jnp.zeros_like(acc_ref)
        # Softmax scale folded into Q once per q-block (Q block stays resident
        # across the whole kv axis). Input-dtype rounding matches the reference
        # (`k * softmax_scale` is rounded to the operand dtype there too).
        qs_ref[...] = (q_ref[...] * scale).astype(qs_ref.dtype)

    def _compute():
        q_start = qi * block_q
        kv_start = ki * block_k

        # Additive bias (key padding / sequence padding) shared by all heads.
        bias_tile = None
        if has_bias:
            bias_tile = bias_ref[...]                       # (1, tk) f32
        if causal:
            row = q_start + lax.broadcasted_iota(jnp.int32, (block_q, block_k), 0)
            col = kv_start + lax.broadcasted_iota(jnp.int32, (block_q, block_k), 1)
            cmask = jnp.where(col > row, jnp.float32(-10000.0), jnp.float32(0.0))
            bias_tile = cmask if bias_tile is None else bias_tile + cmask

        # Head loop over head-major refs: q/k/v per-head slices are free
        # leading-dim views (no sublane relayout, no per-step rescaling).
        # TODO(synk): for H >= 8 consider lax.fori_loop(unroll=2) over heads if
        # the bundle dump shows vreg spills.
        for h in range(num_heads):
            q_h = qs_ref[h]                                 # (tq, D), pre-scaled
            k_h = k_ref[h]                                  # (tk, D)
            # scores = q_h @ k_h^T without materializing a transpose.
            s = lax.dot_general(q_h, k_h, (((1,), (1,)), ((), ())),
                                preferred_element_type=jnp.float32)   # (tq, tk)
            if bias_tile is not None:
                s = s + bias_tile

            m_prev = m_ref[h]                               # (tq, 1) f32
            m_new = jnp.maximum(m_prev, jnp.max(s, axis=-1, keepdims=True))
            alpha = jnp.exp(m_prev - m_new)
            p = jnp.exp(s - m_new)                          # (tq, tk) f32, unnormalized
            l_ref[h] = alpha * l_ref[h] + jnp.sum(p, axis=-1, keepdims=True)
            pv = jnp.dot(p.astype(v_ref.dtype), v_ref[h],
                         preferred_element_type=jnp.float32)           # (tq, D)
            acc_ref[h] = alpha * acc_ref[h] + pv
            m_ref[h] = m_new

    if causal:
        # Skip compute for kv blocks entirely above the diagonal (their DMA is
        # already avoided by the clamped index_map in the wrapper).
        @pl.when(ki * block_k <= qi * block_q + (block_q - 1))
        def _():
            _compute()
    else:
        _compute()

    @pl.when(ki == nk - 1)
    def _finalize():
        # Deferred normalization; per-head stores keep live values bounded to
        # one head while the output block stays lane-dense.
        for h in range(num_heads):
            inv_l = pl.reciprocal(l_ref[h], approx=approx_recip)       # (tq, 1)
            o_ref[:, h * head_dim:(h + 1) * head_dim] = (
                acc_ref[h] * inv_l).astype(o_ref.dtype)


def self_attention(qkv, *, causal=False, softmax_scale=None,
                   key_padding_mask=None, block_q=256, block_k=256):
    """Pallas port of SelfAttention.forward.

    qkv: (B, S, 3, H, D)   -> returns (B, S, H, D)
    key_padding_mask: optional bool (B, S); True = keep.

    Defaults target v6e/v7x (256 tiles). On v5e (128x128 MXU, 16 MiB scoped
    VMEM default) block_q=block_k=128 may be preferable for large H*D.
    """
    B, S, three, H, D = qkv.shape
    assert three == 3
    scale = float(softmax_scale) if softmax_scale is not None else 1.0 / math.sqrt(D)

    # Pad S to a multiple of 128 (keeps flash tiling for arbitrary S; no
    # full-sequence fallback). Use 256 tiles when they divide the padded
    # length, else 128.
    s_pad = ((S + 127) // 128) * 128
    tq = block_q if s_pad % block_q == 0 else 128
    tk = block_k if s_pad % block_k == 0 else 128
    nq, nk = s_pad // tq, s_pad // tk
    pad = s_pad - S

    # One-time repack to head-major (3, B, H, S_pad, D).
    qkv_hm = jnp.transpose(qkv, (2, 0, 3, 1, 4))
    if pad:
        qkv_hm = jnp.pad(qkv_hm, ((0, 0), (0, 0), (0, 0), (0, pad), (0, 0)))

    # Key-padding / sequence-padding additive bias (reference -10000 semantics).
    has_bias = (key_padding_mask is not None) or pad > 0
    if has_bias:
        keep = (jnp.ones((B, S), dtype=bool) if key_padding_mask is None
                else key_padding_mask.astype(bool))
        if pad:
            keep = jnp.pad(keep, ((0, 0), (0, pad)), constant_values=False)
        bias = jnp.where(keep, 0.0, -10000.0).astype(jnp.float32)[:, None, :]

    # For causal attention, clamp the kv block index to the last block touching
    # the diagonal so skipped upper-triangular grid steps re-reference the
    # resident block (no DMA for them).
    if causal:
        def kv_block(qi, ki):
            return jnp.minimum(ki, (qi * tq + tq - 1) // tk)
    else:
        def kv_block(qi, ki):
            return ki

    kernel = partial(_flash_kernel, scale=scale, causal=bool(causal),
                     has_bias=has_bias, num_heads=H, block_q=tq, block_k=tk,
                     approx_recip=(qkv.dtype != jnp.float32))

    in_specs = []
    args = []
    if has_bias:
        in_specs.append(pl.BlockSpec((None, 1, tk),
                                     lambda b, qi, ki: (b, 0, kv_block(qi, ki))))
        args.append(bias)

    # Q / K / V read directly from the head-major packed tensor; the 3-axis and
    # batch axis are squeezed out, so the kernel sees (H, t, D) blocks.
    in_specs += [
        pl.BlockSpec((None, None, H, tq, D),
                     lambda b, qi, ki: (0, b, 0, qi, 0)),
        pl.BlockSpec((None, None, H, tk, D),
                     lambda b, qi, ki: (1, b, 0, kv_block(qi, ki), 0)),
        pl.BlockSpec((None, None, H, tk, D),
                     lambda b, qi, ki: (2, b, 0, kv_block(qi, ki), 0)),
    ]
    args += [qkv_hm, qkv_hm, qkv_hm]

    # Megacore (v7x): batch is always balanced; for causal the q-block axis is
    # triangular, so shard on batch instead when B >= 2.
    q_sem = "arbitrary" if (causal and B >= 2) else "parallel"

    out_flat = pl.pallas_call(
        kernel,
        out_shape=jax.ShapeDtypeStruct((B, s_pad, H * D), qkv.dtype),
        grid=(B, nq, nk),
        in_specs=in_specs,
        out_specs=pl.BlockSpec((None, tq, H * D), lambda b, qi, ki: (b, qi, 0)),
        scratch_shapes=[
            pltpu.VMEM((H, tq, D), jnp.float32),   # acc
            pltpu.VMEM((H, tq, 1), jnp.float32),   # running max m
            pltpu.VMEM((H, tq, 1), jnp.float32),   # running sum l
            pltpu.VMEM((H, tq, D), qkv.dtype),     # pre-scaled Q (per q-block)
        ],
        compiler_params=pltpu.CompilerParams(
            dimension_semantics=("parallel", q_sem, "arbitrary")),
    )(*args)

    # Drop padded query rows; (B, S, H*D) -> (B, S, H, D) is a free reshape.
    return out_flat[:, :S, :].reshape(B, S, H, D)


def _reference(qkv, *, causal=False, softmax_scale=None, key_padding_mask=None):
    """Pure-JAX reference mirroring the PyTorch forward, for verification."""
    B, S, _, H, D = qkv.shape
    q, k, v = qkv[:, :, 0], qkv[:, :, 1], qkv[:, :, 2]
    scale = softmax_scale if softmax_scale is not None else 1.0 / math.sqrt(D)
    scores = jnp.einsum('bthd,bshd->bhts', q, k * scale)
    if key_padding_mask is not None:
        pad = jnp.where(key_padding_mask, 0.0, -10000.0).astype(scores.dtype)
        scores = scores + pad[:, None, None, :]
    if causal:
        cmask = jnp.triu(jnp.full((S, S), -10000.0, scores.dtype), 1)
        scores = scores + cmask
    attn = jax.nn.softmax(scores, axis=-1)
    return jnp.einsum('bhts,bshd->bthd', attn, v)


if __name__ == "__main__":
    k1, k2, k3, k4 = jax.random.split(jax.random.PRNGKey(0), 4)

    # 1) Small f32, non-causal, user key-padding mask (S=8 pads to one block).
    B, S, H, D = 2, 8, 2, 32
    qkv = jax.random.normal(k1, (B, S, 3, H, D), dtype=jnp.float32)
    mask = jnp.broadcast_to(jnp.arange(S) < 6, (B, S))
    out = jax.block_until_ready(
        self_attention(qkv, causal=False, key_padding_mask=mask))
    ref = _reference(qkv, causal=False, key_padding_mask=mask)
    assert out.shape == (B, S, H, D)
    assert jnp.allclose(out, ref, atol=2e-5, rtol=2e-5)

    # 2) Causal, no user mask (auto sequence-padding bias path).
    out_c = jax.block_until_ready(self_attention(qkv, causal=True))
    ref_c = _reference(qkv, causal=True)
    assert jnp.allclose(out_c, ref_c, atol=2e-5, rtol=2e-5)

    # 3) Non-multiple-of-128 sequence (padding path), f32, no mask.
    B3, S3, H3, D3 = 2, 40, 2, 32
    qkv3 = jax.random.normal(k2, (B3, S3, 3, H3, D3), dtype=jnp.float32)
    out3 = jax.block_until_ready(self_attention(qkv3, causal=False))
    ref3 = _reference(qkv3, causal=False)
    assert jnp.allclose(out3, ref3, atol=2e-5, rtol=2e-5)

    # 4) Multi-block flash path with 256 tiles (S=512 -> tq=tk=256), causal
    #    block skipping + clamped kv index_map + key padding together.
    B4, S4, H4, D4 = 1, 512, 2, 32
    qkv4 = jax.random.normal(k3, (B4, S4, 3, H4, D4), dtype=jnp.float32)
    mask4 = jnp.broadcast_to(jnp.arange(S4) < 400, (B4, S4))
    out4 = jax.block_until_ready(
        self_attention(qkv4, causal=True, key_padding_mask=mask4))
    ref4 = _reference(qkv4, causal=True, key_padding_mask=mask4)
    assert jnp.allclose(out4, ref4, atol=2e-5, rtol=2e-5)

    # 5) bf16 path: H=4, D=64, S=384 (three 128 blocks), causal.
    B5, S5, H5, D5 = 1, 384, 4, 64
    qkv5 = jax.random.normal(k4, (B5, S5, 3, H5, D5),
                             dtype=jnp.float32).astype(jnp.bfloat16)
    out5 = jax.block_until_ready(self_attention(qkv5, causal=True))
    ref5 = _reference(qkv5.astype(jnp.float32), causal=True)
    assert jnp.allclose(out5.astype(jnp.float32), ref5, atol=2e-2, rtol=2e-2)

    print("KERNEL_OK")
</pallas_src>

<mosaic_0001>
module attributes {stable_mosaic.version = 11 : i64} {
  func.func @_flash_kernel(%arg0: i32, %arg1: i32, %arg2: i32, %arg3: memref<1x1x128xf32, #tpu.memory_space<vmem>>, %arg4: memref<1x1x2x128x32xf32, #tpu.memory_space<vmem>>, %arg5: memref<1x1x2x128x32xf32, #tpu.memory_space<vmem>>, %arg6: memref<1x1x2x128x32xf32, #tpu.memory_space<vmem>>, %arg7: memref<1x128x64xf32, #tpu.memory_space<vmem>>, %arg8: memref<2x128x32xf32, #tpu.memory_space<vmem>>, %arg9: memref<2x128x1xf32, #tpu.memory_space<vmem>>, %arg10: memref<2x128x1xf32, #tpu.memory_space<vmem>>, %arg11: memref<2x128x32xf32, #tpu.memory_space<vmem>>) attributes {dimension_semantics = [#tpu.dimension_semantics<parallel>, #tpu.dimension_semantics<parallel>, #tpu.dimension_semantics<arbitrary>], iteration_bounds = array<i64: 2, 1, 1>, scalar_prefetch = 0 : i64, scratch_operands = 4 : i64, tpu.core_type = #tpu.core_type<tc>, window_params = [{transform_indices = @transform_0, window_bounds = array<i64: 1, 1, 128>}, {transform_indices = @transform_1, window_bounds = array<i64: 1, 1, 2, 128, 32>}, {transform_indices = @transform_2, window_bounds = array<i64: 1, 1, 2, 128, 32>}, {transform_indices = @transform_3, window_bounds = array<i64: 1, 1, 2, 128, 32>}, {transform_indices = @transform_4, window_bounds = array<i64: 1, 128, 64>}]} {
    %c0_i32 = arith.constant 0 : i32
    %0 = arith.cmpi eq, %arg2, %c0_i32 : i32
    %1 = arith.extui %0 : i1 to i32
    %c0_i32_0 = arith.constant 0 : i32
    %2 = arith.cmpi ne, %1, %c0_i32_0 : i32
    scf.if %2 {
      %cst_73 = arith.constant 0xFF800000 : f32
      %88 = vector.broadcast %cst_73 : f32 to vector<2x128x1xf32>
      %c0_74 = arith.constant 0 : index
      %c0_75 = arith.constant 0 : index
      %c0_76 = arith.constant 0 : index
      %89 = vector.load %arg9[%c0_74, %c0_75, %c0_76] : memref<2x128x1xf32, #tpu.memory_space<vmem>>, vector<2x128x1xf32>
      tpu.vector_store %arg9[%c0_74, %c0_75, %c0_76], %88 {strides = array<i32>} : memref<2x128x1xf32, #tpu.memory_space<vmem>>, vector<2x128x1xf32>,
      %cst_77 = arith.constant 0.000000e+00 : f32
      %90 = vector.broadcast %cst_77 : f32 to vector<2x128x1xf32>
      %c0_78 = arith.constant 0 : index
      %c0_79 = arith.constant 0 : index
      %c0_80 = arith.constant 0 : index
      %91 = vector.load %arg10[%c0_78, %c0_79, %c0_80] : memref<2x128x1xf32, #tpu.memory_space<vmem>>, vector<2x128x1xf32>
      tpu.vector_store %arg10[%c0_78, %c0_79, %c0_80], %90 {strides = array<i32>} : memref<2x128x1xf32, #tpu.memory_space<vmem>>, vector<2x128x1xf32>,
      %cst_81 = arith.constant 0.000000e+00 : f32
      %92 = vector.broadcast %cst_81 : f32 to vector<2x128x32xf32>
      %c0_82 = arith.constant 0 : index
      %c0_83 = arith.constant 0 : index
      %c0_84 = arith.constant 0 : index
      %93 = vector.load %arg8[%c0_82, %c0_83, %c0_84] : memref<2x128x32xf32, #tpu.memory_space<vmem>>, vector<2x128x32xf32>
      tpu.vector_store %arg8[%c0_82, %c0_83, %c0_84], %92 {strides = array<i32>} : memref<2x128x32xf32, #tpu.memory_space<vmem>>, vector<2x128x32xf32>,
      %c0_85 = arith.constant 0 : index
      %c0_86 = arith.constant 0 : index
      %c0_87 = arith.constant 0 : index
      %c0_88 = arith.constant 0 : index
      %c0_89 = arith.constant 0 : index
      %94 = vector.load %arg4[%c0_85, %c0_86, %c0_87, %c0_88, %c0_89] : memref<1x1x2x128x32xf32, #tpu.memory_space<vmem>>, vector<1x1x2x128x32xf32>
      %95 = vector.shape_cast %94 : vector<1x1x2x128x32xf32> to vector<2x128x32xf32>
      %cst_90 = arith.constant 0.176776692 : f32
      %96 = vector.broadcast %cst_90 : f32 to vector<2x128x32xf32>
      %97 = arith.mulf %95, %96 : vector<2x128x32xf32>
      %c0_91 = arith.constant 0 : index
      %c0_92 = arith.constant 0 : index
      %c0_93 = arith.constant 0 : index
      %98 = vector.load %arg11[%c0_91, %c0_92, %c0_93] : memref<2x128x32xf32, #tpu.memory_space<vmem>>, vector<2x128x32xf32>
      tpu.vector_store %arg11[%c0_91, %c0_92, %c0_93], %97 {strides = array<i32>} : memref<2x128x32xf32, #tpu.memory_space<vmem>>, vector<2x128x32xf32>,
    } else {
    }
    %c0 = arith.constant 0 : index
    %c0_1 = arith.constant 0 : index
    %c0_2 = arith.constant 0 : index
    %3 = vector.load %arg3[%c0, %c0_1, %c0_2] : memref<1x1x128xf32, #tpu.memory_space<vmem>>, vector<1x1x128xf32>
    %4 = vector.shape_cast %3 : vector<1x1x128xf32> to vector<1x128xf32>
    %c0_3 = arith.constant 0 : index
    %c0_4 = arith.constant 0 : index
    %c0_5 = arith.constant 0 : index
    %5 = vector.load %arg11[%c0_3, %c0_4, %c0_5] : memref<2x128x32xf32, #tpu.memory_space<vmem>>, vector<1x128x32xf32>
    %6 = vector.shape_cast %5 : vector<1x128x32xf32> to vector<128x32xf32>
    %c0_6 = arith.constant 0 : index
    %c0_7 = arith.constant 0 : index
    %c0_8 = arith.constant 0 : index
    %c0_9 = arith.constant 0 : index
    %c0_10 = arith.constant 0 : index
    %7 = vector.load %arg5[%c0_6, %c0_7, %c0_8, %c0_9, %c0_10] : memref<1x1x2x128x32xf32, #tpu.memory_space<vmem>>, vector<1x1x1x128x32xf32>
    %8 = vector.shape_cast %7 : vector<1x1x1x128x32xf32> to vector<128x32xf32>
    %cst = arith.constant dense<0.000000e+00> : vector<128x128xf32>
    %9 = tpu.matmul %6, %8, %cst {dimension_numbers = #tpu.dot_dimension_numbers<[1], [1], [0], [0], [0, 0, 1, 0], [], []>} : vector<128x32xf32>, vector<128x32xf32>, vector<128x128xf32> -> vector<128x128xf32>
    %10 = vector.broadcast %4 : vector<1x128xf32> to vector<128x128xf32>
    %11 = arith.addf %9, %10 : vector<128x128xf32>
    %c0_11 = arith.constant 0 : index
    %c0_12 = arith.constant 0 : index
    %c0_13 = arith.constant 0 : index
    %12 = vector.load %arg9[%c0_11, %c0_12, %c0_13] : memref<2x128x1xf32, #tpu.memory_space<vmem>>, vector<1x128x1xf32>
    %13 = vector.shape_cast %12 : vector<1x128x1xf32> to vector<128x1xf32>
    %cst_14 = arith.constant dense<0xFF800000> : vector<128xf32>
    %14 = vector.multi_reduction <maximumf>, %11, %cst_14 [1] : vector<128x128xf32> to vector<128xf32>
    %15 = vector.shape_cast %14 : vector<128xf32> to vector<128x1xf32>
    %16 = arith.maximumf %13, %15 : vector<128x1xf32>
    %17 = arith.subf %13, %16 : vector<128x1xf32>
    %18 = math.exp %17 : vector<128x1xf32>
    %19 = vector.broadcast %16 : vector<128x1xf32> to vector<128x128xf32>
    %20 = arith.subf %11, %19 : vector<128x128xf32>
    %21 = math.exp %20 : vector<128x128xf32>
    %c0_15 = arith.constant 0 : index
    %c0_16 = arith.constant 0 : index
    %c0_17 = arith.constant 0 : index
    %22 = vector.load %arg10[%c0_15, %c0_16, %c0_17] : memref<2x128x1xf32, #tpu.memory_space<vmem>>, vector<1x128x1xf32>
    %23 = vector.shape_cast %22 : vector<1x128x1xf32> to vector<128x1xf32>
    %24 = arith.mulf %18, %23 : vector<128x1xf32>
    %cst_18 = arith.constant dense<0.000000e+00> : vector<128xf32>
    %25 = vector.multi_reduction <add>, %21, %cst_18 [1] : vector<128x128xf32> to vector<128xf32>
    %26 = vector.shape_cast %25 : vector<128xf32> to vector<128x1xf32>
    %27 = arith.addf %24, %26 : vector<128x1xf32>
    %c0_19 = arith.constant 0 : index
    %c0_20 = arith.constant 0 : index
    %c0_21 = arith.constant 0 : index
    %28 = vector.load %arg10[%c0_19, %c0_20, %c0_21] : memref<2x128x1xf32, #tpu.memory_space<vmem>>, vector<1x128x1xf32>
    %29 = vector.shape_cast %28 : vector<1x128x1xf32> to vector<128x1xf32>
    %30 = vector.shape_cast %27 : vector<128x1xf32> to vector<1x128x1xf32>
    tpu.vector_store %arg10[%c0_19, %c0_20, %c0_21], %30 {strides = array<i32>} : memref<2x128x1xf32, #tpu.memory_space<vmem>>, vector<1x128x1xf32>,
    %c0_22 = arith.constant 0 : index
    %c0_23 = arith.constant 0 : index
    %c0_24 = arith.constant 0 : index
    %c0_25 = arith.constant 0 : index
    %c0_26 = arith.constant 0 : index
    %31 = vector.load %arg6[%c0_22, %c0_23, %c0_24, %c0_25, %c0_26] : memref<1x1x2x128x32xf32, #tpu.memory_space<vmem>>, vector<1x1x1x128x32xf32>
    %32 = vector.shape_cast %31 : vector<1x1x1x128x32xf32> to vector<128x32xf32>
    %cst_27 = arith.constant dense<0.000000e+00> : vector<128x32xf32>
    %33 = tpu.matmul %21, %32, %cst_27 {dimension_numbers = #tpu.dot_dimension_numbers<[1], [0], [0], [1], [0, 0, 1, 1], [], []>} : vector<128x128xf32>, vector<128x32xf32>, vector<128x32xf32> -> vector<128x32xf32>
    %c0_28 = arith.constant 0 : index
    %c0_29 = arith.constant 0 : index
    %c0_30 = arith.constant 0 : index
    %34 = vector.load %arg8[%c0_28, %c0_29, %c0_30] : memref<2x128x32xf32, #tpu.memory_space<vmem>>, vector<1x128x32xf32>
    %35 = vector.shape_cast %34 : vector<1x128x32xf32> to vector<128x32xf32>
    %36 = vector.broadcast %18 : vector<128x1xf32> to vector<128x32xf32>
    %37 = arith.mulf %36, %35 : vector<128x32xf32>
    %38 = arith.addf %37, %33 : vector<128x32xf32>
    %c0_31 = arith.constant 0 : index
    %c0_32 = arith.constant 0 : index
    %c0_33 = arith.constant 0 : index
    %39 = vector.load %arg8[%c0_31, %c0_32, %c0_33] : memref<2x128x32xf32, #tpu.memory_space<vmem>>, vector<1x128x32xf32>
    %40 = vector.shape_cast %39 : vector<1x128x32xf32> to vector<128x32xf32>
    %41 = vector.shape_cast %38 : vector<128x32xf32> to vector<1x128x32xf32>
    tpu.vector_store %arg8[%c0_31, %c0_32, %c0_33], %41 {strides = array<i32>} : memref<2x128x32xf32, #tpu.memory_space<vmem>>, vector<1x128x32xf32>,
    %c0_34 = arith.constant 0 : index
    %c0_35 = arith.constant 0 : index
    %c0_36 = arith.constant 0 : index
    %42 = vector.load %arg9[%c0_34, %c0_35, %c0_36] : memref<2x128x1xf32, #tpu.memory_space<vmem>>, vector<1x128x1xf32>
    %43 = vector.shape_cast %42 : vector<1x128x1xf32> to vector<128x1xf32>
    %44 = vector.shape_cast %16 : vector<128x1xf32> to vector<1x128x1xf32>
    tpu.vector_store %arg9[%c0_34, %c0_35, %c0_36], %44 {strides = array<i32>} : memref<2x128x1xf32, #tpu.memory_space<vmem>>, vector<1x128x1xf32>,
    %c1 = arith.constant 1 : index
    %c0_37 = arith.constant 0 : index
    %c0_38 = arith.constant 0 : index
    %45 = vector.load %arg11[%c1, %c0_37, %c0_38] : memref<2x128x32xf32, #tpu.memory_space<vmem>>, vector<1x128x32xf32>
    %46 = vector.shape_cast %45 : vector<1x128x32xf32> to vector<128x32xf32>
    %c0_39 = arith.constant 0 : index
    %c0_40 = arith.constant 0 : index
    %c1_41 = arith.constant 1 : index
    %c0_42 = arith.constant 0 : index
    %c0_43 = arith.constant 0 : index
    %47 = vector.load %arg5[%c0_39, %c0_40, %c1_41, %c0_42, %c0_43] : memref<1x1x2x128x32xf32, #tpu.memory_space<vmem>>, vector<1x1x1x128x32xf32>
    %48 = vector.shape_cast %47 : vector<1x1x1x128x32xf32> to vector<128x32xf32>
    %cst_44 = arith.constant dense<0.000000e+00> : vector<128x128xf32>
    %49 = tpu.matmul %46, %48, %cst_44 {dimension_numbers = #tpu.dot_dimension_numbers<[1], [1], [0], [0], [0, 0, 1, 0], [], []>} : vector<128x32xf32>, vector<128x32xf32>, vector<128x128xf32> -> vector<128x128xf32>
    %50 = vector.broadcast %4 : vector<1x128xf32> to vector<128x128xf32>
    %51 = arith.addf %49, %50 : vector<128x128xf32>
    %c1_45 = arith.constant 1 : index
    %c0_46 = arith.constant 0 : index
    %c0_47 = arith.constant 0 : index
    %52 = vector.load %arg9[%c1_45, %c0_46, %c0_47] : memref<2x128x1xf32, #tpu.memory_space<vmem>>, vector<1x128x1xf32>
    %53 = vector.shape_cast %52 : vector<1x128x1xf32> to vector<128x1xf32>
    %cst_48 = arith.constant dense<0xFF800000> : vector<128xf32>
    %54 = vector.multi_reduction <maximumf>, %51, %cst_48 [1] : vector<128x128xf32> to vector<128xf32>
    %55 = vector.shape_cast %54 : vector<128xf32> to vector<128x1xf32>
    %56 = arith.maximumf %53, %55 : vector<128x1xf32>
    %57 = arith.subf %53, %56 : vector<128x1xf32>
    %58 = math.exp %57 : vector<128x1xf32>
    %59 = vector.broadcast %56 : vector<128x1xf32> to vector<128x128xf32>
    %60 = arith.subf %51, %59 : vector<128x128xf32>
    %61 = math.exp %60 : vector<128x128xf32>
    %c1_49 = arith.constant 1 : index
    %c0_50 = arith.constant 0 : index
    %c0_51 = arith.constant 0 : index
    %62 = vector.load %arg10[%c1_49, %c0_50, %c0_51] : memref<2x128x1xf32, #tpu.memory_space<vmem>>, vector<1x128x1xf32>
    %63 = vector.shape_cast %62 : vector<1x128x1xf32> to vector<128x1xf32>
    %64 = arith.mulf %58, %63 : vector<128x1xf32>
    %cst_52 = arith.constant dense<0.000000e+00> : vector<128xf32>
    %65 = vector.multi_reduction <add>, %61, %cst_52 [1] : vector<128x128xf32> to vector<128xf32>
    %66 = vector.shape_cast %65 : vector<128xf32> to vector<128x1xf32>
    %67 = arith.addf %64, %66 : vector<128x1xf32>
    %c1_53 = arith.constant 1 : index
    %c0_54 = arith.constant 0 : index
    %c0_55 = arith.constant 0 : index
    %68 = vector.load %arg10[%c1_53, %c0_54, %c0_55] : memref<2x128x1xf32, #tpu.memory_space<vmem>>, vector<1x128x1xf32>
    %69 = vector.shape_cast %68 : vector<1x128x1xf32> to vector<128x1xf32>
    %70 = vector.shape_cast %67 : vector<128x1xf32> to vector<1x128x1xf32>
    tpu.vector_store %arg10[%c1_53, %c0_54, %c0_55], %70 {strides = array<i32>} : memref<2x128x1xf32, #tpu.memory_space<vmem>>, vector<1x128x1xf32>,
    %c0_56 = arith.constant 0 : index
    %c0_57 = arith.constant 0 : index
    %c1_58 = arith.constant 1 : index
    %c0_59 = arith.constant 0 : index
    %c0_60 = arith.constant 0 : index
    %71 = vector.load %arg6[%c0_56, %c0_57, %c1_58, %c0_59, %c0_60] : memref<1x1x2x128x32xf32, #tpu.memory_space<vmem>>, vector<1x1x1x128x32xf32>
    %72 = vector.shape_cast %71 : vector<1x1x1x128x32xf32> to vector<128x32xf32>
    %cst_61 = arith.constant dense<0.000000e+00> : vector<128x32xf32>
    %73 = tpu.matmul %61, %72, %cst_61 {dimension_numbers = #tpu.dot_dimension_numbers<[1], [0], [0], [1], [0, 0, 1, 1], [], []>} : vector<128x128xf32>, vector<128x32xf32>, vector<128x32xf32> -> vector<128x32xf32>
    %c1_62 = arith.constant 1 : index
    %c0_63 = arith.constant 0 : index
    %c0_64 = arith.constant 0 : index
    %74 = vector.load %arg8[%c1_62, %c0_63, %c0_64] : memref<2x128x32xf32, #tpu.memory_space<vmem>>, vector<1x128x32xf32>
    %75 = vector.shape_cast %74 : vector<1x128x32xf32> to vector<128x32xf32>
    %76 = vector.broadcast %58 : vector<128x1xf32> to vector<128x32xf32>
    %77 = arith.mulf %76, %75 : vector<128x32xf32>
    %78 = arith.addf %77, %73 : vector<128x32xf32>
    %c1_65 = arith.constant 1 : index
    %c0_66 = arith.constant 0 : index
    %c0_67 = arith.constant 0 : index
    %79 = vector.load %arg8[%c1_65, %c0_66, %c0_67] : memref<2x128x32xf32, #tpu.memory_space<vmem>>, vector<1x128x32xf32>
    %80 = vector.shape_cast %79 : vector<1x128x32xf32> to vector<128x32xf32>
    %81 = vector.shape_cast %78 : vector<128x32xf32> to vector<1x128x32xf32>
    tpu.vector_store %arg8[%c1_65, %c0_66, %c0_67], %81 {strides = array<i32>} : memref<2x128x32xf32, #tpu.memory_space<vmem>>, vector<1x128x32xf32>,
    %c1_68 = arith.constant 1 : index
    %c0_69 = arith.constant 0 : index
    %c0_70 = arith.constant 0 : index
    %82 = vector.load %arg9[%c1_68, %c0_69, %c0_70] : memref<2x128x1xf32, #tpu.memory_space<vmem>>, vector<1x128x1xf32>
    %83 = vector.shape_cast %82 : vector<1x128x1xf32> to vector<128x1xf32>
    %84 = vector.shape_cast %56 : vector<128x1xf32> to vector<1x128x1xf32>
    tpu.vector_store %arg9[%c1_68, %c0_69, %c0_70], %84 {strides = array<i32>} : memref<2x128x1xf32, #tpu.memory_space<vmem>>, vector<1x128x1xf32>,
    %c0_i32_71 = arith.constant 0 : i32
    %85 = arith.cmpi eq, %arg2, %c0_i32_71 : i32
    %86 = arith.extui %85 : i1 to i32
    %c0_i32_72 = arith.constant 0 : i32
    %87 = arith.cmpi ne, %86, %c0_i32_72 : i32
    scf.if %87 {
      %c0_73 = arith.constant 0 : index
      %c0_74 = arith.constant 0 : index
      %c0_75 = arith.constant 0 : index
      %88 = vector.load %arg10[%c0_73, %c0_74, %c0_75] : memref<2x128x1xf32, #tpu.memory_space<vmem>>, vector<1x128x1xf32>
      %89 = vector.shape_cast %88 : vector<1x128x1xf32> to vector<128x1xf32>
      %90 = tpu.reciprocal %89 : vector<128x1xf32> -> vector<128x1xf32>
      %c0_76 = arith.constant 0 : index
      %c0_77 = arith.constant 0 : index
      %c0_78 = arith.constant 0 : index
      %91 = vector.load %arg8[%c0_76, %c0_77, %c0_78] : memref<2x128x32xf32, #tpu.memory_space<vmem>>, vector<1x128x32xf32>
      %92 = vector.shape_cast %91 : vector<1x128x32xf32> to vector<128x32xf32>
      %93 = vector.broadcast %90 : vector<128x1xf32> to vector<128x32xf32>
      %94 = arith.mulf %92, %93 : vector<128x32xf32>
      %c0_79 = arith.constant 0 : index
      %c0_80 = arith.constant 0 : index
      %c0_81 = arith.constant 0 : index
      %95 = vector.load %arg7[%c0_79, %c0_80, %c0_81] : memref<1x128x64xf32, #tpu.memory_space<vmem>>, vector<1x128x32xf32>
      %96 = vector.shape_cast %95 : vector<1x128x32xf32> to vector<128x32xf32>
      %97 = vector.shape_cast %94 : vector<128x32xf32> to vector<1x128x32xf32>
      tpu.vector_store %arg7[%c0_79, %c0_80, %c0_81], %97 {strides = array<i32>} : memref<1x128x64xf32, #tpu.memory_space<vmem>>, vector<1x128x32xf32>,
      %c1_82 = arith.constant 1 : index
      %c0_83 = arith.constant 0 : index
      %c0_84 = arith.constant 0 : index
      %98 = vector.load %arg10[%c1_82, %c0_83, %c0_84] : memref<2x128x1xf32, #tpu.memory_space<vmem>>, vector<1x128x1xf32>
      %99 = vector.shape_cast %98 : vector<1x128x1xf32> to vector<128x1xf32>
      %100 = tpu.reciprocal %99 : vector<128x1xf32> -> vector<128x1xf32>
      %c1_85 = arith.constant 1 : index
      %c0_86 = arith.constant 0 : index
      %c0_87 = arith.constant 0 : index
      %101 = vector.load %arg8[%c1_85, %c0_86, %c0_87] : memref<2x128x32xf32, #tpu.memory_space<vmem>>, vector<1x128x32xf32>
      %102 = vector.shape_cast %101 : vector<1x128x32xf32> to vector<128x32xf32>
      %103 = vector.broadcast %100 : vector<128x1xf32> to vector<128x32xf32>
      %104 = arith.mulf %102, %103 : vector<128x32xf32>
      %c0_88 = arith.constant 0 : index
      %c0_89 = arith.constant 0 : index
      %c32 = arith.constant 32 : index
      %105 = vector.load %arg7[%c0_88, %c0_89, %c32] : memref<1x128x64xf32, #tpu.memory_space<vmem>>, vector<1x128x32xf32>
      %106 = vector.shape_cast %105 : vector<1x128x32xf32> to vector<128x32xf32>
      %107 = vector.shape_cast %104 : vector<128x32xf32> to vector<1x128x32xf32>
      tpu.vector_store %arg7[%c0_88, %c0_89, %c32], %107 {strides = array<i32>} : memref<1x128x64xf32, #tpu.memory_space<vmem>>, vector<1x128x32xf32>,
    } else {
    }
    return
  }
  func.func @transform_0(%arg0: i32, %arg1: i32, %arg2: i32) -> (i32, i32, i32) {
    %c0_i32 = arith.constant 0 : i32
    %c0_i32_0 = arith.constant 0 : i32
    return %arg0, %c0_i32, %arg2 : i32, i32, i32
  }
  func.func @transform_1(%arg0: i32, %arg1: i32, %arg2: i32) -> (i32, i32, i32, i32, i32) {
    %c0_i32 = arith.constant 0 : i32
    %c0_i32_0 = arith.constant 0 : i32
    %c0_i32_1 = arith.constant 0 : i32
    %c0_i32_2 = arith.constant 0 : i32
    return %c0_i32, %arg0, %c0_i32_0, %arg1, %c0_i32_1 : i32, i32, i32, i32, i32
  }
  func.func @transform_2(%arg0: i32, %arg1: i32, %arg2: i32) -> (i32, i32, i32, i32, i32) {
    %c1_i32 = arith.constant 1 : i32
    %c0_i32 = arith.constant 0 : i32
    %c0_i32_0 = arith.constant 0 : i32
    %c0_i32_1 = arith.constant 0 : i32
    return %c1_i32, %arg0, %c0_i32, %arg2, %c0_i32_0 : i32, i32, i32, i32, i32
  }
  func.func @transform_3(%arg0: i32, %arg1: i32, %arg2: i32) -> (i32, i32, i32, i32, i32) {
    %c2_i32 = arith.constant 2 : i32
    %c0_i32 = arith.constant 0 : i32
    %c0_i32_0 = arith.constant 0 : i32
    %c0_i32_1 = arith.constant 0 : i32
    return %c2_i32, %arg0, %c0_i32, %arg2, %c0_i32_0 : i32, i32, i32, i32, i32
  }
  func.func @transform_4(%arg0: i32, %arg1: i32, %arg2: i32) -> (i32, i32, i32) {
    %c0_i32 = arith.constant 0 : i32
    %c0_i32_0 = arith.constant 0 : i32
    return %arg0, %arg1, %c0_i32 : i32, i32, i32
  }
}

</mosaic_0001>

<llo_original>
// kernel: tpu_custom_call.1
$region0: #{tpu_custom_call.1}
  #allocation0 [shape = 'u32[]', space=smem, size = 0x4, offset = 0x4, fixed_abs, tag = 'smem constant byte address 0x4 - core index']
  #allocation1 [shape = 'u32[144,128]{1,0:T(1,128)}', space=vmem, size = 0x12000, scoped, tag = 'internal scratch']
  #allocation2 [shape = 'f32[2,128,32]{2,1,0:T(8,128)}', space=vmem, size = 0x20000, scoped, tag = 'scratch operand']
  #allocation3 [shape = 'f32[2,128,1]{2,1,0:T(8,128)}', space=vmem, size = 0x20000, scoped, tag = 'scratch operand']
  #allocation4 [shape = 'f32[2,128,1]{2,1,0:T(8,128)}', space=vmem, size = 0x20000, scoped, tag = 'scratch operand']
  #allocation5 [shape = 'f32[2,128,32]{2,1,0:T(8,128)}', space=vmem, size = 0x20000, scoped, tag = 'scratch operand']
  %s0 = inlined_call_operand.vmem [shape: f32[2,1,128], index: 0, kind: input, shape index: {}]
  %s1 = inlined_call_operand.vmem [shape: f32[3,2,2,128,32], index: 1, kind: input, shape index: {}]
  %s2 = inlined_call_operand.vmem [shape: f32[3,2,2,128,32], index: 2, kind: input, shape index: {}]
  %s3 = inlined_call_operand.vmem [shape: f32[3,2,2,128,32], index: 3, kind: input, shape index: {}]
  %s4 = inlined_call_operand.vmem [shape: f32[2,128,64], index: 4, kind: output, shape index: {}]
  %s5 = sld [smem:[#allocation0]]
  $region57: #{tpu_custom_call.1} parent=0
    _
  %s7 = ssub.s32 1, %s5
  %s8 = scalar_select 0, %s7, %s5
  loop: start=0, step=1, limit=4
  $region2: #{tpu_custom_call.1} parent=0 // loop_pre_header
    _
  $region3: #{tpu_custom_call.1} parent=0 // loop_header
    %s10 = sphi 0, %s14
    %p11 = scmp.ge.s32.totalorder %s10, 4
    %s17 = sphi 0, %s36
    %s18 = sphi 0, %s32
    %s19 = sphi 0, %s28
    %s20 = sphi 0, %s17
    %s21 = sphi 0, %s18
    %s22 = sphi 0, %s19
    %s23 = sphi 0, %s20
    %s24 = sphi 0, %s21
    %s25 = sphi 0, %s22
    %s41 = sphi 0, %s43
    %s44 = sphi 0, %s41
    %s45 = sphi 0, %s44
    %s61 = sphi 0, %s45
    %s69 = sphi 0, %s71
    %s72 = sphi 0, %s69
    %s73 = sphi 0, %s72
    %s89 = sphi 0, %s73
    %s97 = sphi 0, %s99
    %s100 = sphi 0, %s97
    %s101 = sphi 0, %s100
    %s117 = sphi 0, %s101
    %s125 = sphi 0, %s127
    %s128 = sphi 0, %s125
    %s129 = sphi 0, %s128
    %s145 = sphi 0, %s129
    %s153 = sphi 0, %s155
    %s156 = sphi 0, %s153
    %s157 = sphi 0, %s156
    %s173 = sphi 0, %s157
  $region4: #{tpu_custom_call.1} parent=0 // loop_header_branch
    %13 = sbr.rel (%p11) target = $region8
  $region5: #{tpu_custom_call.1} parent=0 // loop_body
    %s15 = ssub.s32 %s10, 1
    %s16 = ssub.s32 %s10, 2
    %s26 = sadd.s32 1, %s19
    %p27 = scmp.ge.s32.totalorder %s26, 1
    %s28 = scalar_select %p27, 0, %s26
    %s29 = sadd.s32 1, %s18
    %s30 = scalar_select %p27, %s29, %s18
    %p31 = scmp.ge.s32.totalorder %s30, 1
    %s32 = scalar_select %p31, 0, %s30
    %s33 = sadd.s32 1, %s17
    %s34 = scalar_select %p31, %s33, %s17
    %p35 = scmp.ge.s32.totalorder %s34, 2
    %s36 = scalar_select %p35, 0, %s34
    %s37 = ssub.s32 %s17, %s36
    %s38 = ssub.s32 %s19, %s28
    %s39 = sor.u32 %s37, %s38
    %p40 = scmp.eq.s32.totalorder %s39, 0
    %s42 = sadd.s32 %s41, 1
    %s43 = scalar_select %p40, %s41, %s42
    %p46 = pneg %p40
    %p47 = scmp.eq.s32.totalorder %s10, 1
    %p48 = por %p46, %p47
    %p49 = scmp.ne.s32.totalorder %s41, %s44
    %p50 = scmp.eq.s32.totalorder %s10, 0
    %p51 = por %p49, %p50
    %p52 = scmp.ne.s32.totalorder %s41, %s44
    %p53 = scmp.eq.s32.totalorder %s15, 1
    %p54 = por %p52, %p53
    %p55 = scmp.ne.s32.totalorder %s44, %s45
    %p56 = scmp.eq.s32.totalorder %s15, 0
    %p57 = por %p55, %p56
    %p58 = scmp.ne.s32.totalorder %s44, %s45
    %p59 = scmp.eq.s32.totalorder %s16, 1
    %p60 = por %p58, %p59
    %p62 = scmp.ne.s32.totalorder %s45, %s61
    %p63 = scmp.eq.s32.totalorder %s16, 0
    %p64 = por %p62, %p63
    %s65 = ssub.s32 %s17, %s36
    %s66 = ssub.s32 %s18, %s32
    %s67 = sor.u32 %s65, %s66
    %p68 = scmp.eq.s32.totalorder %s67, 0
    %s70 = sadd.s32 %s69, 1
    %s71 = scalar_select %p68, %s69, %s70
    %p74 = pneg %p68
    %p75 = scmp.eq.s32.totalorder %s10, 1
    %p76 = por %p74, %p75
    %p77 = scmp.ne.s32.totalorder %s69, %s72
    %p78 = scmp.eq.s32.totalorder %s10, 0
    %p79 = por %p77, %p78
    %p80 = scmp.ne.s32.totalorder %s69, %s72
    %p81 = scmp.eq.s32.totalorder %s15, 1
    %p82 = por %p80, %p81
    %p83 = scmp.ne.s32.totalorder %s72, %s73
    %p84 = scmp.eq.s32.totalorder %s15, 0
    %p85 = por %p83, %p84
    %p86 = scmp.ne.s32.totalorder %s72, %s73
    %p87 = scmp.eq.s32.totalorder %s16, 1
    %p88 = por %p86, %p87
    %p90 = scmp.ne.s32.totalorder %s73, %s89
    %p91 = scmp.eq.s32.totalorder %s16, 0
    %p92 = por %p90, %p91
    %s93 = ssub.s32 %s17, %s36
    %s94 = ssub.s32 %s19, %s28
    %s95 = sor.u32 %s93, %s94
    %p96 = scmp.eq.s32.totalorder %s95, 0
    %s98 = sadd.s32 %s97, 1
    %s99 = scalar_select %p96, %s97, %s98
    %p102 = pneg %p96
    %p103 = scmp.eq.s32.totalorder %s10, 1
    %p104 = por %p102, %p103
    %p105 = scmp.ne.s32.totalorder %s97, %s100
    %p106 = scmp.eq.s32.totalorder %s10, 0
    %p107 = por %p105, %p106
    %p108 = scmp.ne.s32.totalorder %s97, %s100
    %p109 = scmp.eq.s32.totalorder %s15, 1
    %p110 = por %p108, %p109
    %p111 = scmp.ne.s32.totalorder %s100, %s101
    %p112 = scmp.eq.s32.totalorder %s15, 0
    %p113 = por %p111, %p112
    %p114 = scmp.ne.s32.totalorder %s100, %s101
    %p115 = scmp.eq.s32.totalorder %s16, 1
    %p116 = por %p114, %p115
    %p118 = scmp.ne.s32.totalorder %s101, %s117
    %p119 = scmp.eq.s32.totalorder %s16, 0
    %p120 = por %p118, %p119
    %s121 = ssub.s32 %s17, %s36
    %s122 = ssub.s32 %s19, %s28
    %s123 = sor.u32 %s121, %s122
    %p124 = scmp.eq.s32.totalorder %s123, 0
    %s126 = sadd.s32 %s125, 1
    %s127 = scalar_select %p124, %s125, %s126
    %p130 = pneg %p124
    %p131 = scmp.eq.s32.totalorder %s10, 1
    %p132 = por %p130, %p131
    %p133 = scmp.ne.s32.totalorder %s125, %s128
    %p134 = scmp.eq.s32.totalorder %s10, 0
    %p135 = por %p133, %p134
    %p136 = scmp.ne.s32.totalorder %s125, %s128
    %p137 = scmp.eq.s32.totalorder %s15, 1
    %p138 = por %p136, %p137
    %p139 = scmp.ne.s32.totalorder %s128, %s129
    %p140 = scmp.eq.s32.totalorder %s15, 0
    %p141 = por %p139, %p140
    %p142 = scmp.ne.s32.totalorder %s128, %s129
    %p143 = scmp.eq.s32.totalorder %s16, 1
    %p144 = por %p142, %p143
    %p146 = scmp.ne.s32.totalorder %s129, %s145
    %p147 = scmp.eq.s32.totalorder %s16, 0
    %p148 = por %p146, %p147
    %s149 = ssub.s32 %s17, %s36
    %s150 = ssub.s32 %s18, %s32
    %s151 = sor.u32 %s149, %s150
    %p152 = scmp.eq.s32.totalorder %s151, 0
    %s154 = sadd.s32 %s153, 1
    %s155 = scalar_select %p152, %s153, %s154
    %p158 = pneg %p152
    %p159 = scmp.eq.s32.totalorder %s10, 1
    %p160 = por %p158, %p159
    %p161 = scmp.ne.s32.totalorder %s153, %s156
    %p162 = scmp.eq.s32.totalorder %s10, 0
    %p163 = por %p161, %p162
    %p164 = scmp.ne.s32.totalorder %s153, %s156
    %p165 = scmp.eq.s32.totalorder %s15, 1
    %p166 = por %p164, %p165
    %p167 = scmp.ne.s32.totalorder %s156, %s157
    %p168 = scmp.eq.s32.totalorder %s15, 0
    %p169 = por %p167, %p168
    %p170 = scmp.ne.s32.totalorder %s156, %s157
    %p171 = scmp.eq.s32.totalorder %s16, 1
    %p172 = por %p170, %p171
    %p174 = scmp.ne.s32.totalorder %s157, %s173
    %p175 = scmp.eq.s32.totalorder %s16, 0
    %p176 = por %p174, %p175
    %p177 = scmp.le.s32.totalorder 1, %s10
    %p178 = scmp.lt.s32.totalorder %s10, 3
    %p179 = pnand %p177, %p178
    %p180 = pneg %p179
    // Predicated region
    $region9: #{tpu_custom_call.1} parent=5 // pred_check
      _
    $region10: #{tpu_custom_call.1} parent=5 // pred_check_branch
      %182 = sbr.rel (%p179) target = $region12
    $region11: #{tpu_custom_call.1} parent=5 // pred_region
      %s183 = ssub.s32 %s10, 1
    $region12: #{tpu_custom_call.1} parent=5 // pred_fallthru
      _
    %p184 = scmp.lt.s32.totalorder %s10, 2
    // Predicated region
    $region13: #{tpu_custom_call.1} parent=5 // pred_check
      %p185 = pneg %p184
    $region14: #{tpu_custom_call.1} parent=5 // pred_check_branch
      %187 = sbr.rel (%p185) target = $region16
    $region15: #{tpu_custom_call.1} parent=5 // pred_region
      // Predicated region
      $region17: #{tpu_custom_call.1} parent=15 // pred_check
        %p188 = pneg %p51
      $region18: #{tpu_custom_call.1} parent=15 // pred_check_branch
        %190 = sbr.rel (%p188) target = $region20
      $region19: #{tpu_custom_call.1} parent=15 // pred_region
        %p191 = scmp.lt.s32.totalorder %s17, 1
        %s192 = scalar_select %p191, %s17, 1
        %p193 = scmp.lt.s32.totalorder %s19, 0
        %s194 = scalar_select %p193, %s19, 0
        %s195 = sadd.s32 %s194, %s192
        %s196 = scalar_lea.vmem %s0, %s195
      $region20: #{tpu_custom_call.1} parent=15 // pred_fallthru
        _
      // Predicated region
      $region21: #{tpu_custom_call.1} parent=15 // pred_check
        %p197 = pneg %p79
      $region22: #{tpu_custom_call.1} parent=15 // pred_check_branch
        %199 = sbr.rel (%p197) target = $region24
      $region23: #{tpu_custom_call.1} parent=15 // pred_region
        %s200 = smul.u32 16, %s18
        %p201 = scmp.lt.s32.totalorder %s17, 1
        %s202 = scalar_select %p201, %s17, 1
        %p203 = scmp.lt.s32.totalorder %s200, 15
        %s204 = scalar_select %p203, %s200, 15
        %s205 = smul.addr %s202, 32
        %s206 = sadd.s32 %s204, %s205
        %s207 = smul.addr %s206, 8
        %s208 = scalar_lea.vmem %s1, %s207
        %s209 = smul.u32 16, %s18
      $region24: #{tpu_custom_call.1} parent=15 // pred_fallthru
        _
      // Predicated region
      $region25: #{tpu_custom_call.1} parent=15 // pred_check
        %p210 = pneg %p107
      $region26: #{tpu_custom_call.1} parent=15 // pred_check_branch
        %212 = sbr.rel (%p210) target = $region28
      $region27: #{tpu_custom_call.1} parent=15 // pred_region
        %s213 = smul.u32 16, %s19
        %p214 = scmp.lt.s32.totalorder %s17, 1
        %s215 = scalar_select %p214, %s17, 1
        %p216 = scmp.lt.s32.totalorder %s213, 15
        %s217 = scalar_select %p216, %s213, 15
        %s218 = smul.addr %s215, 32
        %s219 = sadd.s32 %s217, %s218
        %s220 = sadd.s32 %s219, 64
        %s221 = smul.addr %s220, 8
        %s222 = scalar_lea.vmem %s2, %s221
        %s223 = smul.u32 16, %s19
      $region28: #{tpu_custom_call.1} parent=15 // pred_fallthru
        _
      // Predicated region
      $region29: #{tpu_custom_call.1} parent=15 // pred_check
        %p224 = pneg %p135
      $region30: #{tpu_custom_call.1} parent=15 // pred_check_branch
        %226 = sbr.rel (%p224) target = $region32
      $region31: #{tpu_custom_call.1} parent=15 // pred_region
        %s227 = smul.u32 16, %s19
        %p228 = scmp.lt.s32.totalorder %s17, 1
        %s229 = scalar_select %p228, %s17, 1
        %p230 = scmp.lt.s32.totalorder %s227, 15
        %s231 = scalar_select %p230, %s227, 15
        %s232 = smul.addr %s229, 32
        %s233 = sadd.s32 %s231, %s232
        %s234 = sadd.s32 %s233, 128
        %s235 = smul.addr %s234, 8
        %s236 = scalar_lea.vmem %s3, %s235
        %s237 = smul.u32 16, %s19
      $region32: #{tpu_custom_call.1} parent=15 // pred_fallthru
        _
    $region16: #{tpu_custom_call.1} parent=5 // pred_fallthru
      _
    %p238 = scmp.le.s32.totalorder 1, %s10
    %p239 = scmp.lt.s32.totalorder %s10, 3
    %p240 = pnand %p238, %p239
    %p241 = pneg %p240
    // Predicated region
    $region33: #{tpu_custom_call.1} parent=5 // pred_check
      _
    $region34: #{tpu_custom_call.1} parent=5 // pred_check_branch
      %243 = sbr.rel (%p240) target = $region36
    $region35: #{tpu_custom_call.1} parent=5 // pred_region
      %s244 = ssub.s32 %s10, 1
      %p245 = scmp.lt.s32.totalorder %s20, 1
      %s246 = scalar_select %p245, %s20, 1
      %p247 = scmp.lt.s32.totalorder %s22, 0
      %s248 = scalar_select %p247, %s22, 0
      %s249 = sadd.s32 %s248, %s246
      %s250 = scalar_lea.vmem %s0, %s249
      %p251 = pneg %p57
      %p252 = pneg %p54
      %s253 = smul.u32 16, %s21
      %p254 = scmp.lt.s32.totalorder %s20, 1
      %s255 = scalar_select %p254, %s20, 1
      %p256 = scmp.lt.s32.totalorder %s253, 15
      %s257 = scalar_select %p256, %s253, 15
      %s258 = smul.addr %s255, 32
      %s259 = sadd.s32 %s257, %s258
      %s260 = smul.addr %s259, 8
      %s261 = scalar_lea.vmem %s1, %s260
      %p262 = pneg %p85
      %p263 = pneg %p82
      %s264 = smul.u32 16, %s22
      %p265 = scmp.lt.s32.totalorder %s20, 1
      %s266 = scalar_select %p265, %s20, 1
      %p267 = scmp.lt.s32.totalorder %s264, 15
      %s268 = scalar_select %p267, %s264, 15
      %s269 = smul.addr %s266, 32
      %s270 = sadd.s32 %s268, %s269
      %s271 = sadd.s32 %s270, 64
      %s272 = smul.addr %s271, 8
      %s273 = scalar_lea.vmem %s2, %s272
      %p274 = pneg %p113
      %p275 = pneg %p110
      %s276 = smul.u32 16, %s22
      %p277 = scmp.lt.s32.totalorder %s20, 1
      %s278 = scalar_select %p277, %s20, 1
      %p279 = scmp.lt.s32.totalorder %s276, 15
      %s280 = scalar_select %p279, %s276, 15
      %s281 = smul.addr %s278, 32
      %s282 = sadd.s32 %s280, %s281
      %s283 = sadd.s32 %s282, 128
      %s284 = smul.addr %s283, 8
      %s285 = scalar_lea.vmem %s3, %s284
      %p286 = pneg %p141
      %p287 = pneg %p138
      %p288 = pneg %p169
      %p289 = pneg %p166
      %s290 = smul.u32 16, %s21
      %p291 = scmp.lt.s32.totalorder %s20, 1
      %s292 = scalar_select %p291, %s20, 1
      %p293 = scmp.lt.s32.totalorder %s290, 15
      %s294 = scalar_select %p293, %s290, 15
      %s295 = smul.addr %s292, 16
      %s296 = sadd.s32 %s294, %s295
      %s297 = smul.addr %s296, 8
      %s298 = scalar_lea.vmem %s4, %s297
      %p299 = scmp.lt.s32.totalorder %s20, 1
      %s300 = scalar_select %p299, %s20, 1
      %p301 = scmp.lt.s32.totalorder %s22, 0
      %s302 = scalar_select %p301, %s22, 0
      %s303 = sadd.s32 %s302, %s300
      %s304 = scalar_lea.vmem %s0, %s303
      %s305 = smul.u32 16, %s21
      %p306 = scmp.lt.s32.totalorder %s20, 1
      %s307 = scalar_select %p306, %s20, 1
      %p308 = scmp.lt.s32.totalorder %s305, 15
      %s309 = scalar_select %p308, %s305, 15
      %s310 = smul.addr %s307, 32
      %s311 = sadd.s32 %s309, %s310
      %s312 = smul.addr %s311, 8
      %s313 = scalar_lea.vmem %s1, %s312
      %s314 = smul.u32 16, %s21
      %s315 = smul.u32 16, %s22
      %p316 = scmp.lt.s32.totalorder %s20, 1
      %s317 = scalar_select %p316, %s20, 1
      %p318 = scmp.lt.s32.totalorder %s315, 15
      %s319 = scalar_select %p318, %s315, 15
      %s320 = smul.addr %s317, 32
      %s321 = sadd.s32 %s319, %s320
      %s322 = sadd.s32 %s321, 64
      %s323 = smul.addr %s322, 8
      %s324 = scalar_lea.vmem %s2, %s323
      %s325 = smul.u32 16, %s22
      %s326 = smul.u32 16, %s22
      %p327 = scmp.lt.s32.totalorder %s20, 1
      %s328 = scalar_select %p327, %s20, 1
      %p329 = scmp.lt.s32.totalorder %s326, 15
      %s330 = scalar_select %p329, %s326, 15
      %s331 = smul.addr %s328, 32
      %s332 = sadd.s32 %s330, %s331
      %s333 = sadd.s32 %s332, 128
      %s334 = smul.addr %s333, 8
      %s335 = scalar_lea.vmem %s3, %s334
      %s336 = smul.u32 16, %s22
      %s337 = smul.u32 16, %s21
      %p338 = scmp.lt.s32.totalorder %s20, 1
      %s339 = scalar_select %p338, %s20, 1
      %p340 = scmp.lt.s32.totalorder %s337, 15
      %s341 = scalar_select %p340, %s337, 15
      %s342 = smul.addr %s339, 16
      %s343 = sadd.s32 %s341, %s342
      %s344 = smul.addr %s343, 8
      %s345 = scalar_lea.vmem %s4, %s344
      %s346 = smul.u32 16, %s21
      %p347 = scmp.eq.s32.totalorder %s22, 0
      // Predicated region
      $region37: #{tpu_custom_call.1} parent=35 // pred_check
        %p348 = pneg %p347
      $region38: #{tpu_custom_call.1} parent=35 // pred_check_branch
        %350 = sbr.rel (%p348) target = $region40
      $region39: #{tpu_custom_call.1} parent=35 // pred_region
        %vm351 = vcmask 7168
        %352 = vst.msk [vmem:[#allocation3] sm:$0xff] %vm351, -inf
        %353 = vst.msk [vmem:[#allocation3 + $0x8] sm:$0xff] %vm351, -inf
        %354 = vst.msk [vmem:[#allocation3 + $0x10] sm:$0xff] %vm351, -inf
        %355 = vst.msk [vmem:[#allocation3 + $0x18] sm:$0xff] %vm351, -inf
        %356 = vst.msk [vmem:[#allocation3 + $0x20] sm:$0xff] %vm351, -inf
        %357 = vst.msk [vmem:[#allocation3 + $0x28] sm:$0xff] %vm351, -inf
        %358 = vst.msk [vmem:[#allocation3 + $0x30] sm:$0xff] %vm351, -inf
        %359 = vst.msk [vmem:[#allocation3 + $0x38] sm:$0xff] %vm351, -inf
        %360 = vst.msk [vmem:[#allocation3 + $0x40] sm:$0xff] %vm351, -inf
        %361 = vst.msk [vmem:[#allocation3 + $0x48] sm:$0xff] %vm351, -inf
        %362 = vst.msk [vmem:[#allocation3 + $0x50] sm:$0xff] %vm351, -inf
        %363 = vst.msk [vmem:[#allocation3 + $0x58] sm:$0xff] %vm351, -inf
        %364 = vst.msk [vmem:[#allocation3 + $0x60] sm:$0xff] %vm351, -inf
        %365 = vst.msk [vmem:[#allocation3 + $0x68] sm:$0xff] %vm351, -inf
        %366 = vst.msk [vmem:[#allocation3 + $0x70] sm:$0xff] %vm351, -inf
        %367 = vst.msk [vmem:[#allocation3 + $0x78] sm:$0xff] %vm351, -inf
        %368 = vst.msk [vmem:[#allocation3 + $0x80] sm:$0xff] %vm351, -inf
        %369 = vst.msk [vmem:[#allocation3 + $0x88] sm:$0xff] %vm351, -inf
        %370 = vst.msk [vmem:[#allocation3 + $0x90] sm:$0xff] %vm351, -inf
        %371 = vst.msk [vmem:[#allocation3 + $0x98] sm:$0xff] %vm351, -inf
        %372 = vst.msk [vmem:[#allocation3 + $0xa0] sm:$0xff] %vm351, -inf
        %373 = vst.msk [vmem:[#allocation3 + $0xa8] sm:$0xff] %vm351, -inf
        %374 = vst.msk [vmem:[#allocation3 + $0xb0] sm:$0xff] %vm351, -inf
        %375 = vst.msk [vmem:[#allocation3 + $0xb8] sm:$0xff] %vm351, -inf
        %376 = vst.msk [vmem:[#allocation3 + $0xc0] sm:$0xff] %vm351, -inf
        %377 = vst.msk [vmem:[#allocation3 + $0xc8] sm:$0xff] %vm351, -inf
        %378 = vst.msk [vmem:[#allocation3 + $0xd0] sm:$0xff] %vm351, -inf
        %379 = vst.msk [vmem:[#allocation3 + $0xd8] sm:$0xff] %vm351, -inf
        %380 = vst.msk [vmem:[#allocation3 + $0xe0] sm:$0xff] %vm351, -inf
        %381 = vst.msk [vmem:[#allocation3 + $0xe8] sm:$0xff] %vm351, -inf
        %382 = vst.msk [vmem:[#allocation3 + $0xf0] sm:$0xff] %vm351, -inf
        %383 = vst.msk [vmem:[#allocation3 + $0xf8] sm:$0xff] %vm351, -inf
        %384 = vst.msk [vmem:[#allocation4] sm:$0xff] %vm351, 0.0
        %385 = vst.msk [vmem:[#allocation4 + $0x8] sm:$0xff] %vm351, 0.0
        %386 = vst.msk [vmem:[#allocation4 + $0x10] sm:$0xff] %vm351, 0.0
        %387 = vst.msk [vmem:[#allocation4 + $0x18] sm:$0xff] %vm351, 0.0
        %388 = vst.msk [vmem:[#allocation4 + $0x20] sm:$0xff] %vm351, 0.0
        %389 = vst.msk [vmem:[#allocation4 + $0x28] sm:$0xff] %vm351, 0.0
        %390 = vst.msk [vmem:[#allocation4 + $0x30] sm:$0xff] %vm351, 0.0
        %391 = vst.msk [vmem:[#allocation4 + $0x38] sm:$0xff] %vm351, 0.0
        %392 = vst.msk [vmem:[#allocation4 + $0x40] sm:$0xff] %vm351, 0.0
        %393 = vst.msk [vmem:[#allocation4 + $0x48] sm:$0xff] %vm351, 0.0
        %394 = vst.msk [vmem:[#allocation4 + $0x50] sm:$0xff] %vm351, 0.0
        %395 = vst.msk [vmem:[#allocation4 + $0x58] sm:$0xff] %vm351, 0.0
        %396 = vst.msk [vmem:[#allocation4 + $0x60] sm:$0xff] %vm351, 0.0
        %397 = vst.msk [vmem:[#allocation4 + $0x68] sm:$0xff] %vm351, 0.0
        %398 = vst.msk [vmem:[#allocation4 + $0x70] sm:$0xff] %vm351, 0.0
        %399 = vst.msk [vmem:[#allocation4 + $0x78] sm:$0xff] %vm351, 0.0
        %400 = vst.msk [vmem:[#allocation4 + $0x80] sm:$0xff] %vm351, 0.0
        %401 = vst.msk [vmem:[#allocation4 + $0x88] sm:$0xff] %vm351, 0.0
        %402 = vst.msk [vmem:[#allocation4 + $0x90] sm:$0xff] %vm351, 0.0
        %403 = vst.msk [vmem:[#allocation4 + $0x98] sm:$0xff] %vm351, 0.0
        %404 = vst.msk [vmem:[#allocation4 + $0xa0] sm:$0xff] %vm351, 0.0
        %405 = vst.msk [vmem:[#allocation4 + $0xa8] sm:$0xff] %vm351, 0.0
        %406 = vst.msk [vmem:[#allocation4 + $0xb0] sm:$0xff] %vm351, 0.0
        %407 = vst.msk [vmem:[#allocation4 + $0xb8] sm:$0xff] %vm351, 0.0
        %408 = vst.msk [vmem:[#allocation4 + $0xc0] sm:$0xff] %vm351, 0.0
        %409 = vst.msk [vmem:[#allocation4 + $0xc8] sm:$0xff] %vm351, 0.0
        %410 = vst.msk [vmem:[#allocation4 + $0xd0] sm:$0xff] %vm351, 0.0
        %411 = vst.msk [vmem:[#allocation4 + $0xd8] sm:$0xff] %vm351, 0.0
        %412 = vst.msk [vmem:[#allocation4 + $0xe0] sm:$0xff] %vm351, 0.0
        %413 = vst.msk [vmem:[#allocation4 + $0xe8] sm:$0xff] %vm351, 0.0
        %414 = vst.msk [vmem:[#allocation4 + $0xf0] sm:$0xff] %vm351, 0.0
        %415 = vst.msk [vmem:[#allocation4 + $0xf8] sm:$0xff] %vm351, 0.0
        %vm416 = vcmask 261120
        %417 = vst.msk [vmem:[#allocation2] sm:$0xff] %vm416, 0.0
        %418 = vst.msk [vmem:[#allocation2 + $0x8] sm:$0xff] %vm416, 0.0
        %419 = vst.msk [vmem:[#allocation2 + $0x10] sm:$0xff] %vm416, 0.0
        %420 = vst.msk [vmem:[#allocation2 + $0x18] sm:$0xff] %vm416, 0.0
        %421 = vst.msk [vmem:[#allocation2 + $0x20] sm:$0xff] %vm416, 0.0
        %422 = vst.msk [vmem:[#allocation2 + $0x28] sm:$0xff] %vm416, 0.0
        %423 = vst.msk [vmem:[#allocation2 + $0x30] sm:$0xff] %vm416, 0.0
        %424 = vst.msk [vmem:[#allocation2 + $0x38] sm:$0xff] %vm416, 0.0
        %425 = vst.msk [vmem:[#allocation2 + $0x40] sm:$0xff] %vm416, 0.0
        %426 = vst.msk [vmem:[#allocation2 + $0x48] sm:$0xff] %vm416, 0.0
        %427 = vst.msk [vmem:[#allocation2 + $0x50] sm:$0xff] %vm416, 0.0
        %428 = vst.msk [vmem:[#allocation2 + $0x58] sm:$0xff] %vm416, 0.0
        %429 = vst.msk [vmem:[#allocation2 + $0x60] sm:$0xff] %vm416, 0.0
        %430 = vst.msk [vmem:[#allocation2 + $0x68] sm:$0xff] %vm416, 0.0
        %431 = vst.msk [vmem:[#allocation2 + $0x70] sm:$0xff] %vm416, 0.0
        %432 = vst.msk [vmem:[#allocation2 + $0x78] sm:$0xff] %vm416, 0.0
        %433 = vst.msk [vmem:[#allocation2 + $0x80] sm:$0xff] %vm416, 0.0
        %434 = vst.msk [vmem:[#allocation2 + $0x88] sm:$0xff] %vm416, 0.0
        %435 = vst.msk [vmem:[#allocation2 + $0x90] sm:$0xff] %vm416, 0.0
        %436 = vst.msk [vmem:[#allocation2 + $0x98] sm:$0xff] %vm416, 0.0
        %437 = vst.msk [vmem:[#allocation2 + $0xa0] sm:$0xff] %vm416, 0.0
        %438 = vst.msk [vmem:[#allocation2 + $0xa8] sm:$0xff] %vm416, 0.0
        %439 = vst.msk [vmem:[#allocation2 + $0xb0] sm:$0xff] %vm416, 0.0
        %440 = vst.msk [vmem:[#allocation2 + $0xb8] sm:$0xff] %vm416, 0.0
        %441 = vst.msk [vmem:[#allocation2 + $0xc0] sm:$0xff] %vm416, 0.0
        %442 = vst.msk [vmem:[#allocation2 + $0xc8] sm:$0xff] %vm416, 0.0
        %443 = vst.msk [vmem:[#allocation2 + $0xd0] sm:$0xff] %vm416, 0.0
        %444 = vst.msk [vmem:[#allocation2 + $0xd8] sm:$0xff] %vm416, 0.0
        %445 = vst.msk [vmem:[#allocation2 + $0xe0] sm:$0xff] %vm416, 0.0
        %446 = vst.msk [vmem:[#allocation2 + $0xe8] sm:$0xff] %vm416, 0.0
        %447 = vst.msk [vmem:[#allocation2 + $0xf0] sm:$0xff] %vm416, 0.0
        %448 = vst.msk [vmem:[#allocation2 + $0xf8] sm:$0xff] %vm416, 0.0
        %v449 = vld [vmem:[%s313] sm:$0xff]
        %v450 = vld [vmem:[%s313 + $0x8] sm:$0xff]
        %v451 = vld [vmem:[%s313 + $0x10] sm:$0xff]
        %v452 = vld [vmem:[%s313 + $0x18] sm:$0xff]
        %v453 = vld [vmem:[%s313 + $0x20] sm:$0xff]
        %v454 = vld [vmem:[%s313 + $0x28] sm:$0xff]
        %v455 = vld [vmem:[%s313 + $0x30] sm:$0xff]
        %v456 = vld [vmem:[%s313 + $0x38] sm:$0xff]
        %v457 = vld [vmem:[%s313 + $0x40] sm:$0xff]
        %v458 = vld [vmem:[%s313 + $0x48] sm:$0xff]
        %v459 = vld [vmem:[%s313 + $0x50] sm:$0xff]
        %v460 = vld [vmem:[%s313 + $0x58] sm:$0xff]
        %v461 = vld [vmem:[%s313 + $0x60] sm:$0xff]
        %v462 = vld [vmem:[%s313 + $0x68] sm:$0xff]
        %v463 = vld [vmem:[%s313 + $0x70] sm:$0xff]
        %v464 = vld [vmem:[%s313 + $0x78] sm:$0xff]
        %v465 = vld [vmem:[%s313 + $0x80] sm:$0xff]
        %v466 = vld [vmem:[%s313 + $0x88] sm:$0xff]
        %v467 = vld [vmem:[%s313 + $0x90] sm:$0xff]
        %v468 = vld [vmem:[%s313 + $0x98] sm:$0xff]
        %v469 = vld [vmem:[%s313 + $0xa0] sm:$0xff]
        %v470 = vld [vmem:[%s313 + $0xa8] sm:$0xff]
        %v471 = vld [vmem:[%s313 + $0xb0] sm:$0xff]
        %v472 = vld [vmem:[%s313 + $0xb8] sm:$0xff]
        %v473 = vld [vmem:[%s313 + $0xc0] sm:$0xff]
        %v474 = vld [vmem:[%s313 + $0xc8] sm:$0xff]
        %v475 = vld [vmem:[%s313 + $0xd0] sm:$0xff]
        %v476 = vld [vmem:[%s313 + $0xd8] sm:$0xff]
        %v477 = vld [vmem:[%s313 + $0xe0] sm:$0xff]
        %v478 = vld [vmem:[%s313 + $0xe8] sm:$0xff]
        %v479 = vld [vmem:[%s313 + $0xf0] sm:$0xff]
        %v480 = vld [vmem:[%s313 + $0xf8] sm:$0xff]
        %v481 = vmul.f32 %v449, 0.17677669
        %v482 = vmul.f32 %v450, 0.17677669
        %v483 = vmul.f32 %v451, 0.17677669
        %v484 = vmul.f32 %v452, 0.17677669
        %v485 = vmul.f32 %v453, 0.17677669
        %v486 = vmul.f32 %v454, 0.17677669
        %v487 = vmul.f32 %v455, 0.17677669
        %v488 = vmul.f32 %v456, 0.17677669
        %v489 = vmul.f32 %v457, 0.17677669
        %v490 = vmul.f32 %v458, 0.17677669
        %v491 = vmul.f32 %v459, 0.17677669
        %v492 = vmul.f32 %v460, 0.17677669
        %v493 = vmul.f32 %v461, 0.17677669
        %v494 = vmul.f32 %v462, 0.17677669
        %v495 = vmul.f32 %v463, 0.17677669
        %v496 = vmul.f32 %v464, 0.17677669
        %v497 = vmul.f32 %v465, 0.17677669
        %v498 = vmul.f32 %v466, 0.17677669
        %v499 = vmul.f32 %v467, 0.17677669
        %v500 = vmul.f32 %v468, 0.17677669
        %v501 = vmul.f32 %v469, 0.17677669
        %v502 = vmul.f32 %v470, 0.17677669
        %v503 = vmul.f32 %v471, 0.17677669
        %v504 = vmul.f32 %v472, 0.17677669
        %v505 = vmul.f32 %v473, 0.17677669
        %v506 = vmul.f32 %v474, 0.17677669
        %v507 = vmul.f32 %v475, 0.17677669
        %v508 = vmul.f32 %v476, 0.17677669
        %v509 = vmul.f32 %v477, 0.17677669
        %v510 = vmul.f32 %v478, 0.17677669
        %v511 = vmul.f32 %v479, 0.17677669
        %v512 = vmul.f32 %v480, 0.17677669
        %513 = vst.msk [vmem:[#allocation5] sm:$0xff] %vm416, %v481
        %514 = vst.msk [vmem:[#allocation5 + $0x8] sm:$0xff] %vm416, %v482
        %515 = vst.msk [vmem:[#allocation5 + $0x10] sm:$0xff] %vm416, %v483
        %516 = vst.msk [vmem:[#allocation5 + $0x18] sm:$0xff] %vm416, %v484
        %517 = vst.msk [vmem:[#allocation5 + $0x20] sm:$0xff] %vm416, %v485
        %518 = vst.msk [vmem:[#allocation5 + $0x28] sm:$0xff] %vm416, %v486
        %519 = vst.msk [vmem:[#allocation5 + $0x30] sm:$0xff] %vm416, %v487
        %520 = vst.msk [vmem:[#allocation5 + $0x38] sm:$0xff] %vm416, %v488
        %521 = vst.msk [vmem:[#allocation5 + $0x40] sm:$0xff] %vm416, %v489
        %522 = vst.msk [vmem:[#allocation5 + $0x48] sm:$0xff] %vm416, %v490
        %523 = vst.msk [vmem:[#allocation5 + $0x50] sm:$0xff] %vm416, %v491
        %524 = vst.msk [vmem:[#allocation5 + $0x58] sm:$0xff] %vm416, %v492
        %525 = vst.msk [vmem:[#allocation5 + $0x60] sm:$0xff] %vm416, %v493
        %526 = vst.msk [vmem:[#allocation5 + $0x68] sm:$0xff] %vm416, %v494
        %527 = vst.msk [vmem:[#allocation5 + $0x70] sm:$0xff] %vm416, %v495
        %528 = vst.msk [vmem:[#allocation5 + $0x78] sm:$0xff] %vm416, %v496
        %529 = vst.msk [vmem:[#allocation5 + $0x80] sm:$0xff] %vm416, %v497
        %530 = vst.msk [vmem:[#allocation5 + $0x88] sm:$0xff] %vm416, %v498
        %531 = vst.msk [vmem:[#allocation5 + $0x90] sm:$0xff] %vm416, %v499
        %532 = vst.msk [vmem:[#allocation5 + $0x98] sm:$0xff] %vm416, %v500
        %533 = vst.msk [vmem:[#allocation5 + $0xa0] sm:$0xff] %vm416, %v501
        %534 = vst.msk [vmem:[#allocation5 + $0xa8] sm:$0xff] %vm416, %v502
        %535 = vst.msk [vmem:[#allocation5 + $0xb0] sm:$0xff] %vm416, %v503
        %536 = vst.msk [vmem:[#allocation5 + $0xb8] sm:$0xff] %vm416, %v504
        %537 = vst.msk [vmem:[#allocation5 + $0xc0] sm:$0xff] %vm416, %v505
        %538 = vst.msk [vmem:[#allocation5 + $0xc8] sm:$0xff] %vm416, %v506
        %539 = vst.msk [vmem:[#allocation5 + $0xd0] sm:$0xff] %vm416, %v507
        %540 = vst.msk [vmem:[#allocation5 + $0xd8] sm:$0xff] %vm416, %v508
        %541 = vst.msk [vmem:[#allocation5 + $0xe0] sm:$0xff] %vm416, %v509
        %542 = vst.msk [vmem:[#allocation5 + $0xe8] sm:$0xff] %vm416, %v510
        %543 = vst.msk [vmem:[#allocation5 + $0xf0] sm:$0xff] %vm416, %v511
        %544 = vst.msk [vmem:[#allocation5 + $0xf8] sm:$0xff] %vm416, %v512
      $region40: #{tpu_custom_call.1} parent=35 // pred_fallthru
        _
      %v545 = vld [vmem:[%s304] sm:$0x1]
      %v546 = vld [vmem:[#allocation5] sm:$0xff]
      %v547 = vld [vmem:[#allocation5 + $0x8] sm:$0xff]
      %v548 = vld [vmem:[#allocation5 + $0x10] sm:$0xff]
      %v549 = vld [vmem:[#allocation5 + $0x18] sm:$0xff]
      %v550 = vld [vmem:[#allocation5 + $0x20] sm:$0xff]
      %v551 = vld [vmem:[#allocation5 + $0x28] sm:$0xff]
      %v552 = vld [vmem:[#allocation5 + $0x30] sm:$0xff]
      %v553 = vld [vmem:[#allocation5 + $0x38] sm:$0xff]
      %v554 = vld [vmem:[#allocation5 + $0x40] sm:$0xff]
      %v555 = vld [vmem:[#allocation5 + $0x48] sm:$0xff]
      %v556 = vld [vmem:[#allocation5 + $0x50] sm:$0xff]
      %v557 = vld [vmem:[#allocation5 + $0x58] sm:$0xff]
      %v558 = vld [vmem:[#allocation5 + $0x60] sm:$0xff]
      %v559 = vld [vmem:[#allocation5 + $0x68] sm:$0xff]
      %v560 = vld [vmem:[#allocation5 + $0x70] sm:$0xff]
      %v561 = vld [vmem:[#allocation5 + $0x78] sm:$0xff]
      %v562 = vld [vmem:[%s324] sm:$0xff]
      %v563 = vld [vmem:[%s324 + $0x8] sm:$0xff]
      %v564 = vld [vmem:[%s324 + $0x10] sm:$0xff]
      %v565 = vld [vmem:[%s324 + $0x18] sm:$0xff]
      %v566 = vld [vmem:[%s324 + $0x20] sm:$0xff]
      %v567 = vld [vmem:[%s324 + $0x28] sm:$0xff]
      %v568 = vld [vmem:[%s324 + $0x30] sm:$0xff]
      %v569 = vld [vmem:[%s324 + $0x38] sm:$0xff]
      %v570 = vld [vmem:[%s324 + $0x40] sm:$0xff]
      %v571 = vld [vmem:[%s324 + $0x48] sm:$0xff]
      %v572 = vld [vmem:[%s324 + $0x50] sm:$0xff]
      %v573 = vld [vmem:[%s324 + $0x58] sm:$0xff]
      %v574 = vld [vmem:[%s324 + $0x60] sm:$0xff]
      %v575 = vld [vmem:[%s324 + $0x68] sm:$0xff]
      %v576 = vld [vmem:[%s324 + $0x70] sm:$0xff]
      %v577 = vld [vmem:[%s324 + $0x78] sm:$0xff]
      %v579 = vlaneseq
      %v580 = vshrl.u32 %v579, 7
      %v581 = vsub.s32 0, %v580
      %v582 = vrot.slane %v545, %v581
      %vm584 = vcmask 261120
      %v586 = vsel %vm584, %v546, 0
      %v589 = vsel %vm584, %v547, 0
      %v592 = vsel %vm584, %v548, 0
      %v595 = vsel %vm584, %v549, 0
      %v598 = vsel %vm584, %v550, 0
      %v601 = vsel %vm584, %v551, 0
      %v604 = vsel %vm584, %v552, 0
      %v607 = vsel %vm584, %v553, 0
      %v610 = vsel %vm584, %v554, 0
      %v613 = vsel %vm584, %v555, 0
      %v616 = vsel %vm584, %v556, 0
      %v619 = vsel %vm584, %v557, 0
      %v622 = vsel %vm584, %v558, 0
      %v625 = vsel %vm584, %v559, 0
      %v628 = vsel %vm584, %v560, 0
      %v631 = vsel %vm584, %v561, 0
      %v634 = vsel %vm584, %v562, 0
      %v637 = vsel %vm584, %v563, 0
      %v640 = vsel %vm584, %v564, 0
      %v643 = vsel %vm584, %v565, 0
      %v646 = vsel %vm584, %v566, 0
      %v649 = vsel %vm584, %v567, 0
      %v652 = vsel %vm584, %v568, 0
      %v655 = vsel %vm584, %v569, 0
      %v658 = vsel %vm584, %v570, 0
      %v661 = vsel %vm584, %v571, 0
      %v664 = vsel %vm584, %v572, 0
      %v667 = vsel %vm584, %v573, 0
      %v670 = vsel %vm584, %v574, 0
      %v673 = vsel %vm584, %v575, 0
      %v676 = vsel %vm584, %v576, 0
      %v679 = vsel %vm584, %v577, 0
      %681 = vmatprep.subr.mxu0 0.0
      %682 = vmatpush1.xpose.msra.mxu0 %v634
      %683 = vmatprep.subr.mxu0 0.0
      %684 = vmatpush1.xpose.msra.mxu0 %v637
      %685 = vmatprep.subr.mxu0 0.0
      %686 = vmatpush1.xpose.msra.mxu0 %v640
      %687 = vmatprep.subr.mxu0 0.0
      %688 = vmatpush1.xpose.msra.mxu0 %v643
      %689 = vmatprep.subr.mxu0 0.0
      %690 = vmatpush1.xpose.msra.mxu0 %v646
      %691 = vmatprep.subr.mxu0 0.0
      %692 = vmatpush1.xpose.msra.mxu0 %v649
      %693 = vmatprep.subr.mxu0 0.0
      %694 = vmatpush1.xpose.msra.mxu0 %v652
      %695 = vmatprep.subr.mxu0 0.0
      %696 = vmatpush1.xpose.msra.mxu0 %v655
      %697 = vmatprep.subr.mxu0 0.0
      %698 = vmatpush1.xpose.msra.mxu0 %v658
      %699 = vmatprep.subr.mxu0 0.0
      %700 = vmatpush1.xpose.msra.mxu0 %v661
      %701 = vmatprep.subr.mxu0 0.0
      %702 = vmatpush1.xpose.msra.mxu0 %v664
      %703 = vmatprep.subr.mxu0 0.0
      %704 = vmatpush1.xpose.msra.mxu0 %v667
      %705 = vmatprep.subr.mxu0 0.0
      %706 = vmatpush1.xpose.msra.mxu0 %v670
      %707 = vmatprep.subr.mxu0 0.0
      %708 = vmatpush1.xpose.msra.mxu0 %v673
      %709 = vmatprep.subr.mxu0 0.0
      %710 = vmatpush1.xpose.msra.mxu0 %v676
      %711 = vmatprep.subr.mxu0 0.0
      %712 = vmatpush1.xpose.msra.mxu0 %v679
      %713 = vmatprep.subr.mxu0 0.0
      %714 = vmatpush1.xpose.msra.mxu0 0.0
      %715 = vmatprep.subr.mxu0 0.0
      %716 = vmatpush1.xpose.msra.mxu0 0.0
      %717 = vmatprep.subr.mxu0 0.0
      %718 = vmatpush1.xpose.msra.mxu0 0.0
      %719 = vmatprep.subr.mxu0 0.0
      %720 = vmatpush1.xpose.msra.mxu0 0.0
      %721 = vmatprep.subr.mxu0 0.0
      %722 = vmatpush1.xpose.msra.mxu0 0.0
      %723 = vmatprep.subr.mxu0 0.0
      %724 = vmatpush1.xpose.msra.mxu0 0.0
      %725 = vmatprep.subr.mxu0 0.0
      %726 = vmatpush1.xpose.msra.mxu0 0.0
      %727 = vmatprep.subr.mxu0 0.0
      %728 = vmatpush1.xpose.msra.mxu0 0.0
      %729 = vmatprep.subr.mxu0 0.0
      %730 = vmatpush1.xpose.msra.mxu0 0.0
      %731 = vmatprep.subr.mxu0 0.0
      %732 = vmatpush1.xpose.msra.mxu0 0.0
      %733 = vmatprep.subr.mxu0 0.0
      %734 = vmatpush1.xpose.msra.mxu0 0.0
      %735 = vmatprep.subr.mxu0 0.0
      %736 = vmatpush1.xpose.msra.mxu0 0.0
      %737 = vmatprep.subr.mxu0 0.0
      %738 = vmatpush1.xpose.msra.mxu0 0.0
      %739 = vmatprep.subr.mxu0 0.0
      %740 = vmatpush1.xpose.msra.mxu0 0.0
      %741 = vmatprep.subr.mxu0 0.0
      %742 = vmatpush1.xpose.msra.mxu0 0.0
      %743 = vmatprep.subr.mxu0 0.0
      %744 = vmatpush1.xpose.msra.mxu0 0.0
      %745 = vmatprep.mubr.f32.mxu0 0.0
      %746 = vmatmul.mubr.f32.gmra.mrb[0].mxu0 %v586
      %v747 = vpop.f32.mrb[0].mxu0
      %v748 = vadd.f32 %v582, %v747
      %v749 = vpop.f32.mrb[0].mxu0
      %750 = vmatprep.mubr.f32.mxu0 0.0
      %751 = vmatmul.mubr.f32.gmra.mrb[0].mxu0 %v589
      %v752 = vpop.f32.mrb[0].mxu0
      %v753 = vadd.f32 %v582, %v752
      %v754 = vpop.f32.mrb[0].mxu0
      %755 = vmatprep.mubr.f32.mxu0 0.0
      %756 = vmatmul.mubr.f32.gmra.mrb[0].mxu0 %v592
      %v757 = vpop.f32.mrb[0].mxu0
      %v758 = vadd.f32 %v582, %v757
      %v759 = vpop.f32.mrb[0].mxu0
      %760 = vmatprep.mubr.f32.mxu0 0.0
      %761 = vmatmul.mubr.f32.gmra.mrb[0].mxu0 %v595
      %v762 = vpop.f32.mrb[0].mxu0
      %v763 = vadd.f32 %v582, %v762
      %v764 = vpop.f32.mrb[0].mxu0
      %765 = vmatprep.mubr.f32.mxu0 0.0
      %766 = vmatmul.mubr.f32.gmra.mrb[0].mxu0 %v598
      %v767 = vpop.f32.mrb[0].mxu0
      %v768 = vadd.f32 %v582, %v767
      %v769 = vpop.f32.mrb[0].mxu0
      %770 = vmatprep.mubr.f32.mxu0 0.0
      %771 = vmatmul.mubr.f32.gmra.mrb[0].mxu0 %v601
      %v772 = vpop.f32.mrb[0].mxu0
      %v773 = vadd.f32 %v582, %v772
      %v774 = vpop.f32.mrb[0].mxu0
      %775 = vmatprep.mubr.f32.mxu0 0.0
      %776 = vmatmul.mubr.f32.gmra.mrb[0].mxu0 %v604
      %v777 = vpop.f32.mrb[0].mxu0
      %v778 = vadd.f32 %v582, %v777
      %v779 = vpop.f32.mrb[0].mxu0
      %780 = vmatprep.mubr.f32.mxu0 0.0
      %781 = vmatmul.mubr.f32.gmra.mrb[0].mxu0 %v607
      %v782 = vpop.f32.mrb[0].mxu0
      %v783 = vadd.f32 %v582, %v782
      %v784 = vpop.f32.mrb[0].mxu0
      %785 = vmatprep.mubr.f32.mxu0 0.0
      %786 = vmatmul.mubr.f32.gmra.mrb[0].mxu0 %v610
      %v787 = vpop.f32.mrb[0].mxu0
      %v788 = vadd.f32 %v582, %v787
      %v789 = vpop.f32.mrb[0].mxu0
      %790 = vmatprep.mubr.f32.mxu0 0.0
      %791 = vmatmul.mubr.f32.gmra.mrb[0].mxu0 %v613
      %v792 = vpop.f32.mrb[0].mxu0
      %v793 = vadd.f32 %v582, %v792
      %v794 = vpop.f32.mrb[0].mxu0
      %795 = vmatprep.mubr.f32.mxu0 0.0
      %796 = vmatmul.mubr.f32.gmra.mrb[0].mxu0 %v616
      %v797 = vpop.f32.mrb[0].mxu0
      %v798 = vadd.f32 %v582, %v797
      %v799 = vpop.f32.mrb[0].mxu0
      %800 = vmatprep.mubr.f32.mxu0 0.0
      %801 = vmatmul.mubr.f32.gmra.mrb[0].mxu0 %v619
      %v802 = vpop.f32.mrb[0].mxu0
      %v803 = vadd.f32 %v582, %v802
      %v804 = vpop.f32.mrb[0].mxu0
      %805 = vmatprep.mubr.f32.mxu0 0.0
      %806 = vmatmul.mubr.f32.gmra.mrb[0].mxu0 %v622
      %v807 = vpop.f32.mrb[0].mxu0
      %v808 = vadd.f32 %v582, %v807
      %v809 = vpop.f32.mrb[0].mxu0
      %810 = vmatprep.mubr.f32.mxu0 0.0
      %811 = vmatmul.mubr.f32.gmra.mrb[0].mxu0 %v625
      %v812 = vpop.f32.mrb[0].mxu0
      %v813 = vadd.f32 %v582, %v812
      %v814 = vpop.f32.mrb[0].mxu0
      %815 = vmatprep.mubr.f32.mxu0 0.0
      %816 = vmatmul.mubr.f32.gmra.mrb[0].mxu0 %v628
      %v817 = vpop.f32.mrb[0].mxu0
      %v818 = vadd.f32 %v582, %v817
      %v819 = vpop.f32.mrb[0].mxu0
      %820 = vmatprep.mubr.f32.mxu0 0.0
      %821 = vmatmul.mubr.f32.gmra.mrb[0].mxu0 %v631
      %v822 = vpop.f32.mrb[0].mxu0
      %v823 = vadd.f32 %v582, %v822
      %v824 = vpop.f32.mrb[0].mxu0
      %825 = vdwg.mxu0
      %v826 = vld [vmem:[#allocation3] sm:$0xff]
      %v827 = vld [vmem:[#allocation3 + $0x8] sm:$0xff]
      %v828 = vld [vmem:[#allocation3 + $0x10] sm:$0xff]
      %v829 = vld [vmem:[#allocation3 + $0x18] sm:$0xff]
      %v830 = vld [vmem:[#allocation3 + $0x20] sm:$0xff]
      %v831 = vld [vmem:[#allocation3 + $0x28] sm:$0xff]
      %v832 = vld [vmem:[#allocation3 + $0x30] sm:$0xff]
      %v833 = vld [vmem:[#allocation3 + $0x38] sm:$0xff]
      %v834 = vld [vmem:[#allocation3 + $0x40] sm:$0xff]
      %v835 = vld [vmem:[#allocation3 + $0x48] sm:$0xff]
      %v836 = vld [vmem:[#allocation3 + $0x50] sm:$0xff]
      %v837 = vld [vmem:[#allocation3 + $0x58] sm:$0xff]
      %v838 = vld [vmem:[#allocation3 + $0x60] sm:$0xff]
      %v839 = vld [vmem:[#allocation3 + $0x68] sm:$0xff]
      %v840 = vld [vmem:[#allocation3 + $0x70] sm:$0xff]
      %v841 = vld [vmem:[#allocation3 + $0x78] sm:$0xff]
      %842 = vmax.xlane.f32.xlu0 %v748
      %v843 = vpop.xlane.xlu0 %842
      %844 = vmax.xlane.f32.xlu0 %v753
      %v845 = vpop.xlane.xlu0 %844
      %846 = vmax.xlane.f32.xlu0 %v758
      %v847 = vpop.xlane.xlu0 %846
      %848 = vmax.xlane.f32.xlu0 %v763
      %v849 = vpop.xlane.xlu0 %848
      %850 = vmax.xlane.f32.xlu0 %v768
      %v851 = vpop.xlane.xlu0 %850
      %852 = vmax.xlane.f32.xlu0 %v773
      %v853 = vpop.xlane.xlu0 %852
      %854 = vmax.xlane.f32.xlu0 %v778
      %v855 = vpop.xlane.xlu0 %854
      %856 = vmax.xlane.f32.xlu0 %v783
      %v857 = vpop.xlane.xlu0 %856
      %858 = vmax.xlane.f32.xlu0 %v788
      %v859 = vpop.xlane.xlu0 %858
      %860 = vmax.xlane.f32.xlu0 %v793
      %v861 = vpop.xlane.xlu0 %860
      %862 = vmax.xlane.f32.xlu0 %v798
      %v863 = vpop.xlane.xlu0 %862
      %864 = vmax.xlane.f32.xlu0 %v803
      %v865 = vpop.xlane.xlu0 %864
      %866 = vmax.xlane.f32.xlu0 %v808
      %v867 = vpop.xlane.xlu0 %866
      %868 = vmax.xlane.f32.xlu0 %v813
      %v869 = vpop.xlane.xlu0 %868
      %870 = vmax.xlane.f32.xlu0 %v818
      %v871 = vpop.xlane.xlu0 %870
      %872 = vmax.xlane.f32.xlu0 %v823
      %v873 = vpop.xlane.xlu0 %872
      %v874 = vmax.f32 %v826, %v843
      %v875 = vmax.f32 %v827, %v845
      %v876 = vmax.f32 %v828, %v847
      %v877 = vmax.f32 %v829, %v849
      %v878 = vmax.f32 %v830, %v851
      %v879 = vmax.f32 %v831, %v853
      %v880 = vmax.f32 %v832, %v855
      %v881 = vmax.f32 %v833, %v857
      %v882 = vmax.f32 %v834, %v859
      %v883 = vmax.f32 %v835, %v861
      %v884 = vmax.f32 %v836, %v863
      %v885 = vmax.f32 %v837, %v865
      %v886 = vmax.f32 %v838, %v867
      %v887 = vmax.f32 %v839, %v869
      %v888 = vmax.f32 %v840, %v871
      %v889 = vmax.f32 %v841, %v873
      %v890 = vsub.f32 %v826, %v874
      %v891 = vsub.f32 %v827, %v875
      %v892 = vsub.f32 %v828, %v876
      %v893 = vsub.f32 %v829, %v877
      %v894 = vsub.f32 %v830, %v878
      %v895 = vsub.f32 %v831, %v879
      %v896 = vsub.f32 %v832, %v880
      %v897 = vsub.f32 %v833, %v881
      %v898 = vsub.f32 %v834, %v882
      %v899 = vsub.f32 %v835, %v883
      %v900 = vsub.f32 %v836, %v884
      %v901 = vsub.f32 %v837, %v885
      %v902 = vsub.f32 %v838, %v886
      %v903 = vsub.f32 %v839, %v887
      %v904 = vsub.f32 %v840, %v888
      %v905 = vsub.f32 %v841, %v889
      %v906 = vmul.f32 %v890, 1.442695
      %v907 = vpow.pop %v906
      %v908 = vmul.f32 %v891, 1.442695
      %v909 = vpow.pop %v908
      %v910 = vmul.f32 %v892, 1.442695
      %v911 = vpow.pop %v910
      %v912 = vmul.f32 %v893, 1.442695
      %v913 = vpow.pop %v912
      %v914 = vmul.f32 %v894, 1.442695
      %v915 = vpow.pop %v914
      %v916 = vmul.f32 %v895, 1.442695
      %v917 = vpow.pop %v916
      %v918 = vmul.f32 %v896, 1.442695
      %v919 = vpow.pop %v918
      %v920 = vmul.f32 %v897, 1.442695
      %v921 = vpow.pop %v920
      %v922 = vmul.f32 %v898, 1.442695
      %v923 = vpow.pop %v922
      %v924 = vmul.f32 %v899, 1.442695
      %v925 = vpow.pop %v924
      %v926 = vmul.f32 %v900, 1.442695
      %v927 = vpow.pop %v926
      %v928 = vmul.f32 %v901, 1.442695
      %v929 = vpow.pop %v928
      %v930 = vmul.f32 %v902, 1.442695
      %v931 = vpow.pop %v930
      %v932 = vmul.f32 %v903, 1.442695
      %v933 = vpow.pop %v932
      %v934 = vmul.f32 %v904, 1.442695
      %v935 = vpow.pop %v934
      %v936 = vmul.f32 %v905, 1.442695
      %v937 = vpow.pop %v936
      %939 = vset.pattern.permute.xlu0 0
      %940 = vperm.xlu0 %939, %v874
      %v941 = vpop.permute.xlu0 %940
      %944 = vset.pattern.permute.xlu0 0
      %945 = vperm.xlu0 %944, %v875
      %v946 = vpop.permute.xlu0 %945
      %949 = vset.pattern.permute.xlu0 0
      %950 = vperm.xlu0 %949, %v876
      %v951 = vpop.permute.xlu0 %950
      %954 = vset.pattern.permute.xlu0 0
      %955 = vperm.xlu0 %954, %v877
      %v956 = vpop.permute.xlu0 %955
      %959 = vset.pattern.permute.xlu0 0
      %960 = vperm.xlu0 %959, %v878
      %v961 = vpop.permute.xlu0 %960
      %964 = vset.pattern.permute.xlu0 0
      %965 = vperm.xlu0 %964, %v879
      %v966 = vpop.permute.xlu0 %965
      %969 = vset.pattern.permute.xlu0 0
      %970 = vperm.xlu0 %969, %v880
      %v971 = vpop.permute.xlu0 %970
      %974 = vset.pattern.permute.xlu0 0
      %975 = vperm.xlu0 %974, %v881
      %v976 = vpop.permute.xlu0 %975
      %979 = vset.pattern.permute.xlu0 0
      %980 = vperm.xlu0 %979, %v882
      %v981 = vpop.permute.xlu0 %980
      %984 = vset.pattern.permute.xlu0 0
      %985 = vperm.xlu0 %984, %v883
      %v986 = vpop.permute.xlu0 %985
      %989 = vset.pattern.permute.xlu0 0
      %990 = vperm.xlu0 %989, %v884
      %v991 = vpop.permute.xlu0 %990
      %994 = vset.pattern.permute.xlu0 0
      %995 = vperm.xlu0 %994, %v885
      %v996 = vpop.permute.xlu0 %995
      %999 = vset.pattern.permute.xlu0 0
      %1000 = vperm.xlu0 %999, %v886
      %v1001 = vpop.permute.xlu0 %1000
      %1004 = vset.pattern.permute.xlu0 0
      %1005 = vperm.xlu0 %1004, %v887
      %v1006 = vpop.permute.xlu0 %1005
      %1009 = vset.pattern.permute.xlu0 0
      %1010 = vperm.xlu0 %1009, %v888
      %v1011 = vpop.permute.xlu0 %1010
      %1014 = vset.pattern.permute.xlu0 0
      %1015 = vperm.xlu0 %1014, %v889
      %v1016 = vpop.permute.xlu0 %1015
      %v1018 = vsub.f32 %v748, %v941
      %v1019 = vsub.f32 %v753, %v946
      %v1020 = vsub.f32 %v758, %v951
      %v1021 = vsub.f32 %v763, %v956
      %v1022 = vsub.f32 %v768, %v961
      %v1023 = vsub.f32 %v773, %v966
      %v1024 = vsub.f32 %v778, %v971
      %v1025 = vsub.f32 %v783, %v976
      %v1026 = vsub.f32 %v788, %v981
      %v1027 = vsub.f32 %v793, %v986
      %v1028 = vsub.f32 %v798, %v991
      %v1029 = vsub.f32 %v803, %v996
      %v1030 = vsub.f32 %v808, %v1001
      %v1031 = vsub.f32 %v813, %v1006
      %v1032 = vsub.f32 %v818, %v1011
      %v1033 = vsub.f32 %v823, %v1016
      %v1034 = vmul.f32 %v1018, 1.442695
      %v1035 = vpow.pop %v1034
      %v1036 = vmul.f32 %v1019, 1.442695
      %v1037 = vpow.pop %v1036
      %v1038 = vmul.f32 %v1020, 1.442695
      %v1039 = vpow.pop %v1038
      %v1040 = vmul.f32 %v1021, 1.442695
      %v1041 = vpow.pop %v1040
      %v1042 = vmul.f32 %v1022, 1.442695
      %v1043 = vpow.pop %v1042
      %v1044 = vmul.f32 %v1023, 1.442695
      %v1045 = vpow.pop %v1044
      %v1046 = vmul.f32 %v1024, 1.442695
      %v1047 = vpow.pop %v1046
      %v1048 = vmul.f32 %v1025, 1.442695
      %v1049 = vpow.pop %v1048
      %v1050 = vmul.f32 %v1026, 1.442695
      %v1051 = vpow.pop %v1050
      %v1052 = vmul.f32 %v1027, 1.442695
      %v1053 = vpow.pop %v1052
      %v1054 = vmul.f32 %v1028, 1.442695
      %v1055 = vpow.pop %v1054
      %v1056 = vmul.f32 %v1029, 1.442695
      %v1057 = vpow.pop %v1056
      %v1058 = vmul.f32 %v1030, 1.442695
      %v1059 = vpow.pop %v1058
      %v1060 = vmul.f32 %v1031, 1.442695
      %v1061 = vpow.pop %v1060
      %v1062 = vmul.f32 %v1032, 1.442695
      %v1063 = vpow.pop %v1062
      %v1064 = vmul.f32 %v1033, 1.442695
      %v1065 = vpow.pop %v1064
      %v1066 = vld [vmem:[#allocation4] sm:$0xff]
      %v1067 = vld [vmem:[#allocation4 + $0x8] sm:$0xff]
      %v1068 = vld [vmem:[#allocation4 + $0x10] sm:$0xff]
      %v1069 = vld [vmem:[#allocation4 + $0x18] sm:$0xff]
      %v1070 = vld [vmem:[#allocation4 + $0x20] sm:$0xff]
      %v1071 = vld [vmem:[#allocation4 + $0x28] sm:$0xff]
      %v1072 = vld [vmem:[#allocation4 + $0x30] sm:$0xff]
      %v1073 = vld [vmem:[#allocation4 + $0x38] sm:$0xff]
      %v1074 = vld [vmem:[#allocation4 + $0x40] sm:$0xff]
      %v1075 = vld [vmem:[#allocation4 + $0x48] sm:$0xff]
      %v1076 = vld [vmem:[#allocation4 + $0x50] sm:$0xff]
      %v1077 = vld [vmem:[#allocation4 + $0x58] sm:$0xff]
      %v1078 = vld [vmem:[#allocation4 + $0x60] sm:$0xff]
      %v1079 = vld [vmem:[#allocation4 + $0x68] sm:$0xff]
      %v1080 = vld [vmem:[#allocation4 + $0x70] sm:$0xff]
      %v1081 = vld [vmem:[#allocation4 + $0x78] sm:$0xff]
      %v1082 = vmul.f32 %v907, %v1066
      %v1083 = vmul.f32 %v909, %v1067
      %v1084 = vmul.f32 %v911, %v1068
      %v1085 = vmul.f32 %v913, %v1069
      %v1086 = vmul.f32 %v915, %v1070
      %v1087 = vmul.f32 %v917, %v1071
      %v1088 = vmul.f32 %v919, %v1072
      %v1089 = vmul.f32 %v921, %v1073
      %v1090 = vmul.f32 %v923, %v1074
      %v1091 = vmul.f32 %v925, %v1075
      %v1092 = vmul.f32 %v927, %v1076
      %v1093 = vmul.f32 %v929, %v1077
      %v1094 = vmul.f32 %v931, %v1078
      %v1095 = vmul.f32 %v933, %v1079
      %v1096 = vmul.f32 %v935, %v1080
      %v1097 = vmul.f32 %v937, %v1081
      %1098 = vadd.xlane.f32.xlu0 %v1035
      %v1099 = vpop.xlane.xlu0 %1098
      %1100 = vadd.xlane.f32.xlu0 %v1037
      %v1101 = vpop.xlane.xlu0 %1100
      %1102 = vadd.xlane.f32.xlu0 %v1039
      %v1103 = vpop.xlane.xlu0 %1102
      %1104 = vadd.xlane.f32.xlu0 %v1041
      %v1105 = vpop.xlane.xlu0 %1104
      %1106 = vadd.xlane.f32.xlu0 %v1043
      %v1107 = vpop.xlane.xlu0 %1106
      %1108 = vadd.xlane.f32.xlu0 %v1045
      %v1109 = vpop.xlane.xlu0 %1108
      %1110 = vadd.xlane.f32.xlu0 %v1047
      %v1111 = vpop.xlane.xlu0 %1110
      %1112 = vadd.xlane.f32.xlu0 %v1049
      %v1113 = vpop.xlane.xlu0 %1112
      %1114 = vadd.xlane.f32.xlu0 %v1051
      %v1115 = vpop.xlane.xlu0 %1114
      %1116 = vadd.xlane.f32.xlu0 %v1053
      %v1117 = vpop.xlane.xlu0 %1116
      %1118 = vadd.xlane.f32.xlu0 %v1055
      %v1119 = vpop.xlane.xlu0 %1118
      %1120 = vadd.xlane.f32.xlu0 %v1057
      %v1121 = vpop.xlane.xlu0 %1120
      %1122 = vadd.xlane.f32.xlu0 %v1059
      %v1123 = vpop.xlane.xlu0 %1122
      %1124 = vadd.xlane.f32.xlu0 %v1061
      %v1125 = vpop.xlane.xlu0 %1124
      %1126 = vadd.xlane.f32.xlu0 %v1063
      %v1127 = vpop.xlane.xlu0 %1126
      %1128 = vadd.xlane.f32.xlu0 %v1065
      %v1129 = vpop.xlane.xlu0 %1128
      %v1130 = vadd.f32 %v1082, %v1099
      %v1131 = vadd.f32 %v1083, %v1101
      %v1132 = vadd.f32 %v1084, %v1103
      %v1133 = vadd.f32 %v1085, %v1105
      %v1134 = vadd.f32 %v1086, %v1107
      %v1135 = vadd.f32 %v1087, %v1109
      %v1136 = vadd.f32 %v1088, %v1111
      %v1137 = vadd.f32 %v1089, %v1113
      %v1138 = vadd.f32 %v1090, %v1115
      %v1139 = vadd.f32 %v1091, %v1117
      %v1140 = vadd.f32 %v1092, %v1119
      %v1141 = vadd.f32 %v1093, %v1121
      %v1142 = vadd.f32 %v1094, %v1123
      %v1143 = vadd.f32 %v1095, %v1125
      %v1144 = vadd.f32 %v1096, %v1127
      %v1145 = vadd.f32 %v1097, %v1129
      %vm1146 = vcmask 7168
      %1147 = vst.msk [vmem:[#allocation4] sm:$0xff] %vm1146, %v1130
      %1148 = vst.msk [vmem:[#allocation4 + $0x8] sm:$0xff] %vm1146, %v1131
      %1149 = vst.msk [vmem:[#allocation4 + $0x10] sm:$0xff] %vm1146, %v1132
      %1150 = vst.msk [vmem:[#allocation4 + $0x18] sm:$0xff] %vm1146, %v1133
      %1151 = vst.msk [vmem:[#allocation4 + $0x20] sm:$0xff] %vm1146, %v1134
      %1152 = vst.msk [vmem:[#allocation4 + $0x28] sm:$0xff] %vm1146, %v1135
      %1153 = vst.msk [vmem:[#allocation4 + $0x30] sm:$0xff] %vm1146, %v1136
      %1154 = vst.msk [vmem:[#allocation4 + $0x38] sm:$0xff] %vm1146, %v1137
      %1155 = vst.msk [vmem:[#allocation4 + $0x40] sm:$0xff] %vm1146, %v1138
      %1156 = vst.msk [vmem:[#allocation4 + $0x48] sm:$0xff] %vm1146, %v1139
      %1157 = vst.msk [vmem:[#allocation4 + $0x50] sm:$0xff] %vm1146, %v1140
      %1158 = vst.msk [vmem:[#allocation4 + $0x58] sm:$0xff] %vm1146, %v1141
      %1159 = vst.msk [vmem:[#allocation4 + $0x60] sm:$0xff] %vm1146, %v1142
      %1160 = vst.msk [vmem:[#allocation4 + $0x68] sm:$0xff] %vm1146, %v1143
      %1161 = vst.msk [vmem:[#allocation4 + $0x70] sm:$0xff] %vm1146, %v1144
      %1162 = vst.msk [vmem:[#allocation4 + $0x78] sm:$0xff] %vm1146, %v1145
      %v1163 = vld [vmem:[%s335] sm:$0xff]
      %v1164 = vld [vmem:[%s335 + $0x8] sm:$0xff]
      %v1165 = vld [vmem:[%s335 + $0x10] sm:$0xff]
      %v1166 = vld [vmem:[%s335 + $0x18] sm:$0xff]
      %v1167 = vld [vmem:[%s335 + $0x20] sm:$0xff]
      %v1168 = vld [vmem:[%s335 + $0x28] sm:$0xff]
      %v1169 = vld [vmem:[%s335 + $0x30] sm:$0xff]
      %v1170 = vld [vmem:[%s335 + $0x38] sm:$0xff]
      %v1171 = vld [vmem:[%s335 + $0x40] sm:$0xff]
      %v1172 = vld [vmem:[%s335 + $0x48] sm:$0xff]
      %v1173 = vld [vmem:[%s335 + $0x50] sm:$0xff]
      %v1174 = vld [vmem:[%s335 + $0x58] sm:$0xff]
      %v1175 = vld [vmem:[%s335 + $0x60] sm:$0xff]
      %v1176 = vld [vmem:[%s335 + $0x68] sm:$0xff]
      %v1177 = vld [vmem:[%s335 + $0x70] sm:$0xff]
      %v1178 = vld [vmem:[%s335 + $0x78] sm:$0xff]
      %1179 = vmatprep.subr.mxu0 0.0
      %1180 = vmatpush1.msra.mxu0 %v1163
      %1181 = vmatprep.subr.mxu0 0.0
      %1182 = vmatpush1.msra.mxu0 %v1164
      %1183 = vmatprep.subr.mxu0 0.0
      %1184 = vmatpush1.msra.mxu0 %v1165
      %1185 = vmatprep.subr.mxu0 0.0
      %1186 = vmatpush1.msra.mxu0 %v1166
      %1187 = vmatprep.subr.mxu0 0.0
      %1188 = vmatpush1.msra.mxu0 %v1167
      %1189 = vmatprep.subr.mxu0 0.0
      %1190 = vmatpush1.msra.mxu0 %v1168
      %1191 = vmatprep.subr.mxu0 0.0
      %1192 = vmatpush1.msra.mxu0 %v1169
      %1193 = vmatprep.subr.mxu0 0.0
      %1194 = vmatpush1.msra.mxu0 %v1170
      %1195 = vmatprep.subr.mxu0 0.0
      %1196 = vmatpush1.msra.mxu0 %v1171
      %1197 = vmatprep.subr.mxu0 0.0
      %1198 = vmatpush1.msra.mxu0 %v1172
      %1199 = vmatprep.subr.mxu0 0.0
      %1200 = vmatpush1.msra.mxu0 %v1173
      %1201 = vmatprep.subr.mxu0 0.0
      %1202 = vmatpush1.msra.mxu0 %v1174
      %1203 = vmatprep.subr.mxu0 0.0
      %1204 = vmatpush1.msra.mxu0 %v1175
      %1205 = vmatprep.subr.mxu0 0.0
      %1206 = vmatpush1.msra.mxu0 %v1176
      %1207 = vmatprep.subr.mxu0 0.0
      %1208 = vmatpush1.msra.mxu0 %v1177
      %1209 = vmatprep.subr.mxu0 0.0
      %1210 = vmatpush1.msra.mxu0 %v1178
      %1211 = vmatprep.subr.mxu0 0.0
      %1212 = vmatpush1.msra.mxu0 0.0
      %1213 = vmatprep.subr.mxu0 0.0
      %1214 = vmatpush1.msra.mxu0 0.0
      %1215 = vmatprep.subr.mxu0 0.0
      %1216 = vmatpush1.msra.mxu0 0.0
      %1217 = vmatprep.subr.mxu0 0.0
      %1218 = vmatpush1.msra.mxu0 0.0
      %1219 = vmatprep.subr.mxu0 0.0
      %1220 = vmatpush1.msra.mxu0 0.0
      %1221 = vmatprep.subr.mxu0 0.0
      %1222 = vmatpush1.msra.mxu0 0.0
      %1223 = vmatprep.subr.mxu0 0.0
      %1224 = vmatpush1.msra.mxu0 0.0
      %1225 = vmatprep.subr.mxu0 0.0
      %1226 = vmatpush1.msra.mxu0 0.0
      %1227 = vmatprep.subr.mxu0 0.0
      %1228 = vmatpush1.msra.mxu0 0.0
      %1229 = vmatprep.subr.mxu0 0.0
      %1230 = vmatpush1.msra.mxu0 0.0
      %1231 = vmatprep.subr.mxu0 0.0
      %1232 = vmatpush1.msra.mxu0 0.0
      %1233 = vmatprep.subr.mxu0 0.0
      %1234 = vmatpush1.msra.mxu0 0.0
      %1235 = vmatprep.subr.mxu0 0.0
      %1236 = vmatpush1.msra.mxu0 0.0
      %1237 = vmatprep.subr.mxu0 0.0
      %1238 = vmatpush1.msra.mxu0 0.0
      %1239 = vmatprep.subr.mxu0 0.0
      %1240 = vmatpush1.msra.mxu0 0.0
      %1241 = vmatprep.subr.mxu0 0.0
      %1242 = vmatpush1.msra.mxu0 0.0
      %1243 = vmatprep.mubr.f32.mxu0 0.0
      %1244 = vmatmul.mubr.f32.gmra.mrb[0].mxu0 %v1035
      %v1245 = vpop.f32.mrb[0].mxu0
      %v1246 = vadd.f32 0.0, %v1245
      %v1247 = vpop.f32.mrb[0].mxu0
      %1248 = vmatprep.mubr.f32.mxu0 0.0
      %1249 = vmatmul.mubr.f32.gmra.mrb[0].mxu0 %v1037
      %v1250 = vpop.f32.mrb[0].mxu0
      %v1251 = vadd.f32 0.0, %v1250
      %v1252 = vpop.f32.mrb[0].mxu0
      %1253 = vmatprep.mubr.f32.mxu0 0.0
      %1254 = vmatmul.mubr.f32.gmra.mrb[0].mxu0 %v1039
      %v1255 = vpop.f32.mrb[0].mxu0
      %v1256 = vadd.f32 0.0, %v1255
      %v1257 = vpop.f32.mrb[0].mxu0
      %1258 = vmatprep.mubr.f32.mxu0 0.0
      %1259 = vmatmul.mubr.f32.gmra.mrb[0].mxu0 %v1041
      %v1260 = vpop.f32.mrb[0].mxu0
      %v1261 = vadd.f32 0.0, %v1260
      %v1262 = vpop.f32.mrb[0].mxu0
      %1263 = vmatprep.mubr.f32.mxu0 0.0
      %1264 = vmatmul.mubr.f32.gmra.mrb[0].mxu0 %v1043
      %v1265 = vpop.f32.mrb[0].mxu0
      %v1266 = vadd.f32 0.0, %v1265
      %v1267 = vpop.f32.mrb[0].mxu0
      %1268 = vmatprep.mubr.f32.mxu0 0.0
      %1269 = vmatmul.mubr.f32.gmra.mrb[0].mxu0 %v1045
      %v1270 = vpop.f32.mrb[0].mxu0
      %v1271 = vadd.f32 0.0, %v1270
      %v1272 = vpop.f32.mrb[0].mxu0
      %1273 = vmatprep.mubr.f32.mxu0 0.0
      %1274 = vmatmul.mubr.f32.gmra.mrb[0].mxu0 %v1047
      %v1275 = vpop.f32.mrb[0].mxu0
      %v1276 = vadd.f32 0.0, %v1275
      %v1277 = vpop.f32.mrb[0].mxu0
      %1278 = vmatprep.mubr.f32.mxu0 0.0
      %1279 = vmatmul.mubr.f32.gmra.mrb[0].mxu0 %v1049
      %v1280 = vpop.f32.mrb[0].mxu0
      %v1281 = vadd.f32 0.0, %v1280
      %v1282 = vpop.f32.mrb[0].mxu0
      %1283 = vmatprep.mubr.f32.mxu0 0.0
      %1284 = vmatmul.mubr.f32.gmra.mrb[0].mxu0 %v1051
      %v1285 = vpop.f32.mrb[0].mxu0
      %v1286 = vadd.f32 0.0, %v1285
      %v1287 = vpop.f32.mrb[0].mxu0
      %1288 = vmatprep.mubr.f32.mxu0 0.0
      %1289 = vmatmul.mubr.f32.gmra.mrb[0].mxu0 %v1053
      %v1290 = vpop.f32.mrb[0].mxu0
      %v1291 = vadd.f32 0.0, %v1290
      %v1292 = vpop.f32.mrb[0].mxu0
      %1293 = vmatprep.mubr.f32.mxu0 0.0
      %1294 = vmatmul.mubr.f32.gmra.mrb[0].mxu0 %v1055
      %v1295 = vpop.f32.mrb[0].mxu0
      %v1296 = vadd.f32 0.0, %v1295
      %v1297 = vpop.f32.mrb[0].mxu0
      %1298 = vmatprep.mubr.f32.mxu0 0.0
      %1299 = vmatmul.mubr.f32.gmra.mrb[0].mxu0 %v1057
      %v1300 = vpop.f32.mrb[0].mxu0
      %v1301 = vadd.f32 0.0, %v1300
      %v1302 = vpop.f32.mrb[0].mxu0
      %1303 = vmatprep.mubr.f32.mxu0 0.0
      %1304 = vmatmul.mubr.f32.gmra.mrb[0].mxu0 %v1059
      %v1305 = vpop.f32.mrb[0].mxu0
      %v1306 = vadd.f32 0.0, %v1305
      %v1307 = vpop.f32.mrb[0].mxu0
      %1308 = vmatprep.mubr.f32.mxu0 0.0
      %1309 = vmatmul.mubr.f32.gmra.mrb[0].mxu0 %v1061
      %v1310 = vpop.f32.mrb[0].mxu0
      %v1311 = vadd.f32 0.0, %v1310
      %v1312 = vpop.f32.mrb[0].mxu0
      %1313 = vmatprep.mubr.f32.mxu0 0.0
      %1314 = vmatmul.mubr.f32.gmra.mrb[0].mxu0 %v1063
      %v1315 = vpop.f32.mrb[0].mxu0
      %v1316 = vadd.f32 0.0, %v1315
      %v1317 = vpop.f32.mrb[0].mxu0
      %1318 = vmatprep.mubr.f32.mxu0 0.0
      %1319 = vmatmul.mubr.f32.gmra.mrb[0].mxu0 %v1065
      %v1320 = vpop.f32.mrb[0].mxu0
      %v1321 = vadd.f32 0.0, %v1320
      %v1322 = vpop.f32.mrb[0].mxu0
      %1323 = vdwg.mxu0
      %v1324 = vld [vmem:[#allocation2] sm:$0xff]
      %v1325 = vld [vmem:[#allocation2 + $0x8] sm:$0xff]
      %v1326 = vld [vmem:[#allocation2 + $0x10] sm:$0xff]
      %v1327 = vld [vmem:[#allocation2 + $0x18] sm:$0xff]
      %v1328 = vld [vmem:[#allocation2 + $0x20] sm:$0xff]
      %v1329 = vld [vmem:[#allocation2 + $0x28] sm:$0xff]
      %v1330 = vld [vmem:[#allocation2 + $0x30] sm:$0xff]
      %v1331 = vld [vmem:[#allocation2 + $0x38] sm:$0xff]
      %v1332 = vld [vmem:[#allocation2 + $0x40] sm:$0xff]
      %v1333 = vld [vmem:[#allocation2 + $0x48] sm:$0xff]
      %v1334 = vld [vmem:[#allocation2 + $0x50] sm:$0xff]
      %v1335 = vld [vmem:[#allocation2 + $0x58] sm:$0xff]
      %v1336 = vld [vmem:[#allocation2 + $0x60] sm:$0xff]
      %v1337 = vld [vmem:[#allocation2 + $0x68] sm:$0xff]
      %v1338 = vld [vmem:[#allocation2 + $0x70] sm:$0xff]
      %v1339 = vld [vmem:[#allocation2 + $0x78] sm:$0xff]
      %1341 = vset.pattern.permute.xlu0 0
      %1342 = vperm.xlu0 %1341, %v907
      %v1343 = vpop.permute.xlu0 %1342
      %1346 = vset.pattern.permute.xlu0 0
      %1347 = vperm.xlu0 %1346, %v909
      %v1348 = vpop.permute.xlu0 %1347
      %1351 = vset.pattern.permute.xlu0 0
      %1352 = vperm.xlu0 %1351, %v911
      %v1353 = vpop.permute.xlu0 %1352
      %1356 = vset.pattern.permute.xlu0 0
      %1357 = vperm.xlu0 %1356, %v913
      %v1358 = vpop.permute.xlu0 %1357
      %1361 = vset.pattern.permute.xlu0 0
      %1362 = vperm.xlu0 %1361, %v915
      %v1363 = vpop.permute.xlu0 %1362
      %1366 = vset.pattern.permute.xlu0 0
      %1367 = vperm.xlu0 %1366, %v917
      %v1368 = vpop.permute.xlu0 %1367
      %1371 = vset.pattern.permute.xlu0 0
      %1372 = vperm.xlu0 %1371, %v919
      %v1373 = vpop.permute.xlu0 %1372
      %1376 = vset.pattern.permute.xlu0 0
      %1377 = vperm.xlu0 %1376, %v921
      %v1378 = vpop.permute.xlu0 %1377
      %1381 = vset.pattern.permute.xlu0 0
      %1382 = vperm.xlu0 %1381, %v923
      %v1383 = vpop.permute.xlu0 %1382
      %1386 = vset.pattern.permute.xlu0 0
      %1387 = vperm.xlu0 %1386, %v925
      %v1388 = vpop.permute.xlu0 %1387
      %1391 = vset.pattern.permute.xlu0 0
      %1392 = vperm.xlu0 %1391, %v927
      %v1393 = vpop.permute.xlu0 %1392
      %1396 = vset.pattern.permute.xlu0 0
      %1397 = vperm.xlu0 %1396, %v929
      %v1398 = vpop.permute.xlu0 %1397
      %1401 = vset.pattern.permute.xlu0 0
      %1402 = vperm.xlu0 %1401, %v931
      %v1403 = vpop.permute.xlu0 %1402
      %1406 = vset.pattern.permute.xlu0 0
      %1407 = vperm.xlu0 %1406, %v933
      %v1408 = vpop.permute.xlu0 %1407
      %1411 = vset.pattern.permute.xlu0 0
      %1412 = vperm.xlu0 %1411, %v935
      %v1413 = vpop.permute.xlu0 %1412
      %1416 = vset.pattern.permute.xlu0 0
      %1417 = vperm.xlu0 %1416, %v937
      %v1418 = vpop.permute.xlu0 %1417
      %v1420 = vmul.f32 %v1343, %v1324
      %v1421 = vmul.f32 %v1348, %v1325
      %v1422 = vmul.f32 %v1353, %v1326
      %v1423 = vmul.f32 %v1358, %v1327
      %v1424 = vmul.f32 %v1363, %v1328
      %v1425 = vmul.f32 %v1368, %v1329
      %v1426 = vmul.f32 %v1373, %v1330
      %v1427 = vmul.f32 %v1378, %v1331
      %v1428 = vmul.f32 %v1383, %v1332
      %v1429 = vmul.f32 %v1388, %v1333
      %v1430 = vmul.f32 %v1393, %v1334
      %v1431 = vmul.f32 %v1398, %v1335
      %v1432 = vmul.f32 %v1403, %v1336
      %v1433 = vmul.f32 %v1408, %v1337
      %v1434 = vmul.f32 %v1413, %v1338
      %v1435 = vmul.f32 %v1418, %v1339
      %v1436 = vadd.f32 %v1420, %v1246
      %v1437 = vadd.f32 %v1421, %v1251
      %v1438 = vadd.f32 %v1422, %v1256
      %v1439 = vadd.f32 %v1423, %v1261
      %v1440 = vadd.f32 %v1424, %v1266
      %v1441 = vadd.f32 %v1425, %v1271
      %v1442 = vadd.f32 %v1426, %v1276
      %v1443 = vadd.f32 %v1427, %v1281
      %v1444 = vadd.f32 %v1428, %v1286
      %v1445 = vadd.f32 %v1429, %v1291
      %v1446 = vadd.f32 %v1430, %v1296
      %v1447 = vadd.f32 %v1431, %v1301
      %v1448 = vadd.f32 %v1432, %v1306
      %v1449 = vadd.f32 %v1433, %v1311
      %v1450 = vadd.f32 %v1434, %v1316
      %v1451 = vadd.f32 %v1435, %v1321
      %1452 = vst.msk [vmem:[#allocation2] sm:$0xff] %vm584, %v1436
      %1453 = vst.msk [vmem:[#allocation2 + $0x8] sm:$0xff] %vm584, %v1437
      %1454 = vst.msk [vmem:[#allocation2 + $0x10] sm:$0xff] %vm584, %v1438
      %1455 = vst.msk [vmem:[#allocation2 + $0x18] sm:$0xff] %vm584, %v1439
      %1456 = vst.msk [vmem:[#allocation2 + $0x20] sm:$0xff] %vm584, %v1440
      %1457 = vst.msk [vmem:[#allocation2 + $0x28] sm:$0xff] %vm584, %v1441
      %1458 = vst.msk [vmem:[#allocation2 + $0x30] sm:$0xff] %vm584, %v1442
      %1459 = vst.msk [vmem:[#allocation2 + $0x38] sm:$0xff] %vm584, %v1443
      %1460 = vst.msk [vmem:[#allocation2 + $0x40] sm:$0xff] %vm584, %v1444
      %1461 = vst.msk [vmem:[#allocation2 + $0x48] sm:$0xff] %vm584, %v1445
      %1462 = vst.msk [vmem:[#allocation2 + $0x50] sm:$0xff] %vm584, %v1446
      %1463 = vst.msk [vmem:[#allocation2 + $0x58] sm:$0xff] %vm584, %v1447
      %1464 = vst.msk [vmem:[#allocation2 + $0x60] sm:$0xff] %vm584, %v1448
      %1465 = vst.msk [vmem:[#allocation2 + $0x68] sm:$0xff] %vm584, %v1449
      %1466 = vst.msk [vmem:[#allocation2 + $0x70] sm:$0xff] %vm584, %v1450
      %1467 = vst.msk [vmem:[#allocation2 + $0x78] sm:$0xff] %vm584, %v1451
      %1468 = vst.msk [vmem:[#allocation3] sm:$0xff] %vm1146, %v874
      %1469 = vst.msk [vmem:[#allocation3 + $0x8] sm:$0xff] %vm1146, %v875
      %1470 = vst.msk [vmem:[#allocation3 + $0x10] sm:$0xff] %vm1146, %v876
      %1471 = vst.msk [vmem:[#allocation3 + $0x18] sm:$0xff] %vm1146, %v877
      %1472 = vst.msk [vmem:[#allocation3 + $0x20] sm:$0xff] %vm1146, %v878
      %1473 = vst.msk [vmem:[#allocation3 + $0x28] sm:$0xff] %vm1146, %v879
      %1474 = vst.msk [vmem:[#allocation3 + $0x30] sm:$0xff] %vm1146, %v880
      %1475 = vst.msk [vmem:[#allocation3 + $0x38] sm:$0xff] %vm1146, %v881
      %1476 = vst.msk [vmem:[#allocation3 + $0x40] sm:$0xff] %vm1146, %v882
      %1477 = vst.msk [vmem:[#allocation3 + $0x48] sm:$0xff] %vm1146, %v883
      %1478 = vst.msk [vmem:[#allocation3 + $0x50] sm:$0xff] %vm1146, %v884
      %1479 = vst.msk [vmem:[#allocation3 + $0x58] sm:$0xff] %vm1146, %v885
      %1480 = vst.msk [vmem:[#allocation3 + $0x60] sm:$0xff] %vm1146, %v886
      %1481 = vst.msk [vmem:[#allocation3 + $0x68] sm:$0xff] %vm1146, %v887
      %1482 = vst.msk [vmem:[#allocation3 + $0x70] sm:$0xff] %vm1146, %v888
      %1483 = vst.msk [vmem:[#allocation3 + $0x78] sm:$0xff] %vm1146, %v889
      %s1484 = scalar_lea.vmem [#allocation5], 128
      %v1485 = vld [vmem:[%s1484] sm:$0xff]
      %v1486 = vld [vmem:[%s1484 + $0x8] sm:$0xff]
      %v1487 = vld [vmem:[%s1484 + $0x10] sm:$0xff]
      %v1488 = vld [vmem:[%s1484 + $0x18] sm:$0xff]
      %v1489 = vld [vmem:[%s1484 + $0x20] sm:$0xff]
      %v1490 = vld [vmem:[%s1484 + $0x28] sm:$0xff]
      %v1491 = vld [vmem:[%s1484 + $0x30] sm:$0xff]
      %v1492 = vld [vmem:[%s1484 + $0x38] sm:$0xff]
      %v1493 = vld [vmem:[%s1484 + $0x40] sm:$0xff]
      %v1494 = vld [vmem:[%s1484 + $0x48] sm:$0xff]
      %v1495 = vld [vmem:[%s1484 + $0x50] sm:$0xff]
      %v1496 = vld [vmem:[%s1484 + $0x58] sm:$0xff]
      %v1497 = vld [vmem:[%s1484 + $0x60] sm:$0xff]
      %v1498 = vld [vmem:[%s1484 + $0x68] sm:$0xff]
      %v1499 = vld [vmem:[%s1484 + $0x70] sm:$0xff]
      %v1500 = vld [vmem:[%s1484 + $0x78] sm:$0xff]
      %s1501 = scalar_lea.vmem %s324, 128
      %v1502 = vld [vmem:[%s1501] sm:$0xff]
      %v1503 = vld [vmem:[%s1501 + $0x8] sm:$0xff]
      %v1504 = vld [vmem:[%s1501 + $0x10] sm:$0xff]
      %v1505 = vld [vmem:[%s1501 + $0x18] sm:$0xff]
      %v1506 = vld [vmem:[%s1501 + $0x20] sm:$0xff]
      %v1507 = vld [vmem:[%s1501 + $0x28] sm:$0xff]
      %v1508 = vld [vmem:[%s1501 + $0x30] sm:$0xff]
      %v1509 = vld [vmem:[%s1501 + $0x38] sm:$0xff]
      %v1510 = vld [vmem:[%s1501 + $0x40] sm:$0xff]
      %v1511 = vld [vmem:[%s1501 + $0x48] sm:$0xff]
      %v1512 = vld [vmem:[%s1501 + $0x50] sm:$0xff]
      %v1513 = vld [vmem:[%s1501 + $0x58] sm:$0xff]
      %v1514 = vld [vmem:[%s1501 + $0x60] sm:$0xff]
      %v1515 = vld [vmem:[%s1501 + $0x68] sm:$0xff]
      %v1516 = vld [vmem:[%s1501 + $0x70] sm:$0xff]
      %v1517 = vld [vmem:[%s1501 + $0x78] sm:$0xff]
      %v1519 = vsel %vm584, %v1485, 0
      %v1522 = vsel %vm584, %v1486, 0
      %v1525 = vsel %vm584, %v1487, 0
      %v1528 = vsel %vm584, %v1488, 0
      %v1531 = vsel %vm584, %v1489, 0
      %v1534 = vsel %vm584, %v1490, 0
      %v1537 = vsel %vm584, %v1491, 0
      %v1540 = vsel %vm584, %v1492, 0
      %v1543 = vsel %vm584, %v1493, 0
      %v1546 = vsel %vm584, %v1494, 0
      %v1549 = vsel %vm584, %v1495, 0
      %v1552 = vsel %vm584, %v1496, 0
      %v1555 = vsel %vm584, %v1497, 0
      %v1558 = vsel %vm584, %v1498, 0
      %v1561 = vsel %vm584, %v1499, 0
      %v1564 = vsel %vm584, %v1500, 0
      %v1567 = vsel %vm584, %v1502, 0
      %v1570 = vsel %vm584, %v1503, 0
      %v1573 = vsel %vm584, %v1504, 0
      %v1576 = vsel %vm584, %v1505, 0
      %v1579 = vsel %vm584, %v1506, 0
      %v1582 = vsel %vm584, %v1507, 0
      %v1585 = vsel %vm584, %v1508, 0
      %v1588 = vsel %vm584, %v1509, 0
      %v1591 = vsel %vm584, %v1510, 0
      %v1594 = vsel %vm584, %v1511, 0
      %v1597 = vsel %vm584, %v1512, 0
      %v1600 = vsel %vm584, %v1513, 0
      %v1603 = vsel %vm584, %v1514, 0
      %v1606 = vsel %vm584, %v1515, 0
      %v1609 = vsel %vm584, %v1516, 0
      %v1612 = vsel %vm584, %v1517, 0
      %1614 = vmatprep.subr.mxu0 0.0
      %1615 = vmatpush1.xpose.msra.mxu0 %v1567
      %1616 = vmatprep.subr.mxu0 0.0
      %1617 = vmatpush1.xpose.msra.mxu0 %v1570
      %1618 = vmatprep.subr.mxu0 0.0
      %1619 = vmatpush1.xpose.msra.mxu0 %v1573
      %1620 = vmatprep.subr.mxu0 0.0
      %1621 = vmatpush1.xpose.msra.mxu0 %v1576
      %1622 = vmatprep.subr.mxu0 0.0
      %1623 = vmatpush1.xpose.msra.mxu0 %v1579
      %1624 = vmatprep.subr.mxu0 0.0
      %1625 = vmatpush1.xpose.msra.mxu0 %v1582
      %1626 = vmatprep.subr.mxu0 0.0
      %1627 = vmatpush1.xpose.msra.mxu0 %v1585
      %1628 = vmatprep.subr.mxu0 0.0
      %1629 = vmatpush1.xpose.msra.mxu0 %v1588
      %1630 = vmatprep.subr.mxu0 0.0
      %1631 = vmatpush1.xpose.msra.mxu0 %v1591
      %1632 = vmatprep.subr.mxu0 0.0
      %1633 = vmatpush1.xpose.msra.mxu0 %v1594
      %1634 = vmatprep.subr.mxu0 0.0
      %1635 = vmatpush1.xpose.msra.mxu0 %v1597
      %1636 = vmatprep.subr.mxu0 0.0
      %1637 = vmatpush1.xpose.msra.mxu0 %v1600
      %1638 = vmatprep.subr.mxu0 0.0
      %1639 = vmatpush1.xpose.msra.mxu0 %v1603
      %1640 = vmatprep.subr.mxu0 0.0
      %1641 = vmatpush1.xpose.msra.mxu0 %v1606
      %1642 = vmatprep.subr.mxu0 0.0
      %1643 = vmatpush1.xpose.msra.mxu0 %v1609
      %1644 = vmatprep.subr.mxu0 0.0
      %1645 = vmatpush1.xpose.msra.mxu0 %v1612
      %1646 = vmatprep.subr.mxu0 0.0
      %1647 = vmatpush1.xpose.msra.mxu0 0.0
      %1648 = vmatprep.subr.mxu0 0.0
      %1649 = vmatpush1.xpose.msra.mxu0 0.0
      %1650 = vmatprep.subr.mxu0 0.0
      %1651 = vmatpush1.xpose.msra.mxu0 0.0
      %1652 = vmatprep.subr.mxu0 0.0
      %1653 = vmatpush1.xpose.msra.mxu0 0.0
      %1654 = vmatprep.subr.mxu0 0.0
      %1655 = vmatpush1.xpose.msra.mxu0 0.0
      %1656 = vmatprep.subr.mxu0 0.0
      %1657 = vmatpush1.xpose.msra.mxu0 0.0
      %1658 = vmatprep.subr.mxu0 0.0
      %1659 = vmatpush1.xpose.msra.mxu0 0.0
      %1660 = vmatprep.subr.mxu0 0.0
      %1661 = vmatpush1.xpose.msra.mxu0 0.0
      %1662 = vmatprep.subr.mxu0 0.0
      %1663 = vmatpush1.xpose.msra.mxu0 0.0
      %1664 = vmatprep.subr.mxu0 0.0
      %1665 = vmatpush1.xpose.msra.mxu0 0.0
      %1666 = vmatprep.subr.mxu0 0.0
      %1667 = vmatpush1.xpose.msra.mxu0 0.0
      %1668 = vmatprep.subr.mxu0 0.0
      %1669 = vmatpush1.xpose.msra.mxu0 0.0
      %1670 = vmatprep.subr.mxu0 0.0
      %1671 = vmatpush1.xpose.msra.mxu0 0.0
      %1672 = vmatprep.subr.mxu0 0.0
      %1673 = vmatpush1.xpose.msra.mxu0 0.0
      %1674 = vmatprep.subr.mxu0 0.0
      %1675 = vmatpush1.xpose.msra.mxu0 0.0
      %1676 = vmatprep.subr.mxu0 0.0
      %1677 = vmatpush1.xpose.msra.mxu0 0.0
      %1678 = vmatprep.mubr.f32.mxu0 0.0
      %1679 = vmatmul.mubr.f32.gmra.mrb[0].mxu0 %v1519
      %v1680 = vpop.f32.mrb[0].mxu0
      %v1681 = vadd.f32 %v582, %v1680
      %v1682 = vpop.f32.mrb[0].mxu0
      %1683 = vmatprep.mubr.f32.mxu0 0.0
      %1684 = vmatmul.mubr.f32.gmra.mrb[0].mxu0 %v1522
      %v1685 = vpop.f32.mrb[0].mxu0
      %v1686 = vadd.f32 %v582, %v1685
      %v1687 = vpop.f32.mrb[0].mxu0
      %1688 = vmatprep.mubr.f32.mxu0 0.0
      %1689 = vmatmul.mubr.f32.gmra.mrb[0].mxu0 %v1525
      %v1690 = vpop.f32.mrb[0].mxu0
      %v1691 = vadd.f32 %v582, %v1690
      %v1692 = vpop.f32.mrb[0].mxu0
      %1693 = vmatprep.mubr.f32.mxu0 0.0
      %1694 = vmatmul.mubr.f32.gmra.mrb[0].mxu0 %v1528
      %v1695 = vpop.f32.mrb[0].mxu0
      %v1696 = vadd.f32 %v582, %v1695
      %v1697 = vpop.f32.mrb[0].mxu0
      %1698 = vmatprep.mubr.f32.mxu0 0.0
      %1699 = vmatmul.mubr.f32.gmra.mrb[0].mxu0 %v1531
      %v1700 = vpop.f32.mrb[0].mxu0
      %v1701 = vadd.f32 %v582, %v1700
      %v1702 = vpop.f32.mrb[0].mxu0
      %1703 = vmatprep.mubr.f32.mxu0 0.0
      %1704 = vmatmul.mubr.f32.gmra.mrb[0].mxu0 %v1534
      %v1705 = vpop.f32.mrb[0].mxu0
      %v1706 = vadd.f32 %v582, %v1705
      %v1707 = vpop.f32.mrb[0].mxu0
      %1708 = vmatprep.mubr.f32.mxu0 0.0
      %1709 = vmatmul.mubr.f32.gmra.mrb[0].mxu0 %v1537
      %v1710 = vpop.f32.mrb[0].mxu0
      %v1711 = vadd.f32 %v582, %v1710
      %v1712 = vpop.f32.mrb[0].mxu0
      %1713 = vmatprep.mubr.f32.mxu0 0.0
      %1714 = vmatmul.mubr.f32.gmra.mrb[0].mxu0 %v1540
      %v1715 = vpop.f32.mrb[0].mxu0
      %v1716 = vadd.f32 %v582, %v1715
      %v1717 = vpop.f32.mrb[0].mxu0
      %1718 = vmatprep.mubr.f32.mxu0 0.0
      %1719 = vmatmul.mubr.f32.gmra.mrb[0].mxu0 %v1543
      %v1720 = vpop.f32.mrb[0].mxu0
      %v1721 = vadd.f32 %v582, %v1720
      %v1722 = vpop.f32.mrb[0].mxu0
      %1723 = vmatprep.mubr.f32.mxu0 0.0
      %1724 = vmatmul.mubr.f32.gmra.mrb[0].mxu0 %v1546
      %v1725 = vpop.f32.mrb[0].mxu0
      %v1726 = vadd.f32 %v582, %v1725
      %v1727 = vpop.f32.mrb[0].mxu0
      %1728 = vmatprep.mubr.f32.mxu0 0.0
      %1729 = vmatmul.mubr.f32.gmra.mrb[0].mxu0 %v1549
      %v1730 = vpop.f32.mrb[0].mxu0
      %v1731 = vadd.f32 %v582, %v1730
      %v1732 = vpop.f32.mrb[0].mxu0
      %1733 = vmatprep.mubr.f32.mxu0 0.0
      %1734 = vmatmul.mubr.f32.gmra.mrb[0].mxu0 %v1552
      %v1735 = vpop.f32.mrb[0].mxu0
      %v1736 = vadd.f32 %v582, %v1735
      %v1737 = vpop.f32.mrb[0].mxu0
      %1738 = vmatprep.mubr.f32.mxu0 0.0
      %1739 = vmatmul.mubr.f32.gmra.mrb[0].mxu0 %v1555
      %v1740 = vpop.f32.mrb[0].mxu0
      %v1741 = vadd.f32 %v582, %v1740
      %v1742 = vpop.f32.mrb[0].mxu0
      %1743 = vmatprep.mubr.f32.mxu0 0.0
      %1744 = vmatmul.mubr.f32.gmra.mrb[0].mxu0 %v1558
      %v1745 = vpop.f32.mrb[0].mxu0
      %v1746 = vadd.f32 %v582, %v1745
      %v1747 = vpop.f32.mrb[0].mxu0
      %1748 = vmatprep.mubr.f32.mxu0 0.0
      %1749 = vmatmul.mubr.f32.gmra.mrb[0].mxu0 %v1561
      %v1750 = vpop.f32.mrb[0].mxu0
      %v1751 = vadd.f32 %v582, %v1750
      %v1752 = vpop.f32.mrb[0].mxu0
      %1753 = vmatprep.mubr.f32.mxu0 0.0
      %1754 = vmatmul.mubr.f32.gmra.mrb[0].mxu0 %v1564
      %v1755 = vpop.f32.mrb[0].mxu0
      %v1756 = vadd.f32 %v582, %v1755
      %v1757 = vpop.f32.mrb[0].mxu0
      %1758 = vdwg.mxu0
      %s1759 = scalar_lea.vmem [#allocation3], 128
      %v1760 = vld [vmem:[%s1759] sm:$0xff]
      %v1761 = vld [vmem:[%s1759 + $0x8] sm:$0xff]
      %v1762 = vld [vmem:[%s1759 + $0x10] sm:$0xff]
      %v1763 = vld [vmem:[%s1759 + $0x18] sm:$0xff]
      %v1764 = vld [vmem:[%s1759 + $0x20] sm:$0xff]
      %v1765 = vld [vmem:[%s1759 + $0x28] sm:$0xff]
      %v1766 = vld [vmem:[%s1759 + $0x30] sm:$0xff]
      %v1767 = vld [vmem:[%s1759 + $0x38] sm:$0xff]
      %v1768 = vld [vmem:[%s1759 + $0x40] sm:$0xff]
      %v1769 = vld [vmem:[%s1759 + $0x48] sm:$0xff]
      %v1770 = vld [vmem:[%s1759 + $0x50] sm:$0xff]
      %v1771 = vld [vmem:[%s1759 + $0x58] sm:$0xff]
      %v1772 = vld [vmem:[%s1759 + $0x60] sm:$0xff]
      %v1773 = vld [vmem:[%s1759 + $0x68] sm:$0xff]
      %v1774 = vld [vmem:[%s1759 + $0x70] sm:$0xff]
      %v1775 = vld [vmem:[%s1759 + $0x78] sm:$0xff]
      %1776 = vmax.xlane.f32.xlu0 %v1681
      %v1777 = vpop.xlane.xlu0 %1776
      %1778 = vmax.xlane.f32.xlu0 %v1686
      %v1779 = vpop.xlane.xlu0 %1778
      %1780 = vmax.xlane.f32.xlu0 %v1691
      %v1781 = vpop.xlane.xlu0 %1780
      %1782 = vmax.xlane.f32.xlu0 %v1696
      %v1783 = vpop.xlane.xlu0 %1782
      %1784 = vmax.xlane.f32.xlu0 %v1701
      %v1785 = vpop.xlane.xlu0 %1784
      %1786 = vmax.xlane.f32.xlu0 %v1706
      %v1787 = vpop.xlane.xlu0 %1786
      %1788 = vmax.xlane.f32.xlu0 %v1711
      %v1789 = vpop.xlane.xlu0 %1788
      %1790 = vmax.xlane.f32.xlu0 %v1716
      %v1791 = vpop.xlane.xlu0 %1790
      %1792 = vmax.xlane.f32.xlu0 %v1721
      %v1793 = vpop.xlane.xlu0 %1792
      %1794 = vmax.xlane.f32.xlu0 %v1726
      %v1795 = vpop.xlane.xlu0 %1794
      %1796 = vmax.xlane.f32.xlu0 %v1731
      %v1797 = vpop.xlane.xlu0 %1796
      %1798 = vmax.xlane.f32.xlu0 %v1736
      %v1799 = vpop.xlane.xlu0 %1798
      %1800 = vmax.xlane.f32.xlu0 %v1741
      %v1801 = vpop.xlane.xlu0 %1800
      %1802 = vmax.xlane.f32.xlu0 %v1746
      %v1803 = vpop.xlane.xlu0 %1802
      %1804 = vmax.xlane.f32.xlu0 %v1751
      %v1805 = vpop.xlane.xlu0 %1804
      %1806 = vmax.xlane.f32.xlu0 %v1756
      %v1807 = vpop.xlane.xlu0 %1806
      %v1808 = vmax.f32 %v1760, %v1777
      %v1809 = vmax.f32 %v1761, %v1779
      %v1810 = vmax.f32 %v1762, %v1781
      %v1811 = vmax.f32 %v1763, %v1783
      %v1812 = vmax.f32 %v1764, %v1785
      %v1813 = vmax.f32 %v1765, %v1787
      %v1814 = vmax.f32 %v1766, %v1789
      %v1815 = vmax.f32 %v1767, %v1791
      %v1816 = vmax.f32 %v1768, %v1793
      %v1817 = vmax.f32 %v1769, %v1795
      %v1818 = vmax.f32 %v1770, %v1797
      %v1819 = vmax.f32 %v1771, %v1799
      %v1820 = vmax.f32 %v1772, %v1801
      %v1821 = vmax.f32 %v1773, %v1803
      %v1822 = vmax.f32 %v1774, %v1805
      %v1823 = vmax.f32 %v1775, %v1807
      %v1824 = vsub.f32 %v1760, %v1808
      %v1825 = vsub.f32 %v1761, %v1809
      %v1826 = vsub.f32 %v1762, %v1810
      %v1827 = vsub.f32 %v1763, %v1811
      %v1828 = vsub.f32 %v1764, %v1812
      %v1829 = vsub.f32 %v1765, %v1813
      %v1830 = vsub.f32 %v1766, %v1814
      %v1831 = vsub.f32 %v1767, %v1815
      %v1832 = vsub.f32 %v1768, %v1816
      %v1833 = vsub.f32 %v1769, %v1817
      %v1834 = vsub.f32 %v1770, %v1818
      %v1835 = vsub.f32 %v1771, %v1819
      %v1836 = vsub.f32 %v1772, %v1820
      %v1837 = vsub.f32 %v1773, %v1821
      %v1838 = vsub.f32 %v1774, %v1822
      %v1839 = vsub.f32 %v1775, %v1823
      %v1840 = vmul.f32 %v1824, 1.442695
      %v1841 = vpow.pop %v1840
      %v1842 = vmul.f32 %v1825, 1.442695
      %v1843 = vpow.pop %v1842
      %v1844 = vmul.f32 %v1826, 1.442695
      %v1845 = vpow.pop %v1844
      %v1846 = vmul.f32 %v1827, 1.442695
      %v1847 = vpow.pop %v1846
      %v1848 = vmul.f32 %v1828, 1.442695
      %v1849 = vpow.pop %v1848
      %v1850 = vmul.f32 %v1829, 1.442695
      %v1851 = vpow.pop %v1850
      %v1852 = vmul.f32 %v1830, 1.442695
      %v1853 = vpow.pop %v1852
      %v1854 = vmul.f32 %v1831, 1.442695
      %v1855 = vpow.pop %v1854
      %v1856 = vmul.f32 %v1832, 1.442695
      %v1857 = vpow.pop %v1856
      %v1858 = vmul.f32 %v1833, 1.442695
      %v1859 = vpow.pop %v1858
      %v1860 = vmul.f32 %v1834, 1.442695
      %v1861 = vpow.pop %v1860
      %v1862 = vmul.f32 %v1835, 1.442695
      %v1863 = vpow.pop %v1862
      %v1864 = vmul.f32 %v1836, 1.442695
      %v1865 = vpow.pop %v1864
      %v1866 = vmul.f32 %v1837, 1.442695
      %v1867 = vpow.pop %v1866
      %v1868 = vmul.f32 %v1838, 1.442695
      %v1869 = vpow.pop %v1868
      %v1870 = vmul.f32 %v1839, 1.442695
      %v1871 = vpow.pop %v1870
      %1873 = vset.pattern.permute.xlu0 0
      %1874 = vperm.xlu0 %1873, %v1808
      %v1875 = vpop.permute.xlu0 %1874
      %1878 = vset.pattern.permute.xlu0 0
      %1879 = vperm.xlu0 %1878, %v1809
      %v1880 = vpop.permute.xlu0 %1879
      %1883 = vset.pattern.permute.xlu0 0
      %1884 = vperm.xlu0 %1883, %v1810
      %v1885 = vpop.permute.xlu0 %1884
      %1888 = vset.pattern.permute.xlu0 0
      %1889 = vperm.xlu0 %1888, %v1811
      %v1890 = vpop.permute.xlu0 %1889
      %1893 = vset.pattern.permute.xlu0 0
      %1894 = vperm.xlu0 %1893, %v1812
      %v1895 = vpop.permute.xlu0 %1894
      %1898 = vset.pattern.permute.xlu0 0
      %1899 = vperm.xlu0 %1898, %v1813
      %v1900 = vpop.permute.xlu0 %1899
      %1903 = vset.pattern.permute.xlu0 0
      %1904 = vperm.xlu0 %1903, %v1814
      %v1905 = vpop.permute.xlu0 %1904
      %1908 = vset.pattern.permute.xlu0 0
      %1909 = vperm.xlu0 %1908, %v1815
      %v1910 = vpop.permute.xlu0 %1909
      %1913 = vset.pattern.permute.xlu0 0
      %1914 = vperm.xlu0 %1913, %v1816
      %v1915 = vpop.permute.xlu0 %1914
      %1918 = vset.pattern.permute.xlu0 0
      %1919 = vperm.xlu0 %1918, %v1817
      %v1920 = vpop.permute.xlu0 %1919
      %1923 = vset.pattern.permute.xlu0 0
      %1924 = vperm.xlu0 %1923, %v1818
      %v1925 = vpop.permute.xlu0 %1924
      %1928 = vset.pattern.permute.xlu0 0
      %1929 = vperm.xlu0 %1928, %v1819
      %v1930 = vpop.permute.xlu0 %1929
      %1933 = vset.pattern.permute.xlu0 0
      %1934 = vperm.xlu0 %1933, %v1820
      %v1935 = vpop.permute.xlu0 %1934
      %1938 = vset.pattern.permute.xlu0 0
      %1939 = vperm.xlu0 %1938, %v1821
      %v1940 = vpop.permute.xlu0 %1939
      %1943 = vset.pattern.permute.xlu0 0
      %1944 = vperm.xlu0 %1943, %v1822
      %v1945 = vpop.permute.xlu0 %1944
      %1948 = vset.pattern.permute.xlu0 0
      %1949 = vperm.xlu0 %1948, %v1823
      %v1950 = vpop.permute.xlu0 %1949
      %v1952 = vsub.f32 %v1681, %v1875
      %v1953 = vsub.f32 %v1686, %v1880
      %v1954 = vsub.f32 %v1691, %v1885
      %v1955 = vsub.f32 %v1696, %v1890
      %v1956 = vsub.f32 %v1701, %v1895
      %v1957 = vsub.f32 %v1706, %v1900
      %v1958 = vsub.f32 %v1711, %v1905
      %v1959 = vsub.f32 %v1716, %v1910
      %v1960 = vsub.f32 %v1721, %v1915
      %v1961 = vsub.f32 %v1726, %v1920
      %v1962 = vsub.f32 %v1731, %v1925
      %v1963 = vsub.f32 %v1736, %v1930
      %v1964 = vsub.f32 %v1741, %v1935
      %v1965 = vsub.f32 %v1746, %v1940
      %v1966 = vsub.f32 %v1751, %v1945
      %v1967 = vsub.f32 %v1756, %v1950
      %v1968 = vmul.f32 %v1952, 1.442695
      %v1969 = vpow.pop %v1968
      %v1970 = vmul.f32 %v1953, 1.442695
      %v1971 = vpow.pop %v1970
      %v1972 = vmul.f32 %v1954, 1.442695
      %v1973 = vpow.pop %v1972
      %v1974 = vmul.f32 %v1955, 1.442695
      %v1975 = vpow.pop %v1974
      %v1976 = vmul.f32 %v1956, 1.442695
      %v1977 = vpow.pop %v1976
      %v1978 = vmul.f32 %v1957, 1.442695
      %v1979 = vpow.pop %v1978
      %v1980 = vmul.f32 %v1958, 1.442695
      %v1981 = vpow.pop %v1980
      %v1982 = vmul.f32 %v1959, 1.442695
      %v1983 = vpow.pop %v1982
      %v1984 = vmul.f32 %v1960, 1.442695
      %v1985 = vpow.pop %v1984
      %v1986 = vmul.f32 %v1961, 1.442695
      %v1987 = vpow.pop %v1986
      %v1988 = vmul.f32 %v1962, 1.442695
      %v1989 = vpow.pop %v1988
      %v1990 = vmul.f32 %v1963, 1.442695
      %v1991 = vpow.pop %v1990
      %v1992 = vmul.f32 %v1964, 1.442695
      %v1993 = vpow.pop %v1992
      %v1994 = vmul.f32 %v1965, 1.442695
      %v1995 = vpow.pop %v1994
      %v1996 = vmul.f32 %v1966, 1.442695
      %v1997 = vpow.pop %v1996
      %v1998 = vmul.f32 %v1967, 1.442695
      %v1999 = vpow.pop %v1998
      %s2000 = scalar_lea.vmem [#allocation4], 128
      %v2001 = vld [vmem:[%s2000] sm:$0xff]
      %v2002 = vld [vmem:[%s2000 + $0x8] sm:$0xff]
      %v2003 = vld [vmem:[%s2000 + $0x10] sm:$0xff]
      %v2004 = vld [vmem:[%s2000 + $0x18] sm:$0xff]
      %v2005 = vld [vmem:[%s2000 + $0x20] sm:$0xff]
      %v2006 = vld [vmem:[%s2000 + $0x28] sm:$0xff]
      %v2007 = vld [vmem:[%s2000 + $0x30] sm:$0xff]
      %v2008 = vld [vmem:[%s2000 + $0x38] sm:$0xff]
      %v2009 = vld [vmem:[%s2000 + $0x40] sm:$0xff]
      %v2010 = vld [vmem:[%s2000 + $0x48] sm:$0xff]
      %v2011 = vld [vmem:[%s2000 + $0x50] sm:$0xff]
      %v2012 = vld [vmem:[%s2000 + $0x58] sm:$0xff]
      %v2013 = vld [vmem:[%s2000 + $0x60] sm:$0xff]
      %v2014 = vld [vmem:[%s2000 + $0x68] sm:$0xff]
      %v2015 = vld [vmem:[%s2000 + $0x70] sm:$0xff]
      %v2016 = vld [vmem:[%s2000 + $0x78] sm:$0xff]
      %v2017 = vmul.f32 %v1841, %v2001
      %v2018 = vmul.f32 %v1843, %v2002
      %v2019 = vmul.f32 %v1845, %v2003
      %v2020 = vmul.f32 %v1847, %v2004
      %v2021 = vmul.f32 %v1849, %v2005
      %v2022 = vmul.f32 %v1851, %v2006
      %v2023 = vmul.f32 %v1853, %v2007
      %v2024 = vmul.f32 %v1855, %v2008
      %v2025 = vmul.f32 %v1857, %v2009
      %v2026 = vmul.f32 %v1859, %v2010
      %v2027 = vmul.f32 %v1861, %v2011
      %v2028 = vmul.f32 %v1863, %v2012
      %v2029 = vmul.f32 %v1865, %v2013
      %v2030 = vmul.f32 %v1867, %v2014
      %v2031 = vmul.f32 %v1869, %v2015
      %v2032 = vmul.f32 %v1871, %v2016
      %2033 = vadd.xlane.f32.xlu0 %v1969
      %v2034 = vpop.xlane.xlu0 %2033
      %2035 = vadd.xlane.f32.xlu0 %v1971
      %v2036 = vpop.xlane.xlu0 %2035
      %2037 = vadd.xlane.f32.xlu0 %v1973
      %v2038 = vpop.xlane.xlu0 %2037
      %2039 = vadd.xlane.f32.xlu0 %v1975
      %v2040 = vpop.xlane.xlu0 %2039
      %2041 = vadd.xlane.f32.xlu0 %v1977
      %v2042 = vpop.xlane.xlu0 %2041
      %2043 = vadd.xlane.f32.xlu0 %v1979
      %v2044 = vpop.xlane.xlu0 %2043
      %2045 = vadd.xlane.f32.xlu0 %v1981
      %v2046 = vpop.xlane.xlu0 %2045
      %2047 = vadd.xlane.f32.xlu0 %v1983
      %v2048 = vpop.xlane.xlu0 %2047
      %2049 = vadd.xlane.f32.xlu0 %v1985
      %v2050 = vpop.xlane.xlu0 %2049
      %2051 = vadd.xlane.f32.xlu0 %v1987
      %v2052 = vpop.xlane.xlu0 %2051
      %2053 = vadd.xlane.f32.xlu0 %v1989
      %v2054 = vpop.xlane.xlu0 %2053
      %2055 = vadd.xlane.f32.xlu0 %v1991
      %v2056 = vpop.xlane.xlu0 %2055
      %2057 = vadd.xlane.f32.xlu0 %v1993
      %v2058 = vpop.xlane.xlu0 %2057
      %2059 = vadd.xlane.f32.xlu0 %v1995
      %v2060 = vpop.xlane.xlu0 %2059
      %2061 = vadd.xlane.f32.xlu0 %v1997
      %v2062 = vpop.xlane.xlu0 %2061
      %2063 = vadd.xlane.f32.xlu0 %v1999
      %v2064 = vpop.xlane.xlu0 %2063
      %v2065 = vadd.f32 %v2017, %v2034
      %v2066 = vadd.f32 %v2018, %v2036
      %v2067 = vadd.f32 %v2019, %v2038
      %v2068 = vadd.f32 %v2020, %v2040
      %v2069 = vadd.f32 %v2021, %v2042
      %v2070 = vadd.f32 %v2022, %v2044
      %v2071 = vadd.f32 %v2023, %v2046
      %v2072 = vadd.f32 %v2024, %v2048
      %v2073 = vadd.f32 %v2025, %v2050
      %v2074 = vadd.f32 %v2026, %v2052
      %v2075 = vadd.f32 %v2027, %v2054
      %v2076 = vadd.f32 %v2028, %v2056
      %v2077 = vadd.f32 %v2029, %v2058
      %v2078 = vadd.f32 %v2030, %v2060
      %v2079 = vadd.f32 %v2031, %v2062
      %v2080 = vadd.f32 %v2032, %v2064
      %2081 = vst.msk [vmem:[%s2000] sm:$0xff] %vm1146, %v2065
      %2082 = vst.msk [vmem:[%s2000 + $0x8] sm:$0xff] %vm1146, %v2066
      %2083 = vst.msk [vmem:[%s2000 + $0x10] sm:$0xff] %vm1146, %v2067
      %2084 = vst.msk [vmem:[%s2000 + $0x18] sm:$0xff] %vm1146, %v2068
      %2085 = vst.msk [vmem:[%s2000 + $0x20] sm:$0xff] %vm1146, %v2069
      %2086 = vst.msk [vmem:[%s2000 + $0x28] sm:$0xff] %vm1146, %v2070
      %2087 = vst.msk [vmem:[%s2000 + $0x30] sm:$0xff] %vm1146, %v2071
      %2088 = vst.msk [vmem:[%s2000 + $0x38] sm:$0xff] %vm1146, %v2072
      %2089 = vst.msk [vmem:[%s2000 + $0x40] sm:$0xff] %vm1146, %v2073
      %2090 = vst.msk [vmem:[%s2000 + $0x48] sm:$0xff] %vm1146, %v2074
      %2091 = vst.msk [vmem:[%s2000 + $0x50] sm:$0xff] %vm1146, %v2075
      %2092 = vst.msk [vmem:[%s2000 + $0x58] sm:$0xff] %vm1146, %v2076
      %2093 = vst.msk [vmem:[%s2000 + $0x60] sm:$0xff] %vm1146, %v2077
      %2094 = vst.msk [vmem:[%s2000 + $0x68] sm:$0xff] %vm1146, %v2078
      %2095 = vst.msk [vmem:[%s2000 + $0x70] sm:$0xff] %vm1146, %v2079
      %2096 = vst.msk [vmem:[%s2000 + $0x78] sm:$0xff] %vm1146, %v2080
      %s2097 = scalar_lea.vmem %s335, 128
      %v2098 = vld [vmem:[%s2097] sm:$0xff]
      %v2099 = vld [vmem:[%s2097 + $0x8] sm:$0xff]
      %v2100 = vld [vmem:[%s2097 + $0x10] sm:$0xff]
      %v2101 = vld [vmem:[%s2097 + $0x18] sm:$0xff]
      %v2102 = vld [vmem:[%s2097 + $0x20] sm:$0xff]
      %v2103 = vld [vmem:[%s2097 + $0x28] sm:$0xff]
      %v2104 = vld [vmem:[%s2097 + $0x30] sm:$0xff]
      %v2105 = vld [vmem:[%s2097 + $0x38] sm:$0xff]
      %v2106 = vld [vmem:[%s2097 + $0x40] sm:$0xff]
      %v2107 = vld [vmem:[%s2097 + $0x48] sm:$0xff]
      %v2108 = vld [vmem:[%s2097 + $0x50] sm:$0xff]
      %v2109 = vld [vmem:[%s2097 + $0x58] sm:$0xff]
      %v2110 = vld [vmem:[%s2097 + $0x60] sm:$0xff]
      %v2111 = vld [vmem:[%s2097 + $0x68] sm:$0xff]
      %v2112 = vld [vmem:[%s2097 + $0x70] sm:$0xff]
      %v2113 = vld [vmem:[%s2097 + $0x78] sm:$0xff]
      %2114 = vmatprep.subr.mxu0 0.0
      %2115 = vmatpush1.msra.mxu0 %v2098
      %2116 = vmatprep.subr.mxu0 0.0
      %2117 = vmatpush1.msra.mxu0 %v2099
      %2118 = vmatprep.subr.mxu0 0.0
      %2119 = vmatpush1.msra.mxu0 %v2100
      %2120 = vmatprep.subr.mxu0 0.0
      %2121 = vmatpush1.msra.mxu0 %v2101
      %2122 = vmatprep.subr.mxu0 0.0
      %2123 = vmatpush1.msra.mxu0 %v2102
      %2124 = vmatprep.subr.mxu0 0.0
      %2125 = vmatpush1.msra.mxu0 %v2103
      %2126 = vmatprep.subr.mxu0 0.0
      %2127 = vmatpush1.msra.mxu0 %v2104
      %2128 = vmatprep.subr.mxu0 0.0
      %2129 = vmatpush1.msra.mxu0 %v2105
      %2130 = vmatprep.subr.mxu0 0.0
      %2131 = vmatpush1.msra.mxu0 %v2106
      %2132 = vmatprep.subr.mxu0 0.0
      %2133 = vmatpush1.msra.mxu0 %v2107
      %2134 = vmatprep.subr.mxu0 0.0
      %2135 = vmatpush1.msra.mxu0 %v2108
      %2136 = vmatprep.subr.mxu0 0.0
      %2137 = vmatpush1.msra.mxu0 %v2109
      %2138 = vmatprep.subr.mxu0 0.0
      %2139 = vmatpush1.msra.mxu0 %v2110
      %2140 = vmatprep.subr.mxu0 0.0
      %2141 = vmatpush1.msra.mxu0 %v2111
      %2142 = vmatprep.subr.mxu0 0.0
      %2143 = vmatpush1.msra.mxu0 %v2112
      %2144 = vmatprep.subr.mxu0 0.0
      %2145 = vmatpush1.msra.mxu0 %v2113
      %2146 = vmatprep.subr.mxu0 0.0
      %2147 = vmatpush1.msra.mxu0 0.0
      %2148 = vmatprep.subr.mxu0 0.0
      %2149 = vmatpush1.msra.mxu0 0.0
      %2150 = vmatprep.subr.mxu0 0.0
      %2151 = vmatpush1.msra.mxu0 0.0
      %2152 = vmatprep.subr.mxu0 0.0
      %2153 = vmatpush1.msra.mxu0 0.0
      %2154 = vmatprep.subr.mxu0 0.0
      %2155 = vmatpush1.msra.mxu0 0.0
      %2156 = vmatprep.subr.mxu0 0.0
      %2157 = vmatpush1.msra.mxu0 0.0
      %2158 = vmatprep.subr.mxu0 0.0
      %2159 = vmatpush1.msra.mxu0 0.0
      %2160 = vmatprep.subr.mxu0 0.0
      %2161 = vmatpush1.msra.mxu0 0.0
      %2162 = vmatprep.subr.mxu0 0.0
      %2163 = vmatpush1.msra.mxu0 0.0
      %2164 = vmatprep.subr.mxu0 0.0
      %2165 = vmatpush1.msra.mxu0 0.0
      %2166 = vmatprep.subr.mxu0 0.0
      %2167 = vmatpush1.msra.mxu0 0.0
      %2168 = vmatprep.subr.mxu0 0.0
      %2169 = vmatpush1.msra.mxu0 0.0
      %2170 = vmatprep.subr.mxu0 0.0
      %2171 = vmatpush1.msra.mxu0 0.0
      %2172 = vmatprep.subr.mxu0 0.0
      %2173 = vmatpush1.msra.mxu0 0.0
      %2174 = vmatprep.subr.mxu0 0.0
      %2175 = vmatpush1.msra.mxu0 0.0
      %2176 = vmatprep.subr.mxu0 0.0
      %2177 = vmatpush1.msra.mxu0 0.0
      %2178 = vmatprep.mubr.f32.mxu0 0.0
      %2179 = vmatmul.mubr.f32.gmra.mrb[0].mxu0 %v1969
      %v2180 = vpop.f32.mrb[0].mxu0
      %v2181 = vadd.f32 0.0, %v2180
      %v2182 = vpop.f32.mrb[0].mxu0
      %2183 = vmatprep.mubr.f32.mxu0 0.0
      %2184 = vmatmul.mubr.f32.gmra.mrb[0].mxu0 %v1971
      %v2185 = vpop.f32.mrb[0].mxu0
      %v2186 = vadd.f32 0.0, %v2185
      %v2187 = vpop.f32.mrb[0].mxu0
      %2188 = vmatprep.mubr.f32.mxu0 0.0
      %2189 = vmatmul.mubr.f32.gmra.mrb[0].mxu0 %v1973
      %v2190 = vpop.f32.mrb[0].mxu0
      %v2191 = vadd.f32 0.0, %v2190
      %v2192 = vpop.f32.mrb[0].mxu0
      %2193 = vmatprep.mubr.f32.mxu0 0.0
      %2194 = vmatmul.mubr.f32.gmra.mrb[0].mxu0 %v1975
      %v2195 = vpop.f32.mrb[0].mxu0
      %v2196 = vadd.f32 0.0, %v2195
      %v2197 = vpop.f32.mrb[0].mxu0
      %2198 = vmatprep.mubr.f32.mxu0 0.0
      %2199 = vmatmul.mubr.f32.gmra.mrb[0].mxu0 %v1977
      %v2200 = vpop.f32.mrb[0].mxu0
      %v2201 = vadd.f32 0.0, %v2200
      %v2202 = vpop.f32.mrb[0].mxu0
      %2203 = vmatprep.mubr.f32.mxu0 0.0
      %2204 = vmatmul.mubr.f32.gmra.mrb[0].mxu0 %v1979
      %v2205 = vpop.f32.mrb[0].mxu0
      %v2206 = vadd.f32 0.0, %v2205
      %v2207 = vpop.f32.mrb[0].mxu0
      %2208 = vmatprep.mubr.f32.mxu0 0.0
      %2209 = vmatmul.mubr.f32.gmra.mrb[0].mxu0 %v1981
      %v2210 = vpop.f32.mrb[0].mxu0
      %v2211 = vadd.f32 0.0, %v2210
      %v2212 = vpop.f32.mrb[0].mxu0
      %2213 = vmatprep.mubr.f32.mxu0 0.0
      %2214 = vmatmul.mubr.f32.gmra.mrb[0].mxu0 %v1983
      %v2215 = vpop.f32.mrb[0].mxu0
      %v2216 = vadd.f32 0.0, %v2215
      %v2217 = vpop.f32.mrb[0].mxu0
      %2218 = vmatprep.mubr.f32.mxu0 0.0
      %2219 = vmatmul.mubr.f32.gmra.mrb[0].mxu0 %v1985
      %v2220 = vpop.f32.mrb[0].mxu0
      %v2221 = vadd.f32 0.0, %v2220
      %v2222 = vpop.f32.mrb[0].mxu0
      %2223 = vmatprep.mubr.f32.mxu0 0.0
      %2224 = vmatmul.mubr.f32.gmra.mrb[0].mxu0 %v1987
      %v2225 = vpop.f32.mrb[0].mxu0
      %v2226 = vadd.f32 0.0, %v2225
      %v2227 = vpop.f32.mrb[0].mxu0
      %2228 = vmatprep.mubr.f32.mxu0 0.0
      %2229 = vmatmul.mubr.f32.gmra.mrb[0].mxu0 %v1989
      %v2230 = vpop.f32.mrb[0].mxu0
      %v2231 = vadd.f32 0.0, %v2230
      %v2232 = vpop.f32.mrb[0].mxu0
      %2233 = vmatprep.mubr.f32.mxu0 0.0
      %2234 = vmatmul.mubr.f32.gmra.mrb[0].mxu0 %v1991
      %v2235 = vpop.f32.mrb[0].mxu0
      %v2236 = vadd.f32 0.0, %v2235
      %v2237 = vpop.f32.mrb[0].mxu0
      %2238 = vmatprep.mubr.f32.mxu0 0.0
      %2239 = vmatmul.mubr.f32.gmra.mrb[0].mxu0 %v1993
      %v2240 = vpop.f32.mrb[0].mxu0
      %v2241 = vadd.f32 0.0, %v2240
      %v2242 = vpop.f32.mrb[0].mxu0
      %2243 = vmatprep.mubr.f32.mxu0 0.0
      %2244 = vmatmul.mubr.f32.gmra.mrb[0].mxu0 %v1995
      %v2245 = vpop.f32.mrb[0].mxu0
      %v2246 = vadd.f32 0.0, %v2245
      %v2247 = vpop.f32.mrb[0].mxu0
      %2248 = vmatprep.mubr.f32.mxu0 0.0
      %2249 = vmatmul.mubr.f32.gmra.mrb[0].mxu0 %v1997
      %v2250 = vpop.f32.mrb[0].mxu0
      %v2251 = vadd.f32 0.0, %v2250
      %v2252 = vpop.f32.mrb[0].mxu0
      %2253 = vmatprep.mubr.f32.mxu0 0.0
      %2254 = vmatmul.mubr.f32.gmra.mrb[0].mxu0 %v1999
      %v2255 = vpop.f32.mrb[0].mxu0
      %v2256 = vadd.f32 0.0, %v2255
      %v2257 = vpop.f32.mrb[0].mxu0
      %2258 = vdwg.mxu0
      %s2259 = scalar_lea.vmem [#allocation2], 128
      %v2260 = vld [vmem:[%s2259] sm:$0xff]
      %v2261 = vld [vmem:[%s2259 + $0x8] sm:$0xff]
      %v2262 = vld [vmem:[%s2259 + $0x10] sm:$0xff]
      %v2263 = vld [vmem:[%s2259 + $0x18] sm:$0xff]
      %v2264 = vld [vmem:[%s2259 + $0x20] sm:$0xff]
      %v2265 = vld [vmem:[%s2259 + $0x28] sm:$0xff]
      %v2266 = vld [vmem:[%s2259 + $0x30] sm:$0xff]
      %v2267 = vld [vmem:[%s2259 + $0x38] sm:$0xff]
      %v2268 = vld [vmem:[%s2259 + $0x40] sm:$0xff]
      %v2269 = vld [vmem:[%s2259 + $0x48] sm:$0xff]
      %v2270 = vld [vmem:[%s2259 + $0x50] sm:$0xff]
      %v2271 = vld [vmem:[%s2259 + $0x58] sm:$0xff]
      %v2272 = vld [vmem:[%s2259 + $0x60] sm:$0xff]
      %v2273 = vld [vmem:[%s2259 + $0x68] sm:$0xff]
      %v2274 = vld [vmem:[%s2259 + $0x70] sm:$0xff]
      %v2275 = vld [vmem:[%s2259 + $0x78] sm:$0xff]
      %2277 = vset.pattern.permute.xlu0 0
      %2278 = vperm.xlu0 %2277, %v1841
      %v2279 = vpop.permute.xlu0 %2278
      %2282 = vset.pattern.permute.xlu0 0
      %2283 = vperm.xlu0 %2282, %v1843
      %v2284 = vpop.permute.xlu0 %2283
      %2287 = vset.pattern.permute.xlu0 0
      %2288 = vperm.xlu0 %2287, %v1845
      %v2289 = vpop.permute.xlu0 %2288
      %2292 = vset.pattern.permute.xlu0 0
      %2293 = vperm.xlu0 %2292, %v1847
      %v2294 = vpop.permute.xlu0 %2293
      %2297 = vset.pattern.permute.xlu0 0
      %2298 = vperm.xlu0 %2297, %v1849
      %v2299 = vpop.permute.xlu0 %2298
      %2302 = vset.pattern.permute.xlu0 0
      %2303 = vperm.xlu0 %2302, %v1851
      %v2304 = vpop.permute.xlu0 %2303
      %2307 = vset.pattern.permute.xlu0 0
      %2308 = vperm.xlu0 %2307, %v1853
      %v2309 = vpop.permute.xlu0 %2308
      %2312 = vset.pattern.permute.xlu0 0
      %2313 = vperm.xlu0 %2312, %v1855
      %v2314 = vpop.permute.xlu0 %2313
      %2317 = vset.pattern.permute.xlu0 0
      %2318 = vperm.xlu0 %2317, %v1857
      %v2319 = vpop.permute.xlu0 %2318
      %2322 = vset.pattern.permute.xlu0 0
      %2323 = vperm.xlu0 %2322, %v1859
      %v2324 = vpop.permute.xlu0 %2323
      %2327 = vset.pattern.permute.xlu0 0
      %2328 = vperm.xlu0 %2327, %v1861
      %v2329 = vpop.permute.xlu0 %2328
      %2332 = vset.pattern.permute.xlu0 0
      %2333 = vperm.xlu0 %2332, %v1863
      %v2334 = vpop.permute.xlu0 %2333
      %2337 = vset.pattern.permute.xlu0 0
      %2338 = vperm.xlu0 %2337, %v1865
      %v2339 = vpop.permute.xlu0 %2338
      %2342 = vset.pattern.permute.xlu0 0
      %2343 = vperm.xlu0 %2342, %v1867
      %v2344 = vpop.permute.xlu0 %2343
      %2347 = vset.pattern.permute.xlu0 0
      %2348 = vperm.xlu0 %2347, %v1869
      %v2349 = vpop.permute.xlu0 %2348
      %2352 = vset.pattern.permute.xlu0 0
      %2353 = vperm.xlu0 %2352, %v1871
      %v2354 = vpop.permute.xlu0 %2353
      %v2356 = vmul.f32 %v2279, %v2260
      %v2357 = vmul.f32 %v2284, %v2261
      %v2358 = vmul.f32 %v2289, %v2262
      %v2359 = vmul.f32 %v2294, %v2263
      %v2360 = vmul.f32 %v2299, %v2264
      %v2361 = vmul.f32 %v2304, %v2265
      %v2362 = vmul.f32 %v2309, %v2266
      %v2363 = vmul.f32 %v2314, %v2267
      %v2364 = vmul.f32 %v2319, %v2268
      %v2365 = vmul.f32 %v2324, %v2269
      %v2366 = vmul.f32 %v2329, %v2270
      %v2367 = vmul.f32 %v2334, %v2271
      %v2368 = vmul.f32 %v2339, %v2272
      %v2369 = vmul.f32 %v2344, %v2273
      %v2370 = vmul.f32 %v2349, %v2274
      %v2371 = vmul.f32 %v2354, %v2275
      %v2372 = vadd.f32 %v2356, %v2181
      %v2373 = vadd.f32 %v2357, %v2186
      %v2374 = vadd.f32 %v2358, %v2191
      %v2375 = vadd.f32 %v2359, %v2196
      %v2376 = vadd.f32 %v2360, %v2201
      %v2377 = vadd.f32 %v2361, %v2206
      %v2378 = vadd.f32 %v2362, %v2211
      %v2379 = vadd.f32 %v2363, %v2216
      %v2380 = vadd.f32 %v2364, %v2221
      %v2381 = vadd.f32 %v2365, %v2226
      %v2382 = vadd.f32 %v2366, %v2231
      %v2383 = vadd.f32 %v2367, %v2236
      %v2384 = vadd.f32 %v2368, %v2241
      %v2385 = vadd.f32 %v2369, %v2246
      %v2386 = vadd.f32 %v2370, %v2251
      %v2387 = vadd.f32 %v2371, %v2256
      %2388 = vst.msk [vmem:[%s2259] sm:$0xff] %vm584, %v2372
      %2389 = vst.msk [vmem:[%s2259 + $0x8] sm:$0xff] %vm584, %v2373
      %2390 = vst.msk [vmem:[%s2259 + $0x10] sm:$0xff] %vm584, %v2374
      %2391 = vst.msk [vmem:[%s2259 + $0x18] sm:$0xff] %vm584, %v2375
      %2392 = vst.msk [vmem:[%s2259 + $0x20] sm:$0xff] %vm584, %v2376
      %2393 = vst.msk [vmem:[%s2259 + $0x28] sm:$0xff] %vm584, %v2377
      %2394 = vst.msk [vmem:[%s2259 + $0x30] sm:$0xff] %vm584, %v2378
      %2395 = vst.msk [vmem:[%s2259 + $0x38] sm:$0xff] %vm584, %v2379
      %2396 = vst.msk [vmem:[%s2259 + $0x40] sm:$0xff] %vm584, %v2380
      %2397 = vst.msk [vmem:[%s2259 + $0x48] sm:$0xff] %vm584, %v2381
      %2398 = vst.msk [vmem:[%s2259 + $0x50] sm:$0xff] %vm584, %v2382
      %2399 = vst.msk [vmem:[%s2259 + $0x58] sm:$0xff] %vm584, %v2383
      %2400 = vst.msk [vmem:[%s2259 + $0x60] sm:$0xff] %vm584, %v2384
      %2401 = vst.msk [vmem:[%s2259 + $0x68] sm:$0xff] %vm584, %v2385
      %2402 = vst.msk [vmem:[%s2259 + $0x70] sm:$0xff] %vm584, %v2386
      %2403 = vst.msk [vmem:[%s2259 + $0x78] sm:$0xff] %vm584, %v2387
      %2404 = vst.msk [vmem:[%s1759] sm:$0xff] %vm1146, %v1808
      %2405 = vst.msk [vmem:[%s1759 + $0x8] sm:$0xff] %vm1146, %v1809
      %2406 = vst.msk [vmem:[%s1759 + $0x10] sm:$0xff] %vm1146, %v1810
      %2407 = vst.msk [vmem:[%s1759 + $0x18] sm:$0xff] %vm1146, %v1811
      %2408 = vst.msk [vmem:[%s1759 + $0x20] sm:$0xff] %vm1146, %v1812
      %2409 = vst.msk [vmem:[%s1759 + $0x28] sm:$0xff] %vm1146, %v1813
      %2410 = vst.msk [vmem:[%s1759 + $0x30] sm:$0xff] %vm1146, %v1814
      %2411 = vst.msk [vmem:[%s1759 + $0x38] sm:$0xff] %vm1146, %v1815
      %2412 = vst.msk [vmem:[%s1759 + $0x40] sm:$0xff] %vm1146, %v1816
      %2413 = vst.msk [vmem:[%s1759 + $0x48] sm:$0xff] %vm1146, %v1817
      %2414 = vst.msk [vmem:[%s1759 + $0x50] sm:$0xff] %vm1146, %v1818
      %2415 = vst.msk [vmem:[%s1759 + $0x58] sm:$0xff] %vm1146, %v1819
      %2416 = vst.msk [vmem:[%s1759 + $0x60] sm:$0xff] %vm1146, %v1820
      %2417 = vst.msk [vmem:[%s1759 + $0x68] sm:$0xff] %vm1146, %v1821
      %2418 = vst.msk [vmem:[%s1759 + $0x70] sm:$0xff] %vm1146, %v1822
      %2419 = vst.msk [vmem:[%s1759 + $0x78] sm:$0xff] %vm1146, %v1823
      // Predicated region
      $region41: #{tpu_custom_call.1} parent=35 // pred_check
        %p2420 = pneg %p347
      $region42: #{tpu_custom_call.1} parent=35 // pred_check_branch
        %2422 = sbr.rel (%p2420) target = $region44
      $region43: #{tpu_custom_call.1} parent=35 // pred_region
        %v2423 = vld [vmem:[#allocation4] sm:$0xff]
        %v2424 = vld [vmem:[#allocation4 + $0x8] sm:$0xff]
        %v2425 = vld [vmem:[#allocation4 + $0x10] sm:$0xff]
        %v2426 = vld [vmem:[#allocation4 + $0x18] sm:$0xff]
        %v2427 = vld [vmem:[#allocation4 + $0x20] sm:$0xff]
        %v2428 = vld [vmem:[#allocation4 + $0x28] sm:$0xff]
        %v2429 = vld [vmem:[#allocation4 + $0x30] sm:$0xff]
        %v2430 = vld [vmem:[#allocation4 + $0x38] sm:$0xff]
        %v2431 = vld [vmem:[#allocation4 + $0x40] sm:$0xff]
        %v2432 = vld [vmem:[#allocation4 + $0x48] sm:$0xff]
        %v2433 = vld [vmem:[#allocation4 + $0x50] sm:$0xff]
        %v2434 = vld [vmem:[#allocation4 + $0x58] sm:$0xff]
        %v2435 = vld [vmem:[#allocation4 + $0x60] sm:$0xff]
        %v2436 = vld [vmem:[#allocation4 + $0x68] sm:$0xff]
        %v2437 = vld [vmem:[#allocation4 + $0x70] sm:$0xff]
        %v2438 = vld [vmem:[#allocation4 + $0x78] sm:$0xff]
        %v2439 = vrcp.pop %v2423
        %v2440 = vrcp.pop %v2424
        %v2441 = vrcp.pop %v2425
        %v2442 = vrcp.pop %v2426
        %v2443 = vrcp.pop %v2427
        %v2444 = vrcp.pop %v2428
        %v2445 = vrcp.pop %v2429
        %v2446 = vrcp.pop %v2430
        %v2447 = vrcp.pop %v2431
        %v2448 = vrcp.pop %v2432
        %v2449 = vrcp.pop %v2433
        %v2450 = vrcp.pop %v2434
        %v2451 = vrcp.pop %v2435
        %v2452 = vrcp.pop %v2436
        %v2453 = vrcp.pop %v2437
        %v2454 = vrcp.pop %v2438
        %v2455 = vld [vmem:[#allocation2] sm:$0xff]
        %v2456 = vld [vmem:[#allocation2 + $0x8] sm:$0xff]
        %v2457 = vld [vmem:[#allocation2 + $0x10] sm:$0xff]
        %v2458 = vld [vmem:[#allocation2 + $0x18] sm:$0xff]
        %v2459 = vld [vmem:[#allocation2 + $0x20] sm:$0xff]
        %v2460 = vld [vmem:[#allocation2 + $0x28] sm:$0xff]
        %v2461 = vld [vmem:[#allocation2 + $0x30] sm:$0xff]
        %v2462 = vld [vmem:[#allocation2 + $0x38] sm:$0xff]
        %v2463 = vld [vmem:[#allocation2 + $0x40] sm:$0xff]
        %v2464 = vld [vmem:[#allocation2 + $0x48] sm:$0xff]
        %v2465 = vld [vmem:[#allocation2 + $0x50] sm:$0xff]
        %v2466 = vld [vmem:[#allocation2 + $0x58] sm:$0xff]
        %v2467 = vld [vmem:[#allocation2 + $0x60] sm:$0xff]
        %v2468 = vld [vmem:[#allocation2 + $0x68] sm:$0xff]
        %v2469 = vld [vmem:[#allocation2 + $0x70] sm:$0xff]
        %v2470 = vld [vmem:[#allocation2 + $0x78] sm:$0xff]
        %2472 = vset.pattern.permute.xlu0 0
        %2473 = vperm.xlu0 %2472, %v2439
        %v2474 = vpop.permute.xlu0 %2473
        %2477 = vset.pattern.permute.xlu0 0
        %2478 = vperm.xlu0 %2477, %v2440
        %v2479 = vpop.permute.xlu0 %2478
        %2482 = vset.pattern.permute.xlu0 0
        %2483 = vperm.xlu0 %2482, %v2441
        %v2484 = vpop.permute.xlu0 %2483
        %2487 = vset.pattern.permute.xlu0 0
        %2488 = vperm.xlu0 %2487, %v2442
        %v2489 = vpop.permute.xlu0 %2488
        %2492 = vset.pattern.permute.xlu0 0
        %2493 = vperm.xlu0 %2492, %v2443
        %v2494 = vpop.permute.xlu0 %2493
        %2497 = vset.pattern.permute.xlu0 0
        %2498 = vperm.xlu0 %2497, %v2444
        %v2499 = vpop.permute.xlu0 %2498
        %2502 = vset.pattern.permute.xlu0 0
        %2503 = vperm.xlu0 %2502, %v2445
        %v2504 = vpop.permute.xlu0 %2503
        %2507 = vset.pattern.permute.xlu0 0
        %2508 = vperm.xlu0 %2507, %v2446
        %v2509 = vpop.permute.xlu0 %2508
        %2512 = vset.pattern.permute.xlu0 0
        %2513 = vperm.xlu0 %2512, %v2447
        %v2514 = vpop.permute.xlu0 %2513
        %2517 = vset.pattern.permute.xlu0 0
        %2518 = vperm.xlu0 %2517, %v2448
        %v2519 = vpop.permute.xlu0 %2518
        %2522 = vset.pattern.permute.xlu0 0
        %2523 = vperm.xlu0 %2522, %v2449
        %v2524 = vpop.permute.xlu0 %2523
        %2527 = vset.pattern.permute.xlu0 0
        %2528 = vperm.xlu0 %2527, %v2450
        %v2529 = vpop.permute.xlu0 %2528
        %2532 = vset.pattern.permute.xlu0 0
        %2533 = vperm.xlu0 %2532, %v2451
        %v2534 = vpop.permute.xlu0 %2533
        %2537 = vset.pattern.permute.xlu0 0
        %2538 = vperm.xlu0 %2537, %v2452
        %v2539 = vpop.permute.xlu0 %2538
        %2542 = vset.pattern.permute.xlu0 0
        %2543 = vperm.xlu0 %2542, %v2453
        %v2544 = vpop.permute.xlu0 %2543
        %2547 = vset.pattern.permute.xlu0 0
        %2548 = vperm.xlu0 %2547, %v2454
        %v2549 = vpop.permute.xlu0 %2548
        %v2551 = vmul.f32 %v2455, %v2474
        %v2552 = vmul.f32 %v2456, %v2479
        %v2553 = vmul.f32 %v2457, %v2484
        %v2554 = vmul.f32 %v2458, %v2489
        %v2555 = vmul.f32 %v2459, %v2494
        %v2556 = vmul.f32 %v2460, %v2499
        %v2557 = vmul.f32 %v2461, %v2504
        %v2558 = vmul.f32 %v2462, %v2509
        %v2559 = vmul.f32 %v2463, %v2514
        %v2560 = vmul.f32 %v2464, %v2519
        %v2561 = vmul.f32 %v2465, %v2524
        %v2562 = vmul.f32 %v2466, %v2529
        %v2563 = vmul.f32 %v2467, %v2534
        %v2564 = vmul.f32 %v2468, %v2539
        %v2565 = vmul.f32 %v2469, %v2544
        %v2566 = vmul.f32 %v2470, %v2549
        %2567 = vst.msk [vmem:[%s345] sm:$0xff] %vm584, %v2551
        %2568 = vst.msk [vmem:[%s345 + $0x8] sm:$0xff] %vm584, %v2552
        %2569 = vst.msk [vmem:[%s345 + $0x10] sm:$0xff] %vm584, %v2553
        %2570 = vst.msk [vmem:[%s345 + $0x18] sm:$0xff] %vm584, %v2554
        %2571 = vst.msk [vmem:[%s345 + $0x20] sm:$0xff] %vm584, %v2555
        %2572 = vst.msk [vmem:[%s345 + $0x28] sm:$0xff] %vm584, %v2556
        %2573 = vst.msk [vmem:[%s345 + $0x30] sm:$0xff] %vm584, %v2557
        %2574 = vst.msk [vmem:[%s345 + $0x38] sm:$0xff] %vm584, %v2558
        %2575 = vst.msk [vmem:[%s345 + $0x40] sm:$0xff] %vm584, %v2559
        %2576 = vst.msk [vmem:[%s345 + $0x48] sm:$0xff] %vm584, %v2560
        %2577 = vst.msk [vmem:[%s345 + $0x50] sm:$0xff] %vm584, %v2561
        %2578 = vst.msk [vmem:[%s345 + $0x58] sm:$0xff] %vm584, %v2562
        %2579 = vst.msk [vmem:[%s345 + $0x60] sm:$0xff] %vm584, %v2563
        %2580 = vst.msk [vmem:[%s345 + $0x68] sm:$0xff] %vm584, %v2564
        %2581 = vst.msk [vmem:[%s345 + $0x70] sm:$0xff] %vm584, %v2565
        %2582 = vst.msk [vmem:[%s345 + $0x78] sm:$0xff] %vm584, %v2566
        %v2583 = vld [vmem:[%s2000] sm:$0xff]
        %v2584 = vld [vmem:[%s2000 + $0x8] sm:$0xff]
        %v2585 = vld [vmem:[%s2000 + $0x10] sm:$0xff]
        %v2586 = vld [vmem:[%s2000 + $0x18] sm:$0xff]
        %v2587 = vld [vmem:[%s2000 + $0x20] sm:$0xff]
        %v2588 = vld [vmem:[%s2000 + $0x28] sm:$0xff]
        %v2589 = vld [vmem:[%s2000 + $0x30] sm:$0xff]
        %v2590 = vld [vmem:[%s2000 + $0x38] sm:$0xff]
        %v2591 = vld [vmem:[%s2000 + $0x40] sm:$0xff]
        %v2592 = vld [vmem:[%s2000 + $0x48] sm:$0xff]
        %v2593 = vld [vmem:[%s2000 + $0x50] sm:$0xff]
        %v2594 = vld [vmem:[%s2000 + $0x58] sm:$0xff]
        %v2595 = vld [vmem:[%s2000 + $0x60] sm:$0xff]
        %v2596 = vld [vmem:[%s2000 + $0x68] sm:$0xff]
        %v2597 = vld [vmem:[%s2000 + $0x70] sm:$0xff]
        %v2598 = vld [vmem:[%s2000 + $0x78] sm:$0xff]
        %v2599 = vrcp.pop %v2583
        %v2600 = vrcp.pop %v2584
        %v2601 = vrcp.pop %v2585
        %v2602 = vrcp.pop %v2586
        %v2603 = vrcp.pop %v2587
        %v2604 = vrcp.pop %v2588
        %v2605 = vrcp.pop %v2589
        %v2606 = vrcp.pop %v2590
        %v2607 = vrcp.pop %v2591
        %v2608 = vrcp.pop %v2592
        %v2609 = vrcp.pop %v2593
        %v2610 = vrcp.pop %v2594
        %v2611 = vrcp.pop %v2595
        %v2612 = vrcp.pop %v2596
        %v2613 = vrcp.pop %v2597
        %v2614 = vrcp.pop %v2598
        %v2615 = vld [vmem:[%s2259] sm:$0xff]
        %v2616 = vld [vmem:[%s2259 + $0x8] sm:$0xff]
        %v2617 = vld [vmem:[%s2259 + $0x10] sm:$0xff]
        %v2618 = vld [vmem:[%s2259 + $0x18] sm:$0xff]
        %v2619 = vld [vmem:[%s2259 + $0x20] sm:$0xff]
        %v2620 = vld [vmem:[%s2259 + $0x28] sm:$0xff]
        %v2621 = vld [vmem:[%s2259 + $0x30] sm:$0xff]
        %v2622 = vld [vmem:[%s2259 + $0x38] sm:$0xff]
        %v2623 = vld [vmem:[%s2259 + $0x40] sm:$0xff]
        %v2624 = vld [vmem:[%s2259 + $0x48] sm:$0xff]
        %v2625 = vld [vmem:[%s2259 + $0x50] sm:$0xff]
        %v2626 = vld [vmem:[%s2259 + $0x58] sm:$0xff]
        %v2627 = vld [vmem:[%s2259 + $0x60] sm:$0xff]
        %v2628 = vld [vmem:[%s2259 + $0x68] sm:$0xff]
        %v2629 = vld [vmem:[%s2259 + $0x70] sm:$0xff]
        %v2630 = vld [vmem:[%s2259 + $0x78] sm:$0xff]
        %2632 = vset.pattern.permute.xlu0 0
        %2633 = vperm.xlu0 %2632, %v2599
        %v2634 = vpop.permute.xlu0 %2633
        %2637 = vset.pattern.permute.xlu0 0
        %2638 = vperm.xlu0 %2637, %v2600
        %v2639 = vpop.permute.xlu0 %2638
        %2642 = vset.pattern.permute.xlu0 0
        %2643 = vperm.xlu0 %2642, %v2601
        %v2644 = vpop.permute.xlu0 %2643
        %2647 = vset.pattern.permute.xlu0 0
        %2648 = vperm.xlu0 %2647, %v2602
        %v2649 = vpop.permute.xlu0 %2648
        %2652 = vset.pattern.permute.xlu0 0
        %2653 = vperm.xlu0 %2652, %v2603
        %v2654 = vpop.permute.xlu0 %2653
        %2657 = vset.pattern.permute.xlu0 0
        %2658 = vperm.xlu0 %2657, %v2604
        %v2659 = vpop.permute.xlu0 %2658
        %2662 = vset.pattern.permute.xlu0 0
        %2663 = vperm.xlu0 %2662, %v2605
        %v2664 = vpop.permute.xlu0 %2663
        %2667 = vset.pattern.permute.xlu0 0
        %2668 = vperm.xlu0 %2667, %v2606
        %v2669 = vpop.permute.xlu0 %2668
        %2672 = vset.pattern.permute.xlu0 0
        %2673 = vperm.xlu0 %2672, %v2607
        %v2674 = vpop.permute.xlu0 %2673
        %2677 = vset.pattern.permute.xlu0 0
        %2678 = vperm.xlu0 %2677, %v2608
        %v2679 = vpop.permute.xlu0 %2678
        %2682 = vset.pattern.permute.xlu0 0
        %2683 = vperm.xlu0 %2682, %v2609
        %v2684 = vpop.permute.xlu0 %2683
        %2687 = vset.pattern.permute.xlu0 0
        %2688 = vperm.xlu0 %2687, %v2610
        %v2689 = vpop.permute.xlu0 %2688
        %2692 = vset.pattern.permute.xlu0 0
        %2693 = vperm.xlu0 %2692, %v2611
        %v2694 = vpop.permute.xlu0 %2693
        %2697 = vset.pattern.permute.xlu0 0
        %2698 = vperm.xlu0 %2697, %v2612
        %v2699 = vpop.permute.xlu0 %2698
        %2702 = vset.pattern.permute.xlu0 0
        %2703 = vperm.xlu0 %2702, %v2613
        %v2704 = vpop.permute.xlu0 %2703
        %2707 = vset.pattern.permute.xlu0 0
        %2708 = vperm.xlu0 %2707, %v2614
        %v2709 = vpop.permute.xlu0 %2708
        %v2711 = vmul.f32 %v2615, %v2634
        %v2712 = vmul.f32 %v2616, %v2639
        %v2713 = vmul.f32 %v2617, %v2644
        %v2714 = vmul.f32 %v2618, %v2649
        %v2715 = vmul.f32 %v2619, %v2654
        %v2716 = vmul.f32 %v2620, %v2659
        %v2717 = vmul.f32 %v2621, %v2664
        %v2718 = vmul.f32 %v2622, %v2669
        %v2719 = vmul.f32 %v2623, %v2674
        %v2720 = vmul.f32 %v2624, %v2679
        %v2721 = vmul.f32 %v2625, %v2684
        %v2722 = vmul.f32 %v2626, %v2689
        %v2723 = vmul.f32 %v2627, %v2694
        %v2724 = vmul.f32 %v2628, %v2699
        %v2725 = vmul.f32 %v2629, %v2704
        %v2726 = vmul.f32 %v2630, %v2709
        %2743 = vrot.lane.b32.xlu0 %v2711, 32
        %v2744 = vpop.permute.xlu0 %2743
        %2745 = vrot.lane.b32.xlu0 %v2712, 32
        %v2746 = vpop.permute.xlu0 %2745
        %2747 = vrot.lane.b32.xlu0 %v2713, 32
        %v2748 = vpop.permute.xlu0 %2747
        %2749 = vrot.lane.b32.xlu0 %v2714, 32
        %v2750 = vpop.permute.xlu0 %2749
        %2751 = vrot.lane.b32.xlu0 %v2715, 32
        %v2752 = vpop.permute.xlu0 %2751
        %2753 = vrot.lane.b32.xlu0 %v2716, 32
        %v2754 = vpop.permute.xlu0 %2753
        %2755 = vrot.lane.b32.xlu0 %v2717, 32
        %v2756 = vpop.permute.xlu0 %2755
        %2757 = vrot.lane.b32.xlu0 %v2718, 32
        %v2758 = vpop.permute.xlu0 %2757
        %2759 = vrot.lane.b32.xlu0 %v2719, 32
        %v2760 = vpop.permute.xlu0 %2759
        %2761 = vrot.lane.b32.xlu0 %v2720, 32
        %v2762 = vpop.permute.xlu0 %2761
        %2763 = vrot.lane.b32.xlu0 %v2721, 32
        %v2764 = vpop.permute.xlu0 %2763
        %2765 = vrot.lane.b32.xlu0 %v2722, 32
        %v2766 = vpop.permute.xlu0 %2765
        %2767 = vrot.lane.b32.xlu0 %v2723, 32
        %v2768 = vpop.permute.xlu0 %2767
        %2769 = vrot.lane.b32.xlu0 %v2724, 32
        %v2770 = vpop.permute.xlu0 %2769
        %2771 = vrot.lane.b32.xlu0 %v2725, 32
        %v2772 = vpop.permute.xlu0 %2771
        %2773 = vrot.lane.b32.xlu0 %v2726, 32
        %v2774 = vpop.permute.xlu0 %2773
        %vm2791 = vcmask 523520
        %2792 = vst.msk [vmem:[%s345] sm:$0xff] %vm2791, %v2744
        %2793 = vst.msk [vmem:[%s345 + $0x8] sm:$0xff] %vm2791, %v2746
        %2794 = vst.msk [vmem:[%s345 + $0x10] sm:$0xff] %vm2791, %v2748
        %2795 = vst.msk [vmem:[%s345 + $0x18] sm:$0xff] %vm2791, %v2750
        %2796 = vst.msk [vmem:[%s345 + $0x20] sm:$0xff] %vm2791, %v2752
        %2797 = vst.msk [vmem:[%s345 + $0x28] sm:$0xff] %vm2791, %v2754
        %2798 = vst.msk [vmem:[%s345 + $0x30] sm:$0xff] %vm2791, %v2756
        %2799 = vst.msk [vmem:[%s345 + $0x38] sm:$0xff] %vm2791, %v2758
        %2800 = vst.msk [vmem:[%s345 + $0x40] sm:$0xff] %vm2791, %v2760
        %2801 = vst.msk [vmem:[%s345 + $0x48] sm:$0xff] %vm2791, %v2762
        %2802 = vst.msk [vmem:[%s345 + $0x50] sm:$0xff] %vm2791, %v2764
        %2803 = vst.msk [vmem:[%s345 + $0x58] sm:$0xff] %vm2791, %v2766
        %2804 = vst.msk [vmem:[%s345 + $0x60] sm:$0xff] %vm2791, %v2768
        %2805 = vst.msk [vmem:[%s345 + $0x68] sm:$0xff] %vm2791, %v2770
        %2806 = vst.msk [vmem:[%s345 + $0x70] sm:$0xff] %vm2791, %v2772
        %2807 = vst.msk [vmem:[%s345 + $0x78] sm:$0xff] %vm2791, %v2774
      $region44: #{tpu_custom_call.1} parent=35 // pred_fallthru
        _
      %s2808 = smul.u32 16, %s21
      %p2809 = scmp.lt.s32.totalorder %s20, 1
      %s2810 = scalar_select %p2809, %s20, 1
      %p2811 = scmp.lt.s32.totalorder %s2808, 15
      %s2812 = scalar_select %p2811, %s2808, 15
      %s2813 = smul.addr %s2810, 16
      %s2814 = sadd.s32 %s2812, %s2813
      %s2815 = smul.addr %s2814, 8
      %s2816 = scalar_lea.vmem %s4, %s2815
      // Predicated region
      $region45: #{tpu_custom_call.1} parent=35 // pred_check
        %p2817 = pneg %p166
      $region46: #{tpu_custom_call.1} parent=35 // pred_check_branch
        %2819 = sbr.rel (%p2817) target = $region48
      $region47: #{tpu_custom_call.1} parent=35 // pred_region
        %s2820 = smul.u32 16, %s21
      $region48: #{tpu_custom_call.1} parent=35 // pred_fallthru
        _
    $region36: #{tpu_custom_call.1} parent=5 // pred_fallthru
      _
    %p2821 = scmp.le.s32.totalorder 2, %s10
    // Predicated region
    $region49: #{tpu_custom_call.1} parent=5 // pred_check
      %p2822 = pneg %p2821
    $region50: #{tpu_custom_call.1} parent=5 // pred_check_branch
      %2824 = sbr.rel (%p2822) target = $region52
    $region51: #{tpu_custom_call.1} parent=5 // pred_region
      %s2825 = ssub.s32 %s10, 2
      // Predicated region
      $region53: #{tpu_custom_call.1} parent=51 // pred_check
        %p2826 = pneg %p172
      $region54: #{tpu_custom_call.1} parent=51 // pred_check_branch
        %2828 = sbr.rel (%p2826) target = $region56
      $region55: #{tpu_custom_call.1} parent=51 // pred_region
        %s2829 = smul.u32 16, %s24
        %p2830 = scmp.lt.s32.totalorder %s23, 1
        %s2831 = scalar_select %p2830, %s23, 1
        %p2832 = scmp.lt.s32.totalorder %s2829, 15
        %s2833 = scalar_select %p2832, %s2829, 15
        %s2834 = smul.addr %s2831, 16
        %s2835 = sadd.s32 %s2833, %s2834
        %s2836 = smul.addr %s2835, 8
        %s2837 = scalar_lea.vmem %s4, %s2836
      $region56: #{tpu_custom_call.1} parent=51 // pred_fallthru
        _
    $region52: #{tpu_custom_call.1} parent=5 // pred_fallthru
      _
  $region6: #{tpu_custom_call.1} parent=0 // loop_footer
    %s14 = sadd.s32 1, %s10
  $region7: #{tpu_custom_call.1} parent=0 // loop_footer_branch
    %9 = sbr.rel target = $region3
  $region8: #{tpu_custom_call.1} parent=0 // loop_exit
    _

</llo_original>
